<compile_context>
chip_gen: v5e
topology: v5e:2x2
jax: 0.10.0
libtpu: 0.0.40
codegen_flags: <defaults>
</compile_context>

<pallas_src>
import functools

import jax
import jax.numpy as jnp
from jax import lax
from jax.experimental import pallas as pl
from jax.experimental.pallas import tpu as pltpu


# ----------------------------- Pallas kernel --------------------------------

def basic_block_kernel(x_ref,     # (N*H, W, C)  f32, channel-padded input
                       w1_ref,    # (9, C, C)    bf16 tap-major conv1 weights
                       w2_ref,    # (9, C, C)    bf16 tap-major conv2 weights
                       sb_ref,    # (8, C)       f32 rows: s1, b1, s2, b2, 0...
                       o_ref,     # (N*H, W, C)  f32 output
                       xpad_ref,  # VMEM scratch (H+2, W+2, C) f32 (halo-padded x)
                       h1pad_ref, # VMEM scratch (H+2, W+2, C) f32 (halo-padded h1)
                       *, rb):
    Hp2, Wp2, C = xpad_ref.shape
    H, W = Hp2 - 2, Wp2 - 2
    N = x_ref.shape[0] // H
    HB = H // rb          # row blocks per image
    M = rb * W            # matmul M per row block (128 for rb=8, W=16)

    # Zero the halo-padded scratches ONCE: interiors are fully overwritten per
    # image, borders stay zero for the whole (single-step) kernel.
    xpad_ref[...] = jnp.zeros_like(xpad_ref)
    h1pad_ref[...] = jnp.zeros_like(h1pad_ref)

    s1, b1 = sb_ref[0:1, :], sb_ref[1:2, :]
    s2, b2 = sb_ref[2:3, :], sb_ref[3:4, :]

    def conv3x3_rows(src_ref, w_ref, row0):
        """Rows [row0, row0+rb) of a 3x3 'SAME' conv as 9 shifted MXU matmuls."""
        acc = jnp.zeros((M, C), jnp.float32)
        for k in range(9):                      # static taps -> static slices
            dy, dx = k // 3, k % 3
            patch = src_ref[pl.ds(row0 + dy, rb), dx:dx + W, :]   # (rb, W, C)
            acc = acc + jnp.dot(
                patch.reshape(M, C).astype(jnp.bfloat16),          # bf16 MXU in
                w_ref[k],                                          # bf16
                preferred_element_type=jnp.float32)                # f32 acc
        return acc

    def per_image(n, carry):
        base = pl.multiple_of(n * H, 8) if H % 8 == 0 else n * H

        # Stage the un-padded input into the zero-bordered scratch (no HBM pad,
        # no duplicate identity DMA: the residual is read back from here).
        xpad_ref[1:H + 1, 1:W + 1, :] = x_ref[pl.ds(base, H), :, :]

        # conv1 -> BN1 -> ReLU, written into the h1 halo scratch interior.
        def c1_block(i, c):
            row0 = i * rb
            acc = conv3x3_rows(xpad_ref, w1_ref, row0)
            h1 = jnp.maximum(acc * s1 + b1, 0.0)
            h1pad_ref[pl.ds(row0 + 1, rb), 1:W + 1, :] = h1.reshape(rb, W, C)
            return c
        lax.fori_loop(0, HB, c1_block, 0)

        # conv2 -> BN2 -> +identity -> ReLU, stored straight to the output.
        def c2_block(i, c):
            row0 = i * rb
            acc = conv3x3_rows(h1pad_ref, w2_ref, row0)
            out = acc * s2 + b2
            ident = xpad_ref[pl.ds(row0 + 1, rb), 1:W + 1, :]      # residual
            out = jnp.maximum(out + ident.reshape(M, C), 0.0)
            o_ref[pl.ds(base + row0, rb), :, :] = (
                out.reshape(rb, W, C).astype(o_ref.dtype))
            return c
        lax.fori_loop(0, HB, c2_block, 0)
        return carry

    lax.fori_loop(0, N, per_image, 0)


# ------------------------------ JAX wrapper ---------------------------------

def basic_block_forward(x_nchw, params, *, rb=8):
    """BasicBlock forward. x_nchw: (N, Cin, H, W) f32 -> (N, C, H, W) f32."""
    eps = 1e-5
    w1, w2 = params["w1_hwio"], params["w2_hwio"]

    # Fold eval-mode BatchNorm into per-channel scale / bias.
    s1 = params["bn1_gamma"] / jnp.sqrt(params["bn1_var"] + eps)
    b1 = params["bn1_beta"] - params["bn1_mean"] * s1
    s2 = params["bn2_gamma"] / jnp.sqrt(params["bn2_var"] + eps)
    b2 = params["bn2_beta"] - params["bn2_mean"] * s2

    x = jnp.transpose(x_nchw, (0, 2, 3, 1)).astype(jnp.float32)   # NCHW -> NHWC
    N, H, W, Cin = x.shape
    C = w1.shape[-1]
    assert Cin == C, "stride=1 / no-downsample BasicBlock needs in_planes == planes"
    assert H % rb == 0, "spatial height must be divisible by the row-block size"

    # Lane-pad channels to a multiple of 128 (zeros are exact + MXU-free).
    Cp = max(128, ((C + 127) // 128) * 128)
    dc = Cp - C
    xp = jnp.pad(x, ((0, 0), (0, 0), (0, 0), (0, dc))).reshape(N * H, W, Cp)

    def pad_w(w):  # (3,3,Ci,Co) -> tap-major (9, Cp, Cp) bf16
        return jnp.pad(w, ((0, 0), (0, 0), (0, dc), (0, dc))
                       ).reshape(9, Cp, Cp).astype(jnp.bfloat16)
    w1p, w2p = pad_w(w1), pad_w(w2)

    pad_c = lambda v: jnp.pad(v.astype(jnp.float32), (0, dc))
    sb = jnp.stack([pad_c(s1), pad_c(b1), pad_c(s2), pad_c(b2),
                    jnp.zeros((Cp,), jnp.float32), jnp.zeros((Cp,), jnp.float32),
                    jnp.zeros((Cp,), jnp.float32), jnp.zeros((Cp,), jnp.float32)])

    out_flat = pl.pallas_call(
        functools.partial(basic_block_kernel, rb=rb),
        out_shape=jax.ShapeDtypeStruct((N * H, W, Cp), jnp.float32),
        grid=(1,),                                  # whole batch in one step
        in_specs=[
            pl.BlockSpec((N * H, W, Cp), lambda i: (0, 0, 0)),
            pl.BlockSpec((9, Cp, Cp), lambda i: (0, 0, 0)),
            pl.BlockSpec((9, Cp, Cp), lambda i: (0, 0, 0)),
            pl.BlockSpec((8, Cp), lambda i: (0, 0)),
        ],
        out_specs=pl.BlockSpec((N * H, W, Cp), lambda i: (0, 0, 0)),
        scratch_shapes=[
            pltpu.VMEM((H + 2, W + 2, Cp), jnp.float32),   # padded x
            pltpu.VMEM((H + 2, W + 2, Cp), jnp.float32),   # padded h1
        ],
        compiler_params=pltpu.CompilerParams(
            dimension_semantics=("arbitrary",)),
    )(xp, w1p, w2p, sb)

    out = out_flat.reshape(N, H, W, Cp)[..., :C]
    return jnp.transpose(out, (0, 3, 1, 2))                       # NHWC -> NCHW


# --------------------------- pure-JAX reference ------------------------------

def basic_block_ref(x_nchw, params):
    eps = 1e-5
    dn = ("NHWC", "HWIO", "NHWC")
    x = jnp.transpose(x_nchw, (0, 2, 3, 1))
    s1 = params["bn1_gamma"] / jnp.sqrt(params["bn1_var"] + eps)
    b1 = params["bn1_beta"] - params["bn1_mean"] * s1
    s2 = params["bn2_gamma"] / jnp.sqrt(params["bn2_var"] + eps)
    b2 = params["bn2_beta"] - params["bn2_mean"] * s2

    h = lax.conv_general_dilated(x, params["w1_hwio"], (1, 1), "SAME",
                                 dimension_numbers=dn)
    h = jnp.maximum(h * s1 + b1, 0.0)
    h = lax.conv_general_dilated(h, params["w2_hwio"], (1, 1), "SAME",
                                 dimension_numbers=dn)
    h = h * s2 + b2
    h = jnp.maximum(h + x, 0.0)
    return jnp.transpose(h, (0, 3, 1, 2))


# --------------------------------- main --------------------------------------

def make_params(key, in_planes, planes):
    ks = jax.random.split(key, 10)
    fan1 = 3 * 3 * in_planes
    fan2 = 3 * 3 * planes
    return {
        "w1_hwio": jax.random.normal(ks[0], (3, 3, in_planes, planes),
                                     jnp.float32) * (2.0 / fan1) ** 0.5,
        "w2_hwio": jax.random.normal(ks[1], (3, 3, planes, planes),
                                     jnp.float32) * (2.0 / fan2) ** 0.5,
        "bn1_gamma": jax.random.uniform(ks[2], (planes,), jnp.float32, 0.5, 1.5),
        "bn1_beta":  jax.random.normal(ks[3], (planes,), jnp.float32) * 0.1,
        "bn1_mean":  jax.random.normal(ks[4], (planes,), jnp.float32) * 0.1,
        "bn1_var":   jax.random.uniform(ks[5], (planes,), jnp.float32, 0.5, 1.5),
        "bn2_gamma": jax.random.uniform(ks[6], (planes,), jnp.float32, 0.5, 1.5),
        "bn2_beta":  jax.random.normal(ks[7], (planes,), jnp.float32) * 0.1,
        "bn2_mean":  jax.random.normal(ks[8], (planes,), jnp.float32) * 0.1,
        "bn2_var":   jax.random.uniform(ks[9], (planes,), jnp.float32, 0.5, 1.5),
    }


if __name__ == "__main__":
    N, C, H, W = 2, 32, 16, 16          # small BasicBlock: in_planes = planes = 32
    key = jax.random.PRNGKey(0)
    kx, kp = jax.random.split(key)
    x = jax.random.normal(kx, (N, C, H, W), jnp.float32)    # NCHW like PyTorch
    params = make_params(kp, C, C)

    out = jax.block_until_ready(jax.jit(basic_block_forward)(x, params))
    ref = jax.block_until_ready(jax.jit(basic_block_ref)(x, params))

    assert out.shape == (N, C, H, W) and out.dtype == jnp.float32

    # bf16 MXU inputs (with f32 accumulation) need a looser tolerance than a
    # pure-f32 comparison; check normalized max error and relative L2 error.
    abs_err = float(jnp.max(jnp.abs(out - ref)))
    scale = float(jnp.max(jnp.abs(ref)))
    rel_l2 = float(jnp.linalg.norm(out - ref) / (jnp.linalg.norm(ref) + 1e-9))
    assert abs_err < 5e-2 * scale + 5e-2, f"max abs err {abs_err} (scale {scale})"
    assert rel_l2 < 1e-2, f"relative L2 error {rel_l2}"
    print("KERNEL_OK")
</pallas_src>

<mosaic_0001>
module attributes {stable_mosaic.version = 11 : i64} {
  func.func @basic_block_kernel(%arg0: i32, %arg1: memref<32x16x128xf32, #tpu.memory_space<vmem>>, %arg2: memref<9x128x128xbf16, #tpu.memory_space<vmem>>, %arg3: memref<9x128x128xbf16, #tpu.memory_space<vmem>>, %arg4: memref<8x128xf32, #tpu.memory_space<vmem>>, %arg5: memref<32x16x128xf32, #tpu.memory_space<vmem>>, %arg6: memref<18x18x128xf32, #tpu.memory_space<vmem>>, %arg7: memref<18x18x128xf32, #tpu.memory_space<vmem>>) attributes {dimension_semantics = [#tpu.dimension_semantics<arbitrary>], iteration_bounds = array<i64: 1>, scalar_prefetch = 0 : i64, scratch_operands = 2 : i64, tpu.core_type = #tpu.core_type<tc>, window_params = [{pipeline_mode = #tpu.pipeline_mode<synchronous>, transform_indices = @transform_0, window_bounds = array<i64: 32, 16, 128>}, {pipeline_mode = #tpu.pipeline_mode<synchronous>, transform_indices = @transform_1, window_bounds = array<i64: 9, 128, 128>}, {pipeline_mode = #tpu.pipeline_mode<synchronous>, transform_indices = @transform_2, window_bounds = array<i64: 9, 128, 128>}, {pipeline_mode = #tpu.pipeline_mode<synchronous>, transform_indices = @transform_3, window_bounds = array<i64: 8, 128>}, {pipeline_mode = #tpu.pipeline_mode<synchronous>, transform_indices = @transform_4, window_bounds = array<i64: 32, 16, 128>}]} {
    %cst = arith.constant 0.000000e+00 : f32
    %0 = vector.broadcast %cst : f32 to vector<18x18x128xf32>
    %c0 = arith.constant 0 : index
    %c0_0 = arith.constant 0 : index
    %c0_1 = arith.constant 0 : index
    %1 = vector.load %arg6[%c0, %c0_0, %c0_1] : memref<18x18x128xf32, #tpu.memory_space<vmem>>, vector<18x18x128xf32>
    tpu.vector_store %arg6[%c0, %c0_0, %c0_1], %0 {strides = array<i32>} : memref<18x18x128xf32, #tpu.memory_space<vmem>>, vector<18x18x128xf32>,
    %cst_2 = arith.constant 0.000000e+00 : f32
    %2 = vector.broadcast %cst_2 : f32 to vector<18x18x128xf32>
    %c0_3 = arith.constant 0 : index
    %c0_4 = arith.constant 0 : index
    %c0_5 = arith.constant 0 : index
    %3 = vector.load %arg7[%c0_3, %c0_4, %c0_5] : memref<18x18x128xf32, #tpu.memory_space<vmem>>, vector<18x18x128xf32>
    tpu.vector_store %arg7[%c0_3, %c0_4, %c0_5], %2 {strides = array<i32>} : memref<18x18x128xf32, #tpu.memory_space<vmem>>, vector<18x18x128xf32>,
    %c0_6 = arith.constant 0 : index
    %c0_7 = arith.constant 0 : index
    %4 = vector.load %arg4[%c0_6, %c0_7] : memref<8x128xf32, #tpu.memory_space<vmem>>, vector<1x128xf32>
    %c1 = arith.constant 1 : index
    %c0_8 = arith.constant 0 : index
    %5 = vector.load %arg4[%c1, %c0_8] : memref<8x128xf32, #tpu.memory_space<vmem>>, vector<1x128xf32>
    %c2 = arith.constant 2 : index
    %c0_9 = arith.constant 0 : index
    %6 = vector.load %arg4[%c2, %c0_9] : memref<8x128xf32, #tpu.memory_space<vmem>>, vector<1x128xf32>
    %c3 = arith.constant 3 : index
    %c0_10 = arith.constant 0 : index
    %7 = vector.load %arg4[%c3, %c0_10] : memref<8x128xf32, #tpu.memory_space<vmem>>, vector<1x128xf32>
    %c0_i32 = arith.constant 0 : i32
    %c2_i32 = arith.constant 2 : i32
    %8 = arith.addi %c0_i32, %c2_i32 : i32
    %c1_i32 = arith.constant 1 : i32
    scf.for %arg8 = %c0_i32 to %8 step %c1_i32  : i32 {
      %c16_i32 = arith.constant 16 : i32
      %9 = arith.muli %arg8, %c16_i32 : i32
      %10 = tpu.assume_multiple %9, 8 : i32
      %11 = arith.index_cast %10 : i32 to index
      %c0_12 = arith.constant 0 : index
      %c0_13 = arith.constant 0 : index
      %12 = vector.load %arg1[%11, %c0_12, %c0_13] : memref<32x16x128xf32, #tpu.memory_space<vmem>>, vector<16x16x128xf32>
      %c1_14 = arith.constant 1 : index
      %c1_15 = arith.constant 1 : index
      %c0_16 = arith.constant 0 : index
      %13 = vector.load %arg6[%c1_14, %c1_15, %c0_16] : memref<18x18x128xf32, #tpu.memory_space<vmem>>, vector<16x16x128xf32>
      tpu.vector_store %arg6[%c1_14, %c1_15, %c0_16], %12 {strides = array<i32>} : memref<18x18x128xf32, #tpu.memory_space<vmem>>, vector<16x16x128xf32>,
      %c0_i32_17 = arith.constant 0 : i32
      %c2_i32_18 = arith.constant 2 : i32
      %14 = arith.addi %c0_i32_17, %c2_i32_18 : i32
      %c1_i32_19 = arith.constant 1 : i32
      scf.for %arg9 = %c0_i32_17 to %14 step %c1_i32_19  : i32 {
        %c8_i32 = arith.constant 8 : i32
        %16 = arith.muli %arg9, %c8_i32 : i32
        %cst_25 = arith.constant 0.000000e+00 : f32
        %17 = vector.broadcast %cst_25 : f32 to vector<128x128xf32>
        %c0_i32_26 = arith.constant 0 : i32
        %18 = arith.addi %16, %c0_i32_26 : i32
        %19 = arith.index_cast %18 : i32 to index
        %c0_27 = arith.constant 0 : index
        %c0_28 = arith.constant 0 : index
        %20 = vector.load %arg6[%19, %c0_27, %c0_28] : memref<18x18x128xf32, #tpu.memory_space<vmem>>, vector<8x16x128xf32>
        %21 = vector.shape_cast %20 : vector<8x16x128xf32> to vector<128x128xf32>
        %22 = arith.truncf %21 : vector<128x128xf32> to vector<128x128xbf16>
        %c0_29 = arith.constant 0 : index
        %c0_30 = arith.constant 0 : index
        %c0_31 = arith.constant 0 : index
        %23 = vector.load %arg2[%c0_29, %c0_30, %c0_31] : memref<9x128x128xbf16, #tpu.memory_space<vmem>>, vector<1x128x128xbf16>
        %24 = vector.shape_cast %23 : vector<1x128x128xbf16> to vector<128x128xbf16>
        %cst_32 = arith.constant dense<0.000000e+00> : vector<128x128xf32>
        %25 = tpu.matmul %22, %24, %cst_32 {dimension_numbers = #tpu.dot_dimension_numbers<[1], [0], [0], [1], [0, 0, 1, 1], [], []>} : vector<128x128xbf16>, vector<128x128xbf16>, vector<128x128xf32> -> vector<128x128xf32>
        %26 = arith.addf %17, %25 : vector<128x128xf32>
        %c0_i32_33 = arith.constant 0 : i32
        %27 = arith.addi %16, %c0_i32_33 : i32
        %28 = arith.index_cast %27 : i32 to index
        %c1_34 = arith.constant 1 : index
        %c0_35 = arith.constant 0 : index
        %29 = vector.load %arg6[%28, %c1_34, %c0_35] : memref<18x18x128xf32, #tpu.memory_space<vmem>>, vector<8x16x128xf32>
        %30 = vector.shape_cast %29 : vector<8x16x128xf32> to vector<128x128xf32>
        %31 = arith.truncf %30 : vector<128x128xf32> to vector<128x128xbf16>
        %c1_36 = arith.constant 1 : index
        %c0_37 = arith.constant 0 : index
        %c0_38 = arith.constant 0 : index
        %32 = vector.load %arg2[%c1_36, %c0_37, %c0_38] : memref<9x128x128xbf16, #tpu.memory_space<vmem>>, vector<1x128x128xbf16>
        %33 = vector.shape_cast %32 : vector<1x128x128xbf16> to vector<128x128xbf16>
        %cst_39 = arith.constant dense<0.000000e+00> : vector<128x128xf32>
        %34 = tpu.matmul %31, %33, %cst_39 {dimension_numbers = #tpu.dot_dimension_numbers<[1], [0], [0], [1], [0, 0, 1, 1], [], []>} : vector<128x128xbf16>, vector<128x128xbf16>, vector<128x128xf32> -> vector<128x128xf32>
        %35 = arith.addf %26, %34 : vector<128x128xf32>
        %c0_i32_40 = arith.constant 0 : i32
        %36 = arith.addi %16, %c0_i32_40 : i32
        %37 = arith.index_cast %36 : i32 to index
        %c2_41 = arith.constant 2 : index
        %c0_42 = arith.constant 0 : index
        %38 = vector.load %arg6[%37, %c2_41, %c0_42] : memref<18x18x128xf32, #tpu.memory_space<vmem>>, vector<8x16x128xf32>
        %39 = vector.shape_cast %38 : vector<8x16x128xf32> to vector<128x128xf32>
        %40 = arith.truncf %39 : vector<128x128xf32> to vector<128x128xbf16>
        %c2_43 = arith.constant 2 : index
        %c0_44 = arith.constant 0 : index
        %c0_45 = arith.constant 0 : index
        %41 = vector.load %arg2[%c2_43, %c0_44, %c0_45] : memref<9x128x128xbf16, #tpu.memory_space<vmem>>, vector<1x128x128xbf16>
        %42 = vector.shape_cast %41 : vector<1x128x128xbf16> to vector<128x128xbf16>
        %cst_46 = arith.constant dense<0.000000e+00> : vector<128x128xf32>
        %43 = tpu.matmul %40, %42, %cst_46 {dimension_numbers = #tpu.dot_dimension_numbers<[1], [0], [0], [1], [0, 0, 1, 1], [], []>} : vector<128x128xbf16>, vector<128x128xbf16>, vector<128x128xf32> -> vector<128x128xf32>
        %44 = arith.addf %35, %43 : vector<128x128xf32>
        %c1_i32_47 = arith.constant 1 : i32
        %45 = arith.addi %16, %c1_i32_47 : i32
        %46 = arith.index_cast %45 : i32 to index
        %c0_48 = arith.constant 0 : index
        %c0_49 = arith.constant 0 : index
        %47 = vector.load %arg6[%46, %c0_48, %c0_49] : memref<18x18x128xf32, #tpu.memory_space<vmem>>, vector<8x16x128xf32>
        %48 = vector.shape_cast %47 : vector<8x16x128xf32> to vector<128x128xf32>
        %49 = arith.truncf %48 : vector<128x128xf32> to vector<128x128xbf16>
        %c3_50 = arith.constant 3 : index
        %c0_51 = arith.constant 0 : index
        %c0_52 = arith.constant 0 : index
        %50 = vector.load %arg2[%c3_50, %c0_51, %c0_52] : memref<9x128x128xbf16, #tpu.memory_space<vmem>>, vector<1x128x128xbf16>
        %51 = vector.shape_cast %50 : vector<1x128x128xbf16> to vector<128x128xbf16>
        %cst_53 = arith.constant dense<0.000000e+00> : vector<128x128xf32>
        %52 = tpu.matmul %49, %51, %cst_53 {dimension_numbers = #tpu.dot_dimension_numbers<[1], [0], [0], [1], [0, 0, 1, 1], [], []>} : vector<128x128xbf16>, vector<128x128xbf16>, vector<128x128xf32> -> vector<128x128xf32>
        %53 = arith.addf %44, %52 : vector<128x128xf32>
        %c1_i32_54 = arith.constant 1 : i32
        %54 = arith.addi %16, %c1_i32_54 : i32
        %55 = arith.index_cast %54 : i32 to index
        %c1_55 = arith.constant 1 : index
        %c0_56 = arith.constant 0 : index
        %56 = vector.load %arg6[%55, %c1_55, %c0_56] : memref<18x18x128xf32, #tpu.memory_space<vmem>>, vector<8x16x128xf32>
        %57 = vector.shape_cast %56 : vector<8x16x128xf32> to vector<128x128xf32>
        %58 = arith.truncf %57 : vector<128x128xf32> to vector<128x128xbf16>
        %c4 = arith.constant 4 : index
        %c0_57 = arith.constant 0 : index
        %c0_58 = arith.constant 0 : index
        %59 = vector.load %arg2[%c4, %c0_57, %c0_58] : memref<9x128x128xbf16, #tpu.memory_space<vmem>>, vector<1x128x128xbf16>
        %60 = vector.shape_cast %59 : vector<1x128x128xbf16> to vector<128x128xbf16>
        %cst_59 = arith.constant dense<0.000000e+00> : vector<128x128xf32>
        %61 = tpu.matmul %58, %60, %cst_59 {dimension_numbers = #tpu.dot_dimension_numbers<[1], [0], [0], [1], [0, 0, 1, 1], [], []>} : vector<128x128xbf16>, vector<128x128xbf16>, vector<128x128xf32> -> vector<128x128xf32>
        %62 = arith.addf %53, %61 : vector<128x128xf32>
        %c1_i32_60 = arith.constant 1 : i32
        %63 = arith.addi %16, %c1_i32_60 : i32
        %64 = arith.index_cast %63 : i32 to index
        %c2_61 = arith.constant 2 : index
        %c0_62 = arith.constant 0 : index
        %65 = vector.load %arg6[%64, %c2_61, %c0_62] : memref<18x18x128xf32, #tpu.memory_space<vmem>>, vector<8x16x128xf32>
        %66 = vector.shape_cast %65 : vector<8x16x128xf32> to vector<128x128xf32>
        %67 = arith.truncf %66 : vector<128x128xf32> to vector<128x128xbf16>
        %c5 = arith.constant 5 : index
        %c0_63 = arith.constant 0 : index
        %c0_64 = arith.constant 0 : index
        %68 = vector.load %arg2[%c5, %c0_63, %c0_64] : memref<9x128x128xbf16, #tpu.memory_space<vmem>>, vector<1x128x128xbf16>
        %69 = vector.shape_cast %68 : vector<1x128x128xbf16> to vector<128x128xbf16>
        %cst_65 = arith.constant dense<0.000000e+00> : vector<128x128xf32>
        %70 = tpu.matmul %67, %69, %cst_65 {dimension_numbers = #tpu.dot_dimension_numbers<[1], [0], [0], [1], [0, 0, 1, 1], [], []>} : vector<128x128xbf16>, vector<128x128xbf16>, vector<128x128xf32> -> vector<128x128xf32>
        %71 = arith.addf %62, %70 : vector<128x128xf32>
        %c2_i32_66 = arith.constant 2 : i32
        %72 = arith.addi %16, %c2_i32_66 : i32
        %73 = arith.index_cast %72 : i32 to index
        %c0_67 = arith.constant 0 : index
        %c0_68 = arith.constant 0 : index
        %74 = vector.load %arg6[%73, %c0_67, %c0_68] : memref<18x18x128xf32, #tpu.memory_space<vmem>>, vector<8x16x128xf32>
        %75 = vector.shape_cast %74 : vector<8x16x128xf32> to vector<128x128xf32>
        %76 = arith.truncf %75 : vector<128x128xf32> to vector<128x128xbf16>
        %c6 = arith.constant 6 : index
        %c0_69 = arith.constant 0 : index
        %c0_70 = arith.constant 0 : index
        %77 = vector.load %arg2[%c6, %c0_69, %c0_70] : memref<9x128x128xbf16, #tpu.memory_space<vmem>>, vector<1x128x128xbf16>
        %78 = vector.shape_cast %77 : vector<1x128x128xbf16> to vector<128x128xbf16>
        %cst_71 = arith.constant dense<0.000000e+00> : vector<128x128xf32>
        %79 = tpu.matmul %76, %78, %cst_71 {dimension_numbers = #tpu.dot_dimension_numbers<[1], [0], [0], [1], [0, 0, 1, 1], [], []>} : vector<128x128xbf16>, vector<128x128xbf16>, vector<128x128xf32> -> vector<128x128xf32>
        %80 = arith.addf %71, %79 : vector<128x128xf32>
        %c2_i32_72 = arith.constant 2 : i32
        %81 = arith.addi %16, %c2_i32_72 : i32
        %82 = arith.index_cast %81 : i32 to index
        %c1_73 = arith.constant 1 : index
        %c0_74 = arith.constant 0 : index
        %83 = vector.load %arg6[%82, %c1_73, %c0_74] : memref<18x18x128xf32, #tpu.memory_space<vmem>>, vector<8x16x128xf32>
        %84 = vector.shape_cast %83 : vector<8x16x128xf32> to vector<128x128xf32>
        %85 = arith.truncf %84 : vector<128x128xf32> to vector<128x128xbf16>
        %c7 = arith.constant 7 : index
        %c0_75 = arith.constant 0 : index
        %c0_76 = arith.constant 0 : index
        %86 = vector.load %arg2[%c7, %c0_75, %c0_76] : memref<9x128x128xbf16, #tpu.memory_space<vmem>>, vector<1x128x128xbf16>
        %87 = vector.shape_cast %86 : vector<1x128x128xbf16> to vector<128x128xbf16>
        %cst_77 = arith.constant dense<0.000000e+00> : vector<128x128xf32>
        %88 = tpu.matmul %85, %87, %cst_77 {dimension_numbers = #tpu.dot_dimension_numbers<[1], [0], [0], [1], [0, 0, 1, 1], [], []>} : vector<128x128xbf16>, vector<128x128xbf16>, vector<128x128xf32> -> vector<128x128xf32>
        %89 = arith.addf %80, %88 : vector<128x128xf32>
        %c2_i32_78 = arith.constant 2 : i32
        %90 = arith.addi %16, %c2_i32_78 : i32
        %91 = arith.index_cast %90 : i32 to index
        %c2_79 = arith.constant 2 : index
        %c0_80 = arith.constant 0 : index
        %92 = vector.load %arg6[%91, %c2_79, %c0_80] : memref<18x18x128xf32, #tpu.memory_space<vmem>>, vector<8x16x128xf32>
        %93 = vector.shape_cast %92 : vector<8x16x128xf32> to vector<128x128xf32>
        %94 = arith.truncf %93 : vector<128x128xf32> to vector<128x128xbf16>
        %c8 = arith.constant 8 : index
        %c0_81 = arith.constant 0 : index
        %c0_82 = arith.constant 0 : index
        %95 = vector.load %arg2[%c8, %c0_81, %c0_82] : memref<9x128x128xbf16, #tpu.memory_space<vmem>>, vector<1x128x128xbf16>
        %96 = vector.shape_cast %95 : vector<1x128x128xbf16> to vector<128x128xbf16>
        %cst_83 = arith.constant dense<0.000000e+00> : vector<128x128xf32>
        %97 = tpu.matmul %94, %96, %cst_83 {dimension_numbers = #tpu.dot_dimension_numbers<[1], [0], [0], [1], [0, 0, 1, 1], [], []>} : vector<128x128xbf16>, vector<128x128xbf16>, vector<128x128xf32> -> vector<128x128xf32>
        %98 = arith.addf %89, %97 : vector<128x128xf32>
        %99 = vector.broadcast %4 : vector<1x128xf32> to vector<128x128xf32>
        %100 = arith.mulf %98, %99 : vector<128x128xf32>
        %101 = vector.broadcast %5 : vector<1x128xf32> to vector<128x128xf32>
        %102 = arith.addf %100, %101 : vector<128x128xf32>
        %cst_84 = arith.constant 0.000000e+00 : f32
        %103 = vector.broadcast %cst_84 : f32 to vector<128x128xf32>
        %104 = arith.maximumf %102, %103 : vector<128x128xf32>
        %105 = vector.shape_cast %104 : vector<128x128xf32> to vector<8x16x128xf32>
        %c1_i32_85 = arith.constant 1 : i32
        %106 = arith.addi %16, %c1_i32_85 : i32
        %107 = arith.index_cast %106 : i32 to index
        %c1_86 = arith.constant 1 : index
        %c0_87 = arith.constant 0 : index
        %108 = vector.load %arg7[%107, %c1_86, %c0_87] : memref<18x18x128xf32, #tpu.memory_space<vmem>>, vector<8x16x128xf32>
        tpu.vector_store %arg7[%107, %c1_86, %c0_87], %105 {strides = array<i32>} : memref<18x18x128xf32, #tpu.memory_space<vmem>>, vector<8x16x128xf32>,
      }
      %c2_i32_20 = arith.constant 2 : i32
      %c0_i32_21 = arith.constant 0 : i32
      %c2_i32_22 = arith.constant 2 : i32
      %15 = arith.addi %c0_i32_21, %c2_i32_22 : i32
      %c1_i32_23 = arith.constant 1 : i32
      scf.for %arg9 = %c0_i32_21 to %15 step %c1_i32_23  : i32 {
        %c8_i32 = arith.constant 8 : i32
        %16 = arith.muli %arg9, %c8_i32 : i32
        %cst_25 = arith.constant 0.000000e+00 : f32
        %17 = vector.broadcast %cst_25 : f32 to vector<128x128xf32>
        %c0_i32_26 = arith.constant 0 : i32
        %18 = arith.addi %16, %c0_i32_26 : i32
        %19 = arith.index_cast %18 : i32 to index
        %c0_27 = arith.constant 0 : index
        %c0_28 = arith.constant 0 : index
        %20 = vector.load %arg7[%19, %c0_27, %c0_28] : memref<18x18x128xf32, #tpu.memory_space<vmem>>, vector<8x16x128xf32>
        %21 = vector.shape_cast %20 : vector<8x16x128xf32> to vector<128x128xf32>
        %22 = arith.truncf %21 : vector<128x128xf32> to vector<128x128xbf16>
        %c0_29 = arith.constant 0 : index
        %c0_30 = arith.constant 0 : index
        %c0_31 = arith.constant 0 : index
        %23 = vector.load %arg3[%c0_29, %c0_30, %c0_31] : memref<9x128x128xbf16, #tpu.memory_space<vmem>>, vector<1x128x128xbf16>
        %24 = vector.shape_cast %23 : vector<1x128x128xbf16> to vector<128x128xbf16>
        %cst_32 = arith.constant dense<0.000000e+00> : vector<128x128xf32>
        %25 = tpu.matmul %22, %24, %cst_32 {dimension_numbers = #tpu.dot_dimension_numbers<[1], [0], [0], [1], [0, 0, 1, 1], [], []>} : vector<128x128xbf16>, vector<128x128xbf16>, vector<128x128xf32> -> vector<128x128xf32>
        %26 = arith.addf %17, %25 : vector<128x128xf32>
        %c0_i32_33 = arith.constant 0 : i32
        %27 = arith.addi %16, %c0_i32_33 : i32
        %28 = arith.index_cast %27 : i32 to index
        %c1_34 = arith.constant 1 : index
        %c0_35 = arith.constant 0 : index
        %29 = vector.load %arg7[%28, %c1_34, %c0_35] : memref<18x18x128xf32, #tpu.memory_space<vmem>>, vector<8x16x128xf32>
        %30 = vector.shape_cast %29 : vector<8x16x128xf32> to vector<128x128xf32>
        %31 = arith.truncf %30 : vector<128x128xf32> to vector<128x128xbf16>
        %c1_36 = arith.constant 1 : index
        %c0_37 = arith.constant 0 : index
        %c0_38 = arith.constant 0 : index
        %32 = vector.load %arg3[%c1_36, %c0_37, %c0_38] : memref<9x128x128xbf16, #tpu.memory_space<vmem>>, vector<1x128x128xbf16>
        %33 = vector.shape_cast %32 : vector<1x128x128xbf16> to vector<128x128xbf16>
        %cst_39 = arith.constant dense<0.000000e+00> : vector<128x128xf32>
        %34 = tpu.matmul %31, %33, %cst_39 {dimension_numbers = #tpu.dot_dimension_numbers<[1], [0], [0], [1], [0, 0, 1, 1], [], []>} : vector<128x128xbf16>, vector<128x128xbf16>, vector<128x128xf32> -> vector<128x128xf32>
        %35 = arith.addf %26, %34 : vector<128x128xf32>
        %c0_i32_40 = arith.constant 0 : i32
        %36 = arith.addi %16, %c0_i32_40 : i32
        %37 = arith.index_cast %36 : i32 to index
        %c2_41 = arith.constant 2 : index
        %c0_42 = arith.constant 0 : index
        %38 = vector.load %arg7[%37, %c2_41, %c0_42] : memref<18x18x128xf32, #tpu.memory_space<vmem>>, vector<8x16x128xf32>
        %39 = vector.shape_cast %38 : vector<8x16x128xf32> to vector<128x128xf32>
        %40 = arith.truncf %39 : vector<128x128xf32> to vector<128x128xbf16>
        %c2_43 = arith.constant 2 : index
        %c0_44 = arith.constant 0 : index
        %c0_45 = arith.constant 0 : index
        %41 = vector.load %arg3[%c2_43, %c0_44, %c0_45] : memref<9x128x128xbf16, #tpu.memory_space<vmem>>, vector<1x128x128xbf16>
        %42 = vector.shape_cast %41 : vector<1x128x128xbf16> to vector<128x128xbf16>
        %cst_46 = arith.constant dense<0.000000e+00> : vector<128x128xf32>
        %43 = tpu.matmul %40, %42, %cst_46 {dimension_numbers = #tpu.dot_dimension_numbers<[1], [0], [0], [1], [0, 0, 1, 1], [], []>} : vector<128x128xbf16>, vector<128x128xbf16>, vector<128x128xf32> -> vector<128x128xf32>
        %44 = arith.addf %35, %43 : vector<128x128xf32>
        %c1_i32_47 = arith.constant 1 : i32
        %45 = arith.addi %16, %c1_i32_47 : i32
        %46 = arith.index_cast %45 : i32 to index
        %c0_48 = arith.constant 0 : index
        %c0_49 = arith.constant 0 : index
        %47 = vector.load %arg7[%46, %c0_48, %c0_49] : memref<18x18x128xf32, #tpu.memory_space<vmem>>, vector<8x16x128xf32>
        %48 = vector.shape_cast %47 : vector<8x16x128xf32> to vector<128x128xf32>
        %49 = arith.truncf %48 : vector<128x128xf32> to vector<128x128xbf16>
        %c3_50 = arith.constant 3 : index
        %c0_51 = arith.constant 0 : index
        %c0_52 = arith.constant 0 : index
        %50 = vector.load %arg3[%c3_50, %c0_51, %c0_52] : memref<9x128x128xbf16, #tpu.memory_space<vmem>>, vector<1x128x128xbf16>
        %51 = vector.shape_cast %50 : vector<1x128x128xbf16> to vector<128x128xbf16>
        %cst_53 = arith.constant dense<0.000000e+00> : vector<128x128xf32>
        %52 = tpu.matmul %49, %51, %cst_53 {dimension_numbers = #tpu.dot_dimension_numbers<[1], [0], [0], [1], [0, 0, 1, 1], [], []>} : vector<128x128xbf16>, vector<128x128xbf16>, vector<128x128xf32> -> vector<128x128xf32>
        %53 = arith.addf %44, %52 : vector<128x128xf32>
        %c1_i32_54 = arith.constant 1 : i32
        %54 = arith.addi %16, %c1_i32_54 : i32
        %55 = arith.index_cast %54 : i32 to index
        %c1_55 = arith.constant 1 : index
        %c0_56 = arith.constant 0 : index
        %56 = vector.load %arg7[%55, %c1_55, %c0_56] : memref<18x18x128xf32, #tpu.memory_space<vmem>>, vector<8x16x128xf32>
        %57 = vector.shape_cast %56 : vector<8x16x128xf32> to vector<128x128xf32>
        %58 = arith.truncf %57 : vector<128x128xf32> to vector<128x128xbf16>
        %c4 = arith.constant 4 : index
        %c0_57 = arith.constant 0 : index
        %c0_58 = arith.constant 0 : index
        %59 = vector.load %arg3[%c4, %c0_57, %c0_58] : memref<9x128x128xbf16, #tpu.memory_space<vmem>>, vector<1x128x128xbf16>
        %60 = vector.shape_cast %59 : vector<1x128x128xbf16> to vector<128x128xbf16>
        %cst_59 = arith.constant dense<0.000000e+00> : vector<128x128xf32>
        %61 = tpu.matmul %58, %60, %cst_59 {dimension_numbers = #tpu.dot_dimension_numbers<[1], [0], [0], [1], [0, 0, 1, 1], [], []>} : vector<128x128xbf16>, vector<128x128xbf16>, vector<128x128xf32> -> vector<128x128xf32>
        %62 = arith.addf %53, %61 : vector<128x128xf32>
        %c1_i32_60 = arith.constant 1 : i32
        %63 = arith.addi %16, %c1_i32_60 : i32
        %64 = arith.index_cast %63 : i32 to index
        %c2_61 = arith.constant 2 : index
        %c0_62 = arith.constant 0 : index
        %65 = vector.load %arg7[%64, %c2_61, %c0_62] : memref<18x18x128xf32, #tpu.memory_space<vmem>>, vector<8x16x128xf32>
        %66 = vector.shape_cast %65 : vector<8x16x128xf32> to vector<128x128xf32>
        %67 = arith.truncf %66 : vector<128x128xf32> to vector<128x128xbf16>
        %c5 = arith.constant 5 : index
        %c0_63 = arith.constant 0 : index
        %c0_64 = arith.constant 0 : index
        %68 = vector.load %arg3[%c5, %c0_63, %c0_64] : memref<9x128x128xbf16, #tpu.memory_space<vmem>>, vector<1x128x128xbf16>
        %69 = vector.shape_cast %68 : vector<1x128x128xbf16> to vector<128x128xbf16>
        %cst_65 = arith.constant dense<0.000000e+00> : vector<128x128xf32>
        %70 = tpu.matmul %67, %69, %cst_65 {dimension_numbers = #tpu.dot_dimension_numbers<[1], [0], [0], [1], [0, 0, 1, 1], [], []>} : vector<128x128xbf16>, vector<128x128xbf16>, vector<128x128xf32> -> vector<128x128xf32>
        %71 = arith.addf %62, %70 : vector<128x128xf32>
        %c2_i32_66 = arith.constant 2 : i32
        %72 = arith.addi %16, %c2_i32_66 : i32
        %73 = arith.index_cast %72 : i32 to index
        %c0_67 = arith.constant 0 : index
        %c0_68 = arith.constant 0 : index
        %74 = vector.load %arg7[%73, %c0_67, %c0_68] : memref<18x18x128xf32, #tpu.memory_space<vmem>>, vector<8x16x128xf32>
        %75 = vector.shape_cast %74 : vector<8x16x128xf32> to vector<128x128xf32>
        %76 = arith.truncf %75 : vector<128x128xf32> to vector<128x128xbf16>
        %c6 = arith.constant 6 : index
        %c0_69 = arith.constant 0 : index
        %c0_70 = arith.constant 0 : index
        %77 = vector.load %arg3[%c6, %c0_69, %c0_70] : memref<9x128x128xbf16, #tpu.memory_space<vmem>>, vector<1x128x128xbf16>
        %78 = vector.shape_cast %77 : vector<1x128x128xbf16> to vector<128x128xbf16>
        %cst_71 = arith.constant dense<0.000000e+00> : vector<128x128xf32>
        %79 = tpu.matmul %76, %78, %cst_71 {dimension_numbers = #tpu.dot_dimension_numbers<[1], [0], [0], [1], [0, 0, 1, 1], [], []>} : vector<128x128xbf16>, vector<128x128xbf16>, vector<128x128xf32> -> vector<128x128xf32>
        %80 = arith.addf %71, %79 : vector<128x128xf32>
        %c2_i32_72 = arith.constant 2 : i32
        %81 = arith.addi %16, %c2_i32_72 : i32
        %82 = arith.index_cast %81 : i32 to index
        %c1_73 = arith.constant 1 : index
        %c0_74 = arith.constant 0 : index
        %83 = vector.load %arg7[%82, %c1_73, %c0_74] : memref<18x18x128xf32, #tpu.memory_space<vmem>>, vector<8x16x128xf32>
        %84 = vector.shape_cast %83 : vector<8x16x128xf32> to vector<128x128xf32>
        %85 = arith.truncf %84 : vector<128x128xf32> to vector<128x128xbf16>
        %c7 = arith.constant 7 : index
        %c0_75 = arith.constant 0 : index
        %c0_76 = arith.constant 0 : index
        %86 = vector.load %arg3[%c7, %c0_75, %c0_76] : memref<9x128x128xbf16, #tpu.memory_space<vmem>>, vector<1x128x128xbf16>
        %87 = vector.shape_cast %86 : vector<1x128x128xbf16> to vector<128x128xbf16>
        %cst_77 = arith.constant dense<0.000000e+00> : vector<128x128xf32>
        %88 = tpu.matmul %85, %87, %cst_77 {dimension_numbers = #tpu.dot_dimension_numbers<[1], [0], [0], [1], [0, 0, 1, 1], [], []>} : vector<128x128xbf16>, vector<128x128xbf16>, vector<128x128xf32> -> vector<128x128xf32>
        %89 = arith.addf %80, %88 : vector<128x128xf32>
        %c2_i32_78 = arith.constant 2 : i32
        %90 = arith.addi %16, %c2_i32_78 : i32
        %91 = arith.index_cast %90 : i32 to index
        %c2_79 = arith.constant 2 : index
        %c0_80 = arith.constant 0 : index
        %92 = vector.load %arg7[%91, %c2_79, %c0_80] : memref<18x18x128xf32, #tpu.memory_space<vmem>>, vector<8x16x128xf32>
        %93 = vector.shape_cast %92 : vector<8x16x128xf32> to vector<128x128xf32>
        %94 = arith.truncf %93 : vector<128x128xf32> to vector<128x128xbf16>
        %c8 = arith.constant 8 : index
        %c0_81 = arith.constant 0 : index
        %c0_82 = arith.constant 0 : index
        %95 = vector.load %arg3[%c8, %c0_81, %c0_82] : memref<9x128x128xbf16, #tpu.memory_space<vmem>>, vector<1x128x128xbf16>
        %96 = vector.shape_cast %95 : vector<1x128x128xbf16> to vector<128x128xbf16>
        %cst_83 = arith.constant dense<0.000000e+00> : vector<128x128xf32>
        %97 = tpu.matmul %94, %96, %cst_83 {dimension_numbers = #tpu.dot_dimension_numbers<[1], [0], [0], [1], [0, 0, 1, 1], [], []>} : vector<128x128xbf16>, vector<128x128xbf16>, vector<128x128xf32> -> vector<128x128xf32>
        %98 = arith.addf %89, %97 : vector<128x128xf32>
        %99 = vector.broadcast %6 : vector<1x128xf32> to vector<128x128xf32>
        %100 = arith.mulf %98, %99 : vector<128x128xf32>
        %101 = vector.broadcast %7 : vector<1x128xf32> to vector<128x128xf32>
        %102 = arith.addf %100, %101 : vector<128x128xf32>
        %c1_i32_84 = arith.constant 1 : i32
        %103 = arith.addi %16, %c1_i32_84 : i32
        %104 = arith.index_cast %103 : i32 to index
        %c1_85 = arith.constant 1 : index
        %c0_86 = arith.constant 0 : index
        %105 = vector.load %arg6[%104, %c1_85, %c0_86] : memref<18x18x128xf32, #tpu.memory_space<vmem>>, vector<8x16x128xf32>
        %106 = vector.shape_cast %105 : vector<8x16x128xf32> to vector<128x128xf32>
        %107 = arith.addf %102, %106 : vector<128x128xf32>
        %cst_87 = arith.constant 0.000000e+00 : f32
        %108 = vector.broadcast %cst_87 : f32 to vector<128x128xf32>
        %109 = arith.maximumf %107, %108 : vector<128x128xf32>
        %110 = vector.shape_cast %109 : vector<128x128xf32> to vector<8x16x128xf32>
        %111 = arith.addi %10, %16 : i32
        %112 = arith.index_cast %111 : i32 to index
        %c0_88 = arith.constant 0 : index
        %c0_89 = arith.constant 0 : index
        %113 = vector.load %arg5[%112, %c0_88, %c0_89] : memref<32x16x128xf32, #tpu.memory_space<vmem>>, vector<8x16x128xf32>
        tpu.vector_store %arg5[%112, %c0_88, %c0_89], %110 {strides = array<i32>} : memref<32x16x128xf32, #tpu.memory_space<vmem>>, vector<8x16x128xf32>,
      }
      %c2_i32_24 = arith.constant 2 : i32
    }
    %c2_i32_11 = arith.constant 2 : i32
    return
  }
  func.func @transform_0(%arg0: i32) -> (i32, i32, i32) {
    %c0_i32 = arith.constant 0 : i32
    %c0_i32_0 = arith.constant 0 : i32
    %c0_i32_1 = arith.constant 0 : i32
    %c0_i32_2 = arith.constant 0 : i32
    return %c0_i32, %c0_i32_0, %c0_i32_1 : i32, i32, i32
  }
  func.func @transform_1(%arg0: i32) -> (i32, i32, i32) {
    %c0_i32 = arith.constant 0 : i32
    %c0_i32_0 = arith.constant 0 : i32
    %c0_i32_1 = arith.constant 0 : i32
    %c0_i32_2 = arith.constant 0 : i32
    return %c0_i32, %c0_i32_0, %c0_i32_1 : i32, i32, i32
  }
  func.func @transform_2(%arg0: i32) -> (i32, i32, i32) {
    %c0_i32 = arith.constant 0 : i32
    %c0_i32_0 = arith.constant 0 : i32
    %c0_i32_1 = arith.constant 0 : i32
    %c0_i32_2 = arith.constant 0 : i32
    return %c0_i32, %c0_i32_0, %c0_i32_1 : i32, i32, i32
  }
  func.func @transform_3(%arg0: i32) -> (i32, i32) {
    %c0_i32 = arith.constant 0 : i32
    %c0_i32_0 = arith.constant 0 : i32
    %c0_i32_1 = arith.constant 0 : i32
    return %c0_i32, %c0_i32_0 : i32, i32
  }
  func.func @transform_4(%arg0: i32) -> (i32, i32, i32) {
    %c0_i32 = arith.constant 0 : i32
    %c0_i32_0 = arith.constant 0 : i32
    %c0_i32_1 = arith.constant 0 : i32
    %c0_i32_2 = arith.constant 0 : i32
    return %c0_i32, %c0_i32_0, %c0_i32_1 : i32, i32, i32
  }
}

</mosaic_0001>

<llo_original>
// kernel: basic_block_forward.1
$region0: #{basic_block_forward.1}
  #allocation0 [shape = 'u32[]', space=smem, size = 0x4, offset = 0x4, fixed_abs, tag = 'smem constant byte address 0x4 - core index']
  #allocation1 [shape = 'u32[72,128]{1,0:T(1,128)}', space=vmem, size = 0x9000, scoped, tag = 'internal scratch']
  #allocation2 [shape = 'f32[18,18,128]{2,1,0:T(8,128)}', space=vmem, size = 0x36000, scoped, tag = 'scratch operand']
  #allocation3 [shape = 'f32[18,18,128]{2,1,0:T(8,128)}', space=vmem, size = 0x36000, scoped, tag = 'scratch operand']
  %s0 = inlined_call_operand.vmem [shape: f32[32,16,128], index: 0, kind: input, shape index: {}]
  %s1 = inlined_call_operand.vmem [shape: bf16[9,128,128], index: 1, kind: input, shape index: {}]
  %s2 = inlined_call_operand.vmem [shape: bf16[9,128,128], index: 2, kind: input, shape index: {}]
  %s3 = inlined_call_operand.vmem [shape: f32[8,128], index: 3, kind: input, shape index: {}]
  %s4 = inlined_call_operand.vmem [shape: f32[32,16,128], index: 4, kind: output, shape index: {}]
  %s5 = sld [smem:[#allocation0]]
  $region47: #{basic_block_forward.1} parent=0
    _
  %s7 = ssub.s32 1, %s5
  %s8 = scalar_select 0, %s7, %s5
  // Predicated region
  $region2: #{basic_block_forward.1} parent=0 // pred_check
    _
  $region3: #{basic_block_forward.1} parent=0 // pred_check_branch
    %10 = sbr.rel (0) target = $region5
  $region4: #{basic_block_forward.1} parent=0 // pred_region
    _
  $region5: #{basic_block_forward.1} parent=0 // pred_fallthru
    _
  // Predicated region
  $region6: #{basic_block_forward.1} parent=0 // pred_check
    _
  $region7: #{basic_block_forward.1} parent=0 // pred_check_branch
    %12 = sbr.rel (0) target = $region9
  $region8: #{basic_block_forward.1} parent=0 // pred_region
    _
  $region9: #{basic_block_forward.1} parent=0 // pred_fallthru
    _
  // Predicated region
  $region10: #{basic_block_forward.1} parent=0 // pred_check
    _
  $region11: #{basic_block_forward.1} parent=0 // pred_check_branch
    %14 = sbr.rel (0) target = $region13
  $region12: #{basic_block_forward.1} parent=0 // pred_region
    _
  $region13: #{basic_block_forward.1} parent=0 // pred_fallthru
    _
  // Predicated region
  $region14: #{basic_block_forward.1} parent=0 // pred_check
    _
  $region15: #{basic_block_forward.1} parent=0 // pred_check_branch
    %16 = sbr.rel (0) target = $region17
  $region16: #{basic_block_forward.1} parent=0 // pred_region
    _
  $region17: #{basic_block_forward.1} parent=0 // pred_fallthru
    _
  %17 = vst [vmem:[#allocation2] sm:$0xff] 0.0
  %18 = vst [vmem:[#allocation2 + $0x8] sm:$0xff] 0.0
  %19 = vst [vmem:[#allocation2 + $0x10] sm:$0x3] 0.0
  %20 = vst [vmem:[#allocation2 + $0x18] sm:$0xff] 0.0
  %21 = vst [vmem:[#allocation2 + $0x20] sm:$0xff] 0.0
  %22 = vst [vmem:[#allocation2 + $0x28] sm:$0x3] 0.0
  %23 = vst [vmem:[#allocation2 + $0x30] sm:$0xff] 0.0
  %24 = vst [vmem:[#allocation2 + $0x38] sm:$0xff] 0.0
  %25 = vst [vmem:[#allocation2 + $0x40] sm:$0x3] 0.0
  %26 = vst [vmem:[#allocation2 + $0x48] sm:$0xff] 0.0
  %27 = vst [vmem:[#allocation2 + $0x50] sm:$0xff] 0.0
  %28 = vst [vmem:[#allocation2 + $0x58] sm:$0x3] 0.0
  %29 = vst [vmem:[#allocation2 + $0x60] sm:$0xff] 0.0
  %30 = vst [vmem:[#allocation2 + $0x68] sm:$0xff] 0.0
  %31 = vst [vmem:[#allocation2 + $0x70] sm:$0x3] 0.0
  %32 = vst [vmem:[#allocation2 + $0x78] sm:$0xff] 0.0
  %33 = vst [vmem:[#allocation2 + $0x80] sm:$0xff] 0.0
  %34 = vst [vmem:[#allocation2 + $0x88] sm:$0x3] 0.0
  %35 = vst [vmem:[#allocation2 + $0x90] sm:$0xff] 0.0
  %36 = vst [vmem:[#allocation2 + $0x98] sm:$0xff] 0.0
  %37 = vst [vmem:[#allocation2 + $0xa0] sm:$0x3] 0.0
  %38 = vst [vmem:[#allocation2 + $0xa8] sm:$0xff] 0.0
  %39 = vst [vmem:[#allocation2 + $0xb0] sm:$0xff] 0.0
  %40 = vst [vmem:[#allocation2 + $0xb8] sm:$0x3] 0.0
  %41 = vst [vmem:[#allocation2 + $0xc0] sm:$0xff] 0.0
  %42 = vst [vmem:[#allocation2 + $0xc8] sm:$0xff] 0.0
  %43 = vst [vmem:[#allocation2 + $0xd0] sm:$0x3] 0.0
  %44 = vst [vmem:[#allocation2 + $0xd8] sm:$0xff] 0.0
  %45 = vst [vmem:[#allocation2 + $0xe0] sm:$0xff] 0.0
  %46 = vst [vmem:[#allocation2 + $0xe8] sm:$0x3] 0.0
  %47 = vst [vmem:[#allocation2 + $0xf0] sm:$0xff] 0.0
  %48 = vst [vmem:[#allocation2 + $0xf8] sm:$0xff] 0.0
  %49 = vst [vmem:[#allocation2 + $0x100] sm:$0x3] 0.0
  %50 = vst [vmem:[#allocation2 + $0x108] sm:$0xff] 0.0
  %51 = vst [vmem:[#allocation2 + $0x110] sm:$0xff] 0.0
  %52 = vst [vmem:[#allocation2 + $0x118] sm:$0x3] 0.0
  %53 = vst [vmem:[#allocation2 + $0x120] sm:$0xff] 0.0
  %54 = vst [vmem:[#allocation2 + $0x128] sm:$0xff] 0.0
  %55 = vst [vmem:[#allocation2 + $0x130] sm:$0x3] 0.0
  %56 = vst [vmem:[#allocation2 + $0x138] sm:$0xff] 0.0
  %57 = vst [vmem:[#allocation2 + $0x140] sm:$0xff] 0.0
  %58 = vst [vmem:[#allocation2 + $0x148] sm:$0x3] 0.0
  %59 = vst [vmem:[#allocation2 + $0x150] sm:$0xff] 0.0
  %60 = vst [vmem:[#allocation2 + $0x158] sm:$0xff] 0.0
  %61 = vst [vmem:[#allocation2 + $0x160] sm:$0x3] 0.0
  %62 = vst [vmem:[#allocation2 + $0x168] sm:$0xff] 0.0
  %63 = vst [vmem:[#allocation2 + $0x170] sm:$0xff] 0.0
  %64 = vst [vmem:[#allocation2 + $0x178] sm:$0x3] 0.0
  %65 = vst [vmem:[#allocation2 + $0x180] sm:$0xff] 0.0
  %66 = vst [vmem:[#allocation2 + $0x188] sm:$0xff] 0.0
  %67 = vst [vmem:[#allocation2 + $0x190] sm:$0x3] 0.0
  %68 = vst [vmem:[#allocation2 + $0x198] sm:$0xff] 0.0
  %69 = vst [vmem:[#allocation2 + $0x1a0] sm:$0xff] 0.0
  %70 = vst [vmem:[#allocation2 + $0x1a8] sm:$0x3] 0.0
  %71 = vst [vmem:[#allocation3] sm:$0xff] 0.0
  %72 = vst [vmem:[#allocation3 + $0x8] sm:$0xff] 0.0
  %73 = vst [vmem:[#allocation3 + $0x10] sm:$0x3] 0.0
  %74 = vst [vmem:[#allocation3 + $0x18] sm:$0xff] 0.0
  %75 = vst [vmem:[#allocation3 + $0x20] sm:$0xff] 0.0
  %76 = vst [vmem:[#allocation3 + $0x28] sm:$0x3] 0.0
  %77 = vst [vmem:[#allocation3 + $0x30] sm:$0xff] 0.0
  %78 = vst [vmem:[#allocation3 + $0x38] sm:$0xff] 0.0
  %79 = vst [vmem:[#allocation3 + $0x40] sm:$0x3] 0.0
  %80 = vst [vmem:[#allocation3 + $0x48] sm:$0xff] 0.0
  %81 = vst [vmem:[#allocation3 + $0x50] sm:$0xff] 0.0
  %82 = vst [vmem:[#allocation3 + $0x58] sm:$0x3] 0.0
  %83 = vst [vmem:[#allocation3 + $0x60] sm:$0xff] 0.0
  %84 = vst [vmem:[#allocation3 + $0x68] sm:$0xff] 0.0
  %85 = vst [vmem:[#allocation3 + $0x70] sm:$0x3] 0.0
  %86 = vst [vmem:[#allocation3 + $0x78] sm:$0xff] 0.0
  %87 = vst [vmem:[#allocation3 + $0x80] sm:$0xff] 0.0
  %88 = vst [vmem:[#allocation3 + $0x88] sm:$0x3] 0.0
  %89 = vst [vmem:[#allocation3 + $0x90] sm:$0xff] 0.0
  %90 = vst [vmem:[#allocation3 + $0x98] sm:$0xff] 0.0
  %91 = vst [vmem:[#allocation3 + $0xa0] sm:$0x3] 0.0
  %92 = vst [vmem:[#allocation3 + $0xa8] sm:$0xff] 0.0
  %93 = vst [vmem:[#allocation3 + $0xb0] sm:$0xff] 0.0
  %94 = vst [vmem:[#allocation3 + $0xb8] sm:$0x3] 0.0
  %95 = vst [vmem:[#allocation3 + $0xc0] sm:$0xff] 0.0
  %96 = vst [vmem:[#allocation3 + $0xc8] sm:$0xff] 0.0
  %97 = vst [vmem:[#allocation3 + $0xd0] sm:$0x3] 0.0
  %98 = vst [vmem:[#allocation3 + $0xd8] sm:$0xff] 0.0
  %99 = vst [vmem:[#allocation3 + $0xe0] sm:$0xff] 0.0
  %100 = vst [vmem:[#allocation3 + $0xe8] sm:$0x3] 0.0
  %101 = vst [vmem:[#allocation3 + $0xf0] sm:$0xff] 0.0
  %102 = vst [vmem:[#allocation3 + $0xf8] sm:$0xff] 0.0
  %103 = vst [vmem:[#allocation3 + $0x100] sm:$0x3] 0.0
  %104 = vst [vmem:[#allocation3 + $0x108] sm:$0xff] 0.0
  %105 = vst [vmem:[#allocation3 + $0x110] sm:$0xff] 0.0
  %106 = vst [vmem:[#allocation3 + $0x118] sm:$0x3] 0.0
  %107 = vst [vmem:[#allocation3 + $0x120] sm:$0xff] 0.0
  %108 = vst [vmem:[#allocation3 + $0x128] sm:$0xff] 0.0
  %109 = vst [vmem:[#allocation3 + $0x130] sm:$0x3] 0.0
  %110 = vst [vmem:[#allocation3 + $0x138] sm:$0xff] 0.0
  %111 = vst [vmem:[#allocation3 + $0x140] sm:$0xff] 0.0
  %112 = vst [vmem:[#allocation3 + $0x148] sm:$0x3] 0.0
  %113 = vst [vmem:[#allocation3 + $0x150] sm:$0xff] 0.0
  %114 = vst [vmem:[#allocation3 + $0x158] sm:$0xff] 0.0
  %115 = vst [vmem:[#allocation3 + $0x160] sm:$0x3] 0.0
  %116 = vst [vmem:[#allocation3 + $0x168] sm:$0xff] 0.0
  %117 = vst [vmem:[#allocation3 + $0x170] sm:$0xff] 0.0
  %118 = vst [vmem:[#allocation3 + $0x178] sm:$0x3] 0.0
  %119 = vst [vmem:[#allocation3 + $0x180] sm:$0xff] 0.0
  %120 = vst [vmem:[#allocation3 + $0x188] sm:$0xff] 0.0
  %121 = vst [vmem:[#allocation3 + $0x190] sm:$0x3] 0.0
  %122 = vst [vmem:[#allocation3 + $0x198] sm:$0xff] 0.0
  %123 = vst [vmem:[#allocation3 + $0x1a0] sm:$0xff] 0.0
  %124 = vst [vmem:[#allocation3 + $0x1a8] sm:$0x3] 0.0
  %v125 = vld [vmem:[%s3] sm:$0x1]
  %v126 = vld [vmem:[%s3 + $0x1] sm:$0x1]
  %v127 = vld [vmem:[%s3 + $0x2] sm:$0x1]
  %v128 = vld [vmem:[%s3 + $0x3] sm:$0x1]
  loop: start=0, step=1, limit=2
  $region18: #{basic_block_forward.1} parent=0 // loop_pre_header
    _
  $region19: #{basic_block_forward.1} parent=0 // loop_header
    %s130 = sphi 0, %s134
    %p131 = scmp.ge.s32.totalorder %s130, 2
  $region20: #{basic_block_forward.1} parent=0 // loop_header_branch
    %133 = sbr.rel (%p131) target = $region24
  $region21: #{basic_block_forward.1} parent=0 // loop_body
    %s135 = smul.u32 %s130, 16
    %s136 = smul.u32 %s135, 16
    %s137 = scalar_lea.vmem %s0, %s136
    %v138 = vld [vmem:[%s137] sm:$0xff]
    %v139 = vld [vmem:[%s137 + $0x8] sm:$0xff]
    %v140 = vld [vmem:[%s137 + $0x10] sm:$0xff]
    %v141 = vld [vmem:[%s137 + $0x18] sm:$0xff]
    %v142 = vld [vmem:[%s137 + $0x20] sm:$0xff]
    %v143 = vld [vmem:[%s137 + $0x28] sm:$0xff]
    %v144 = vld [vmem:[%s137 + $0x30] sm:$0xff]
    %v145 = vld [vmem:[%s137 + $0x38] sm:$0xff]
    %v146 = vld [vmem:[%s137 + $0x40] sm:$0xff]
    %v147 = vld [vmem:[%s137 + $0x48] sm:$0xff]
    %v148 = vld [vmem:[%s137 + $0x50] sm:$0xff]
    %v149 = vld [vmem:[%s137 + $0x58] sm:$0xff]
    %v150 = vld [vmem:[%s137 + $0x60] sm:$0xff]
    %v151 = vld [vmem:[%s137 + $0x68] sm:$0xff]
    %v152 = vld [vmem:[%s137 + $0x70] sm:$0xff]
    %v153 = vld [vmem:[%s137 + $0x78] sm:$0xff]
    %v154 = vld [vmem:[%s137 + $0x80] sm:$0xff]
    %v155 = vld [vmem:[%s137 + $0x88] sm:$0xff]
    %v156 = vld [vmem:[%s137 + $0x90] sm:$0xff]
    %v157 = vld [vmem:[%s137 + $0x98] sm:$0xff]
    %v158 = vld [vmem:[%s137 + $0xa0] sm:$0xff]
    %v159 = vld [vmem:[%s137 + $0xa8] sm:$0xff]
    %v160 = vld [vmem:[%s137 + $0xb0] sm:$0xff]
    %v161 = vld [vmem:[%s137 + $0xb8] sm:$0xff]
    %v162 = vld [vmem:[%s137 + $0xc0] sm:$0xff]
    %v163 = vld [vmem:[%s137 + $0xc8] sm:$0xff]
    %v164 = vld [vmem:[%s137 + $0xd0] sm:$0xff]
    %v165 = vld [vmem:[%s137 + $0xd8] sm:$0xff]
    %v166 = vld [vmem:[%s137 + $0xe0] sm:$0xff]
    %v167 = vld [vmem:[%s137 + $0xe8] sm:$0xff]
    %v168 = vld [vmem:[%s137 + $0xf0] sm:$0xff]
    %v169 = vld [vmem:[%s137 + $0xf8] sm:$0xff]
    %s170 = scalar_lea.vmem [#allocation2], 24
    %171 = vst [vmem:[%s170 + $0x1] sm:$0xff] %v138
    %172 = vst [vmem:[%s170 + $0x9] sm:$0xff] %v139
    %173 = vst [vmem:[%s170 + $0x19] sm:$0xff] %v140
    %174 = vst [vmem:[%s170 + $0x21] sm:$0xff] %v141
    %175 = vst [vmem:[%s170 + $0x31] sm:$0xff] %v142
    %176 = vst [vmem:[%s170 + $0x39] sm:$0xff] %v143
    %177 = vst [vmem:[%s170 + $0x49] sm:$0xff] %v144
    %178 = vst [vmem:[%s170 + $0x51] sm:$0xff] %v145
    %179 = vst [vmem:[%s170 + $0x61] sm:$0xff] %v146
    %180 = vst [vmem:[%s170 + $0x69] sm:$0xff] %v147
    %181 = vst [vmem:[%s170 + $0x79] sm:$0xff] %v148
    %182 = vst [vmem:[%s170 + $0x81] sm:$0xff] %v149
    %183 = vst [vmem:[%s170 + $0x91] sm:$0xff] %v150
    %184 = vst [vmem:[%s170 + $0x99] sm:$0xff] %v151
    %185 = vst [vmem:[%s170 + $0xa9] sm:$0xff] %v152
    %186 = vst [vmem:[%s170 + $0xb1] sm:$0xff] %v153
    %187 = vst [vmem:[%s170 + $0xc1] sm:$0xff] %v154
    %188 = vst [vmem:[%s170 + $0xc9] sm:$0xff] %v155
    %189 = vst [vmem:[%s170 + $0xd9] sm:$0xff] %v156
    %190 = vst [vmem:[%s170 + $0xe1] sm:$0xff] %v157
    %191 = vst [vmem:[%s170 + $0xf1] sm:$0xff] %v158
    %192 = vst [vmem:[%s170 + $0xf9] sm:$0xff] %v159
    %193 = vst [vmem:[%s170 + $0x109] sm:$0xff] %v160
    %194 = vst [vmem:[%s170 + $0x111] sm:$0xff] %v161
    %195 = vst [vmem:[%s170 + $0x121] sm:$0xff] %v162
    %196 = vst [vmem:[%s170 + $0x129] sm:$0xff] %v163
    %197 = vst [vmem:[%s170 + $0x139] sm:$0xff] %v164
    %198 = vst [vmem:[%s170 + $0x141] sm:$0xff] %v165
    %199 = vst [vmem:[%s170 + $0x151] sm:$0xff] %v166
    %200 = vst [vmem:[%s170 + $0x159] sm:$0xff] %v167
    %201 = vst [vmem:[%s170 + $0x169] sm:$0xff] %v168
    %202 = vst [vmem:[%s170 + $0x171] sm:$0xff] %v169
    loop: start=0, step=1, limit=2
    $region25: #{basic_block_forward.1} parent=21 // loop_pre_header
      _
    $region26: #{basic_block_forward.1} parent=21 // loop_header
      %s204 = sphi 0, %s208
      %p205 = scmp.ge.s32.totalorder %s204, 2
    $region27: #{basic_block_forward.1} parent=21 // loop_header_branch
      %207 = sbr.rel (%p205) target = $region31
    $region28: #{basic_block_forward.1} parent=21 // loop_body
      %s209 = smul.u32 %s204, 8
      %s210 = smul.u32 %s209, 24
      %s211 = scalar_lea.vmem [#allocation2], %s210
      %v212 = vld [vmem:[%s211] sm:$0xff]
      %v213 = vld [vmem:[%s211 + $0x8] sm:$0xff]
      %v214 = vld [vmem:[%s211 + $0x18] sm:$0xff]
      %v215 = vld [vmem:[%s211 + $0x20] sm:$0xff]
      %v216 = vld [vmem:[%s211 + $0x30] sm:$0xff]
      %v217 = vld [vmem:[%s211 + $0x38] sm:$0xff]
      %v218 = vld [vmem:[%s211 + $0x48] sm:$0xff]
      %v219 = vld [vmem:[%s211 + $0x50] sm:$0xff]
      %v220 = vld [vmem:[%s211 + $0x60] sm:$0xff]
      %v221 = vld [vmem:[%s211 + $0x68] sm:$0xff]
      %v222 = vld [vmem:[%s211 + $0x78] sm:$0xff]
      %v223 = vld [vmem:[%s211 + $0x80] sm:$0xff]
      %v224 = vld [vmem:[%s211 + $0x90] sm:$0xff]
      %v225 = vld [vmem:[%s211 + $0x98] sm:$0xff]
      %v226 = vld [vmem:[%s211 + $0xa8] sm:$0xff]
      %v227 = vld [vmem:[%s211 + $0xb0] sm:$0xff]
      %v228 = vpack.c.bf16 %v213, %v212
      %v229 = vpack.c.bf16 %v215, %v214
      %v230 = vpack.c.bf16 %v217, %v216
      %v231 = vpack.c.bf16 %v219, %v218
      %v232 = vpack.c.bf16 %v221, %v220
      %v233 = vpack.c.bf16 %v223, %v222
      %v234 = vpack.c.bf16 %v225, %v224
      %v235 = vpack.c.bf16 %v227, %v226
      %v236 = vld [vmem:[%s1] sm:$0xf]
      %v237 = vld [vmem:[%s1 + $0x4] sm:$0xf]
      %v238 = vld [vmem:[%s1 + $0x8] sm:$0xf]
      %v239 = vld [vmem:[%s1 + $0xc] sm:$0xf]
      %v240 = vld [vmem:[%s1 + $0x10] sm:$0xf]
      %v241 = vld [vmem:[%s1 + $0x14] sm:$0xf]
      %v242 = vld [vmem:[%s1 + $0x18] sm:$0xf]
      %v243 = vld [vmem:[%s1 + $0x1c] sm:$0xf]
      %v244 = vld [vmem:[%s1 + $0x20] sm:$0xf]
      %v245 = vld [vmem:[%s1 + $0x24] sm:$0xf]
      %v246 = vld [vmem:[%s1 + $0x28] sm:$0xf]
      %v247 = vld [vmem:[%s1 + $0x2c] sm:$0xf]
      %v248 = vld [vmem:[%s1 + $0x30] sm:$0xf]
      %v249 = vld [vmem:[%s1 + $0x34] sm:$0xf]
      %v250 = vld [vmem:[%s1 + $0x38] sm:$0xf]
      %v251 = vld [vmem:[%s1 + $0x3c] sm:$0xf]
      %v252 = vld [vmem:[%s211 + $0x1] sm:$0xff]
      %v253 = vld [vmem:[%s211 + $0x9] sm:$0xff]
      %v254 = vld [vmem:[%s211 + $0x19] sm:$0xff]
      %v255 = vld [vmem:[%s211 + $0x21] sm:$0xff]
      %v256 = vld [vmem:[%s211 + $0x31] sm:$0xff]
      %v257 = vld [vmem:[%s211 + $0x39] sm:$0xff]
      %v258 = vld [vmem:[%s211 + $0x49] sm:$0xff]
      %v259 = vld [vmem:[%s211 + $0x51] sm:$0xff]
      %v260 = vld [vmem:[%s211 + $0x61] sm:$0xff]
      %v261 = vld [vmem:[%s211 + $0x69] sm:$0xff]
      %v262 = vld [vmem:[%s211 + $0x79] sm:$0xff]
      %v263 = vld [vmem:[%s211 + $0x81] sm:$0xff]
      %v264 = vld [vmem:[%s211 + $0x91] sm:$0xff]
      %v265 = vld [vmem:[%s211 + $0x99] sm:$0xff]
      %v266 = vld [vmem:[%s211 + $0xa9] sm:$0xff]
      %v267 = vld [vmem:[%s211 + $0xb1] sm:$0xff]
      %v268 = vpack.c.bf16 %v253, %v252
      %v269 = vpack.c.bf16 %v255, %v254
      %v270 = vpack.c.bf16 %v257, %v256
      %v271 = vpack.c.bf16 %v259, %v258
      %v272 = vpack.c.bf16 %v261, %v260
      %v273 = vpack.c.bf16 %v263, %v262
      %v274 = vpack.c.bf16 %v265, %v264
      %v275 = vpack.c.bf16 %v267, %v266
      %s276 = scalar_lea.vmem %s1, 64
      %v277 = vld [vmem:[%s276] sm:$0xf]
      %v278 = vld [vmem:[%s276 + $0x4] sm:$0xf]
      %v279 = vld [vmem:[%s276 + $0x8] sm:$0xf]
      %v280 = vld [vmem:[%s276 + $0xc] sm:$0xf]
      %v281 = vld [vmem:[%s276 + $0x10] sm:$0xf]
      %v282 = vld [vmem:[%s276 + $0x14] sm:$0xf]
      %v283 = vld [vmem:[%s276 + $0x18] sm:$0xf]
      %v284 = vld [vmem:[%s276 + $0x1c] sm:$0xf]
      %v285 = vld [vmem:[%s276 + $0x20] sm:$0xf]
      %v286 = vld [vmem:[%s276 + $0x24] sm:$0xf]
      %v287 = vld [vmem:[%s276 + $0x28] sm:$0xf]
      %v288 = vld [vmem:[%s276 + $0x2c] sm:$0xf]
      %v289 = vld [vmem:[%s276 + $0x30] sm:$0xf]
      %v290 = vld [vmem:[%s276 + $0x34] sm:$0xf]
      %v291 = vld [vmem:[%s276 + $0x38] sm:$0xf]
      %v292 = vld [vmem:[%s276 + $0x3c] sm:$0xf]
      %v309 = vunpack.c.l.b16 %v277
      %v310 = vunpack.c.l.b16 %v278
      %v311 = vunpack.c.l.b16 %v279
      %v312 = vunpack.c.l.b16 %v280
      %v313 = vunpack.c.l.b16 %v281
      %v314 = vunpack.c.l.b16 %v282
      %v315 = vunpack.c.l.b16 %v283
      %v316 = vunpack.c.l.b16 %v284
      %v317 = vunpack.c.l.b16 %v285
      %v318 = vunpack.c.l.b16 %v286
      %v319 = vunpack.c.l.b16 %v287
      %v320 = vunpack.c.l.b16 %v288
      %v321 = vunpack.c.l.b16 %v289
      %v322 = vunpack.c.l.b16 %v290
      %v323 = vunpack.c.l.b16 %v291
      %v324 = vunpack.c.l.b16 %v292
      %v325 = vpack.c.b16 %v310, %v309
      %v326 = vpack.c.b16 %v312, %v311
      %v327 = vpack.c.b16 %v314, %v313
      %v328 = vpack.c.b16 %v316, %v315
      %v329 = vpack.c.b16 %v318, %v317
      %v330 = vpack.c.b16 %v320, %v319
      %v331 = vpack.c.b16 %v322, %v321
      %v332 = vpack.c.b16 %v324, %v323
      %341 = vmatpush.bf16.msra.mxu0 %v332
      %342 = vmatpush.bf16.msra.mxu0 %v331
      %343 = vmatpush.bf16.msra.mxu0 %v330
      %344 = vmatpush.bf16.msra.mxu0 %v329
      %345 = vmatpush.bf16.msra.mxu0 %v328
      %346 = vmatpush.bf16.msra.mxu0 %v327
      %347 = vmatpush.bf16.msra.mxu0 %v326
      %348 = vmatpush.bf16.msra.mxu0 %v325
      %349 = vmatmul.bf16.gmra.mxu0 %v268
      %v350 = vpop.f32.mrf.mxu0
      %v351 = vadd.f32 0.0, %v350
      %v352 = vpop.f32.mrf.mxu0
      %v353 = vadd.f32 0.0, %v352
      %354 = vmatmul.bf16.gmra.mxu0 %v269
      %v355 = vpop.f32.mrf.mxu0
      %v356 = vadd.f32 0.0, %v355
      %v357 = vpop.f32.mrf.mxu0
      %v358 = vadd.f32 0.0, %v357
      %359 = vmatmul.bf16.gmra.mxu0 %v270
      %v360 = vpop.f32.mrf.mxu0
      %v361 = vadd.f32 0.0, %v360
      %v362 = vpop.f32.mrf.mxu0
      %v363 = vadd.f32 0.0, %v362
      %364 = vmatmul.bf16.gmra.mxu0 %v271
      %v365 = vpop.f32.mrf.mxu0
      %v366 = vadd.f32 0.0, %v365
      %v367 = vpop.f32.mrf.mxu0
      %v368 = vadd.f32 0.0, %v367
      %369 = vmatmul.bf16.gmra.mxu0 %v272
      %v370 = vpop.f32.mrf.mxu0
      %v371 = vadd.f32 0.0, %v370
      %v372 = vpop.f32.mrf.mxu0
      %v373 = vadd.f32 0.0, %v372
      %374 = vmatmul.bf16.gmra.mxu0 %v273
      %v375 = vpop.f32.mrf.mxu0
      %v376 = vadd.f32 0.0, %v375
      %v377 = vpop.f32.mrf.mxu0
      %v378 = vadd.f32 0.0, %v377
      %379 = vmatmul.bf16.gmra.mxu0 %v274
      %v380 = vpop.f32.mrf.mxu0
      %v381 = vadd.f32 0.0, %v380
      %v382 = vpop.f32.mrf.mxu0
      %v383 = vadd.f32 0.0, %v382
      %384 = vmatmul.bf16.gmra.mxu0 %v275
      %v385 = vpop.f32.mrf.mxu0
      %v386 = vadd.f32 0.0, %v385
      %v387 = vpop.f32.mrf.mxu0
      %v388 = vadd.f32 0.0, %v387
      %389 = vdwg.mxu0
      %v406 = vunpack.c.l.b16 %v236
      %v407 = vunpack.c.l.b16 %v237
      %v408 = vunpack.c.l.b16 %v238
      %v409 = vunpack.c.l.b16 %v239
      %v410 = vunpack.c.l.b16 %v240
      %v411 = vunpack.c.l.b16 %v241
      %v412 = vunpack.c.l.b16 %v242
      %v413 = vunpack.c.l.b16 %v243
      %v414 = vunpack.c.l.b16 %v244
      %v415 = vunpack.c.l.b16 %v245
      %v416 = vunpack.c.l.b16 %v246
      %v417 = vunpack.c.l.b16 %v247
      %v418 = vunpack.c.l.b16 %v248
      %v419 = vunpack.c.l.b16 %v249
      %v420 = vunpack.c.l.b16 %v250
      %v421 = vunpack.c.l.b16 %v251
      %v422 = vpack.c.b16 %v407, %v406
      %v423 = vpack.c.b16 %v409, %v408
      %v424 = vpack.c.b16 %v411, %v410
      %v425 = vpack.c.b16 %v413, %v412
      %v426 = vpack.c.b16 %v415, %v414
      %v427 = vpack.c.b16 %v417, %v416
      %v428 = vpack.c.b16 %v419, %v418
      %v429 = vpack.c.b16 %v421, %v420
      %438 = vmatpush.bf16.msra.mxu0 %v429
      %439 = vmatpush.bf16.msra.mxu0 %v428
      %440 = vmatpush.bf16.msra.mxu0 %v427
      %441 = vmatpush.bf16.msra.mxu0 %v426
      %442 = vmatpush.bf16.msra.mxu0 %v425
      %443 = vmatpush.bf16.msra.mxu0 %v424
      %444 = vmatpush.bf16.msra.mxu0 %v423
      %445 = vmatpush.bf16.msra.mxu0 %v422
      %446 = vmatmul.bf16.gmra.mxu0 %v228
      %v447 = vpop.f32.mrf.mxu0
      %v448 = vadd.f32 %v351, %v447
      %v449 = vpop.f32.mrf.mxu0
      %v450 = vadd.f32 %v353, %v449
      %451 = vmatmul.bf16.gmra.mxu0 %v229
      %v452 = vpop.f32.mrf.mxu0
      %v453 = vadd.f32 %v356, %v452
      %v454 = vpop.f32.mrf.mxu0
      %v455 = vadd.f32 %v358, %v454
      %456 = vmatmul.bf16.gmra.mxu0 %v230
      %v457 = vpop.f32.mrf.mxu0
      %v458 = vadd.f32 %v361, %v457
      %v459 = vpop.f32.mrf.mxu0
      %v460 = vadd.f32 %v363, %v459
      %461 = vmatmul.bf16.gmra.mxu0 %v231
      %v462 = vpop.f32.mrf.mxu0
      %v463 = vadd.f32 %v366, %v462
      %v464 = vpop.f32.mrf.mxu0
      %v465 = vadd.f32 %v368, %v464
      %466 = vmatmul.bf16.gmra.mxu0 %v232
      %v467 = vpop.f32.mrf.mxu0
      %v468 = vadd.f32 %v371, %v467
      %v469 = vpop.f32.mrf.mxu0
      %v470 = vadd.f32 %v373, %v469
      %471 = vmatmul.bf16.gmra.mxu0 %v233
      %v472 = vpop.f32.mrf.mxu0
      %v473 = vadd.f32 %v376, %v472
      %v474 = vpop.f32.mrf.mxu0
      %v475 = vadd.f32 %v378, %v474
      %476 = vmatmul.bf16.gmra.mxu0 %v234
      %v477 = vpop.f32.mrf.mxu0
      %v478 = vadd.f32 %v381, %v477
      %v479 = vpop.f32.mrf.mxu0
      %v480 = vadd.f32 %v383, %v479
      %481 = vmatmul.bf16.gmra.mxu0 %v235
      %v482 = vpop.f32.mrf.mxu0
      %v483 = vadd.f32 %v386, %v482
      %v484 = vpop.f32.mrf.mxu0
      %v485 = vadd.f32 %v388, %v484
      %486 = vdwg.mxu0
      %v487 = vld [vmem:[%s211 + $0x2] sm:$0xff]
      %v488 = vld [vmem:[%s211 + $0xa] sm:$0xff]
      %v489 = vld [vmem:[%s211 + $0x1a] sm:$0xff]
      %v490 = vld [vmem:[%s211 + $0x22] sm:$0xff]
      %v491 = vld [vmem:[%s211 + $0x32] sm:$0xff]
      %v492 = vld [vmem:[%s211 + $0x3a] sm:$0xff]
      %v493 = vld [vmem:[%s211 + $0x4a] sm:$0xff]
      %v494 = vld [vmem:[%s211 + $0x52] sm:$0xff]
      %v495 = vld [vmem:[%s211 + $0x62] sm:$0xff]
      %v496 = vld [vmem:[%s211 + $0x6a] sm:$0xff]
      %v497 = vld [vmem:[%s211 + $0x7a] sm:$0xff]
      %v498 = vld [vmem:[%s211 + $0x82] sm:$0xff]
      %v499 = vld [vmem:[%s211 + $0x92] sm:$0xff]
      %v500 = vld [vmem:[%s211 + $0x9a] sm:$0xff]
      %v501 = vld [vmem:[%s211 + $0xaa] sm:$0xff]
      %v502 = vld [vmem:[%s211 + $0xb2] sm:$0xff]
      %v503 = vpack.c.bf16 %v488, %v487
      %v504 = vpack.c.bf16 %v490, %v489
      %v505 = vpack.c.bf16 %v492, %v491
      %v506 = vpack.c.bf16 %v494, %v493
      %v507 = vpack.c.bf16 %v496, %v495
      %v508 = vpack.c.bf16 %v498, %v497
      %v509 = vpack.c.bf16 %v500, %v499
      %v510 = vpack.c.bf16 %v502, %v501
      %s511 = scalar_lea.vmem %s1, 128
      %v512 = vld [vmem:[%s511] sm:$0xf]
      %v513 = vld [vmem:[%s511 + $0x4] sm:$0xf]
      %v514 = vld [vmem:[%s511 + $0x8] sm:$0xf]
      %v515 = vld [vmem:[%s511 + $0xc] sm:$0xf]
      %v516 = vld [vmem:[%s511 + $0x10] sm:$0xf]
      %v517 = vld [vmem:[%s511 + $0x14] sm:$0xf]
      %v518 = vld [vmem:[%s511 + $0x18] sm:$0xf]
      %v519 = vld [vmem:[%s511 + $0x1c] sm:$0xf]
      %v520 = vld [vmem:[%s511 + $0x20] sm:$0xf]
      %v521 = vld [vmem:[%s511 + $0x24] sm:$0xf]
      %v522 = vld [vmem:[%s511 + $0x28] sm:$0xf]
      %v523 = vld [vmem:[%s511 + $0x2c] sm:$0xf]
      %v524 = vld [vmem:[%s511 + $0x30] sm:$0xf]
      %v525 = vld [vmem:[%s511 + $0x34] sm:$0xf]
      %v526 = vld [vmem:[%s511 + $0x38] sm:$0xf]
      %v527 = vld [vmem:[%s511 + $0x3c] sm:$0xf]
      %v544 = vunpack.c.l.b16 %v512
      %v545 = vunpack.c.l.b16 %v513
      %v546 = vunpack.c.l.b16 %v514
      %v547 = vunpack.c.l.b16 %v515
      %v548 = vunpack.c.l.b16 %v516
      %v549 = vunpack.c.l.b16 %v517
      %v550 = vunpack.c.l.b16 %v518
      %v551 = vunpack.c.l.b16 %v519
      %v552 = vunpack.c.l.b16 %v520
      %v553 = vunpack.c.l.b16 %v521
      %v554 = vunpack.c.l.b16 %v522
      %v555 = vunpack.c.l.b16 %v523
      %v556 = vunpack.c.l.b16 %v524
      %v557 = vunpack.c.l.b16 %v525
      %v558 = vunpack.c.l.b16 %v526
      %v559 = vunpack.c.l.b16 %v527
      %v560 = vpack.c.b16 %v545, %v544
      %v561 = vpack.c.b16 %v547, %v546
      %v562 = vpack.c.b16 %v549, %v548
      %v563 = vpack.c.b16 %v551, %v550
      %v564 = vpack.c.b16 %v553, %v552
      %v565 = vpack.c.b16 %v555, %v554
      %v566 = vpack.c.b16 %v557, %v556
      %v567 = vpack.c.b16 %v559, %v558
      %576 = vmatpush.bf16.msra.mxu0 %v567
      %577 = vmatpush.bf16.msra.mxu0 %v566
      %578 = vmatpush.bf16.msra.mxu0 %v565
      %579 = vmatpush.bf16.msra.mxu0 %v564
      %580 = vmatpush.bf16.msra.mxu0 %v563
      %581 = vmatpush.bf16.msra.mxu0 %v562
      %582 = vmatpush.bf16.msra.mxu0 %v561
      %583 = vmatpush.bf16.msra.mxu0 %v560
      %584 = vmatmul.bf16.gmra.mxu0 %v503
      %v585 = vpop.f32.mrf.mxu0
      %v586 = vadd.f32 0.0, %v585
      %v587 = vpop.f32.mrf.mxu0
      %v588 = vadd.f32 0.0, %v587
      %589 = vmatmul.bf16.gmra.mxu0 %v504
      %v590 = vpop.f32.mrf.mxu0
      %v591 = vadd.f32 0.0, %v590
      %v592 = vpop.f32.mrf.mxu0
      %v593 = vadd.f32 0.0, %v592
      %594 = vmatmul.bf16.gmra.mxu0 %v505
      %v595 = vpop.f32.mrf.mxu0
      %v596 = vadd.f32 0.0, %v595
      %v597 = vpop.f32.mrf.mxu0
      %v598 = vadd.f32 0.0, %v597
      %599 = vmatmul.bf16.gmra.mxu0 %v506
      %v600 = vpop.f32.mrf.mxu0
      %v601 = vadd.f32 0.0, %v600
      %v602 = vpop.f32.mrf.mxu0
      %v603 = vadd.f32 0.0, %v602
      %604 = vmatmul.bf16.gmra.mxu0 %v507
      %v605 = vpop.f32.mrf.mxu0
      %v606 = vadd.f32 0.0, %v605
      %v607 = vpop.f32.mrf.mxu0
      %v608 = vadd.f32 0.0, %v607
      %609 = vmatmul.bf16.gmra.mxu0 %v508
      %v610 = vpop.f32.mrf.mxu0
      %v611 = vadd.f32 0.0, %v610
      %v612 = vpop.f32.mrf.mxu0
      %v613 = vadd.f32 0.0, %v612
      %614 = vmatmul.bf16.gmra.mxu0 %v509
      %v615 = vpop.f32.mrf.mxu0
      %v616 = vadd.f32 0.0, %v615
      %v617 = vpop.f32.mrf.mxu0
      %v618 = vadd.f32 0.0, %v617
      %619 = vmatmul.bf16.gmra.mxu0 %v510
      %v620 = vpop.f32.mrf.mxu0
      %v621 = vadd.f32 0.0, %v620
      %v622 = vpop.f32.mrf.mxu0
      %v623 = vadd.f32 0.0, %v622
      %624 = vdwg.mxu0
      %v625 = vadd.f32 %v448, %v586
      %v626 = vadd.f32 %v450, %v588
      %v627 = vadd.f32 %v453, %v591
      %v628 = vadd.f32 %v455, %v593
      %v629 = vadd.f32 %v458, %v596
      %v630 = vadd.f32 %v460, %v598
      %v631 = vadd.f32 %v463, %v601
      %v632 = vadd.f32 %v465, %v603
      %v633 = vadd.f32 %v468, %v606
      %v634 = vadd.f32 %v470, %v608
      %v635 = vadd.f32 %v473, %v611
      %v636 = vadd.f32 %v475, %v613
      %v637 = vadd.f32 %v478, %v616
      %v638 = vadd.f32 %v480, %v618
      %v639 = vadd.f32 %v483, %v621
      %v640 = vadd.f32 %v485, %v623
      %s641 = sadd.s32 %s209, 1
      %s642 = smul.u32 %s641, 24
      %s643 = scalar_lea.vmem [#allocation2], %s642
      %v644 = vld [vmem:[%s643] sm:$0xff]
      %v645 = vld [vmem:[%s643 + $0x8] sm:$0xff]
      %v646 = vld [vmem:[%s643 + $0x18] sm:$0xff]
      %v647 = vld [vmem:[%s643 + $0x20] sm:$0xff]
      %v648 = vld [vmem:[%s643 + $0x30] sm:$0xff]
      %v649 = vld [vmem:[%s643 + $0x38] sm:$0xff]
      %v650 = vld [vmem:[%s643 + $0x48] sm:$0xff]
      %v651 = vld [vmem:[%s643 + $0x50] sm:$0xff]
      %v652 = vld [vmem:[%s643 + $0x60] sm:$0xff]
      %v653 = vld [vmem:[%s643 + $0x68] sm:$0xff]
      %v654 = vld [vmem:[%s643 + $0x78] sm:$0xff]
      %v655 = vld [vmem:[%s643 + $0x80] sm:$0xff]
      %v656 = vld [vmem:[%s643 + $0x90] sm:$0xff]
      %v657 = vld [vmem:[%s643 + $0x98] sm:$0xff]
      %v658 = vld [vmem:[%s643 + $0xa8] sm:$0xff]
      %v659 = vld [vmem:[%s643 + $0xb0] sm:$0xff]
      %v660 = vpack.c.bf16 %v645, %v644
      %v661 = vpack.c.bf16 %v647, %v646
      %v662 = vpack.c.bf16 %v649, %v648
      %v663 = vpack.c.bf16 %v651, %v650
      %v664 = vpack.c.bf16 %v653, %v652
      %v665 = vpack.c.bf16 %v655, %v654
      %v666 = vpack.c.bf16 %v657, %v656
      %v667 = vpack.c.bf16 %v659, %v658
      %s668 = scalar_lea.vmem %s1, 192
      %v669 = vld [vmem:[%s668] sm:$0xf]
      %v670 = vld [vmem:[%s668 + $0x4] sm:$0xf]
      %v671 = vld [vmem:[%s668 + $0x8] sm:$0xf]
      %v672 = vld [vmem:[%s668 + $0xc] sm:$0xf]
      %v673 = vld [vmem:[%s668 + $0x10] sm:$0xf]
      %v674 = vld [vmem:[%s668 + $0x14] sm:$0xf]
      %v675 = vld [vmem:[%s668 + $0x18] sm:$0xf]
      %v676 = vld [vmem:[%s668 + $0x1c] sm:$0xf]
      %v677 = vld [vmem:[%s668 + $0x20] sm:$0xf]
      %v678 = vld [vmem:[%s668 + $0x24] sm:$0xf]
      %v679 = vld [vmem:[%s668 + $0x28] sm:$0xf]
      %v680 = vld [vmem:[%s668 + $0x2c] sm:$0xf]
      %v681 = vld [vmem:[%s668 + $0x30] sm:$0xf]
      %v682 = vld [vmem:[%s668 + $0x34] sm:$0xf]
      %v683 = vld [vmem:[%s668 + $0x38] sm:$0xf]
      %v684 = vld [vmem:[%s668 + $0x3c] sm:$0xf]
      %v701 = vunpack.c.l.b16 %v669
      %v702 = vunpack.c.l.b16 %v670
      %v703 = vunpack.c.l.b16 %v671
      %v704 = vunpack.c.l.b16 %v672
      %v705 = vunpack.c.l.b16 %v673
      %v706 = vunpack.c.l.b16 %v674
      %v707 = vunpack.c.l.b16 %v675
      %v708 = vunpack.c.l.b16 %v676
      %v709 = vunpack.c.l.b16 %v677
      %v710 = vunpack.c.l.b16 %v678
      %v711 = vunpack.c.l.b16 %v679
      %v712 = vunpack.c.l.b16 %v680
      %v713 = vunpack.c.l.b16 %v681
      %v714 = vunpack.c.l.b16 %v682
      %v715 = vunpack.c.l.b16 %v683
      %v716 = vunpack.c.l.b16 %v684
      %v717 = vpack.c.b16 %v702, %v701
      %v718 = vpack.c.b16 %v704, %v703
      %v719 = vpack.c.b16 %v706, %v705
      %v720 = vpack.c.b16 %v708, %v707
      %v721 = vpack.c.b16 %v710, %v709
      %v722 = vpack.c.b16 %v712, %v711
      %v723 = vpack.c.b16 %v714, %v713
      %v724 = vpack.c.b16 %v716, %v715
      %733 = vmatpush.bf16.msra.mxu0 %v724
      %734 = vmatpush.bf16.msra.mxu0 %v723
      %735 = vmatpush.bf16.msra.mxu0 %v722
      %736 = vmatpush.bf16.msra.mxu0 %v721
      %737 = vmatpush.bf16.msra.mxu0 %v720
      %738 = vmatpush.bf16.msra.mxu0 %v719
      %739 = vmatpush.bf16.msra.mxu0 %v718
      %740 = vmatpush.bf16.msra.mxu0 %v717
      %741 = vmatmul.bf16.gmra.mxu0 %v660
      %v742 = vpop.f32.mrf.mxu0
      %v743 = vadd.f32 0.0, %v742
      %v744 = vpop.f32.mrf.mxu0
      %v745 = vadd.f32 0.0, %v744
      %746 = vmatmul.bf16.gmra.mxu0 %v661
      %v747 = vpop.f32.mrf.mxu0
      %v748 = vadd.f32 0.0, %v747
      %v749 = vpop.f32.mrf.mxu0
      %v750 = vadd.f32 0.0, %v749
      %751 = vmatmul.bf16.gmra.mxu0 %v662
      %v752 = vpop.f32.mrf.mxu0
      %v753 = vadd.f32 0.0, %v752
      %v754 = vpop.f32.mrf.mxu0
      %v755 = vadd.f32 0.0, %v754
      %756 = vmatmul.bf16.gmra.mxu0 %v663
      %v757 = vpop.f32.mrf.mxu0
      %v758 = vadd.f32 0.0, %v757
      %v759 = vpop.f32.mrf.mxu0
      %v760 = vadd.f32 0.0, %v759
      %761 = vmatmul.bf16.gmra.mxu0 %v664
      %v762 = vpop.f32.mrf.mxu0
      %v763 = vadd.f32 0.0, %v762
      %v764 = vpop.f32.mrf.mxu0
      %v765 = vadd.f32 0.0, %v764
      %766 = vmatmul.bf16.gmra.mxu0 %v665
      %v767 = vpop.f32.mrf.mxu0
      %v768 = vadd.f32 0.0, %v767
      %v769 = vpop.f32.mrf.mxu0
      %v770 = vadd.f32 0.0, %v769
      %771 = vmatmul.bf16.gmra.mxu0 %v666
      %v772 = vpop.f32.mrf.mxu0
      %v773 = vadd.f32 0.0, %v772
      %v774 = vpop.f32.mrf.mxu0
      %v775 = vadd.f32 0.0, %v774
      %776 = vmatmul.bf16.gmra.mxu0 %v667
      %v777 = vpop.f32.mrf.mxu0
      %v778 = vadd.f32 0.0, %v777
      %v779 = vpop.f32.mrf.mxu0
      %v780 = vadd.f32 0.0, %v779
      %781 = vdwg.mxu0
      %v782 = vadd.f32 %v625, %v743
      %v783 = vadd.f32 %v626, %v745
      %v784 = vadd.f32 %v627, %v748
      %v785 = vadd.f32 %v628, %v750
      %v786 = vadd.f32 %v629, %v753
      %v787 = vadd.f32 %v630, %v755
      %v788 = vadd.f32 %v631, %v758
      %v789 = vadd.f32 %v632, %v760
      %v790 = vadd.f32 %v633, %v763
      %v791 = vadd.f32 %v634, %v765
      %v792 = vadd.f32 %v635, %v768
      %v793 = vadd.f32 %v636, %v770
      %v794 = vadd.f32 %v637, %v773
      %v795 = vadd.f32 %v638, %v775
      %v796 = vadd.f32 %v639, %v778
      %v797 = vadd.f32 %v640, %v780
      %v798 = vld [vmem:[%s643 + $0x1] sm:$0xff]
      %v799 = vld [vmem:[%s643 + $0x9] sm:$0xff]
      %v800 = vld [vmem:[%s643 + $0x19] sm:$0xff]
      %v801 = vld [vmem:[%s643 + $0x21] sm:$0xff]
      %v802 = vld [vmem:[%s643 + $0x31] sm:$0xff]
      %v803 = vld [vmem:[%s643 + $0x39] sm:$0xff]
      %v804 = vld [vmem:[%s643 + $0x49] sm:$0xff]
      %v805 = vld [vmem:[%s643 + $0x51] sm:$0xff]
      %v806 = vld [vmem:[%s643 + $0x61] sm:$0xff]
      %v807 = vld [vmem:[%s643 + $0x69] sm:$0xff]
      %v808 = vld [vmem:[%s643 + $0x79] sm:$0xff]
      %v809 = vld [vmem:[%s643 + $0x81] sm:$0xff]
      %v810 = vld [vmem:[%s643 + $0x91] sm:$0xff]
      %v811 = vld [vmem:[%s643 + $0x99] sm:$0xff]
      %v812 = vld [vmem:[%s643 + $0xa9] sm:$0xff]
      %v813 = vld [vmem:[%s643 + $0xb1] sm:$0xff]
      %v814 = vpack.c.bf16 %v799, %v798
      %v815 = vpack.c.bf16 %v801, %v800
      %v816 = vpack.c.bf16 %v803, %v802
      %v817 = vpack.c.bf16 %v805, %v804
      %v818 = vpack.c.bf16 %v807, %v806
      %v819 = vpack.c.bf16 %v809, %v808
      %v820 = vpack.c.bf16 %v811, %v810
      %v821 = vpack.c.bf16 %v813, %v812
      %s822 = scalar_lea.vmem %s1, 256
      %v823 = vld [vmem:[%s822] sm:$0xf]
      %v824 = vld [vmem:[%s822 + $0x4] sm:$0xf]
      %v825 = vld [vmem:[%s822 + $0x8] sm:$0xf]
      %v826 = vld [vmem:[%s822 + $0xc] sm:$0xf]
      %v827 = vld [vmem:[%s822 + $0x10] sm:$0xf]
      %v828 = vld [vmem:[%s822 + $0x14] sm:$0xf]
      %v829 = vld [vmem:[%s822 + $0x18] sm:$0xf]
      %v830 = vld [vmem:[%s822 + $0x1c] sm:$0xf]
      %v831 = vld [vmem:[%s822 + $0x20] sm:$0xf]
      %v832 = vld [vmem:[%s822 + $0x24] sm:$0xf]
      %v833 = vld [vmem:[%s822 + $0x28] sm:$0xf]
      %v834 = vld [vmem:[%s822 + $0x2c] sm:$0xf]
      %v835 = vld [vmem:[%s822 + $0x30] sm:$0xf]
      %v836 = vld [vmem:[%s822 + $0x34] sm:$0xf]
      %v837 = vld [vmem:[%s822 + $0x38] sm:$0xf]
      %v838 = vld [vmem:[%s822 + $0x3c] sm:$0xf]
      %v855 = vunpack.c.l.b16 %v823
      %v856 = vunpack.c.l.b16 %v824
      %v857 = vunpack.c.l.b16 %v825
      %v858 = vunpack.c.l.b16 %v826
      %v859 = vunpack.c.l.b16 %v827
      %v860 = vunpack.c.l.b16 %v828
      %v861 = vunpack.c.l.b16 %v829
      %v862 = vunpack.c.l.b16 %v830
      %v863 = vunpack.c.l.b16 %v831
      %v864 = vunpack.c.l.b16 %v832
      %v865 = vunpack.c.l.b16 %v833
      %v866 = vunpack.c.l.b16 %v834
      %v867 = vunpack.c.l.b16 %v835
      %v868 = vunpack.c.l.b16 %v836
      %v869 = vunpack.c.l.b16 %v837
      %v870 = vunpack.c.l.b16 %v838
      %v871 = vpack.c.b16 %v856, %v855
      %v872 = vpack.c.b16 %v858, %v857
      %v873 = vpack.c.b16 %v860, %v859
      %v874 = vpack.c.b16 %v862, %v861
      %v875 = vpack.c.b16 %v864, %v863
      %v876 = vpack.c.b16 %v866, %v865
      %v877 = vpack.c.b16 %v868, %v867
      %v878 = vpack.c.b16 %v870, %v869
      %887 = vmatpush.bf16.msra.mxu0 %v878
      %888 = vmatpush.bf16.msra.mxu0 %v877
      %889 = vmatpush.bf16.msra.mxu0 %v876
      %890 = vmatpush.bf16.msra.mxu0 %v875
      %891 = vmatpush.bf16.msra.mxu0 %v874
      %892 = vmatpush.bf16.msra.mxu0 %v873
      %893 = vmatpush.bf16.msra.mxu0 %v872
      %894 = vmatpush.bf16.msra.mxu0 %v871
      %895 = vmatmul.bf16.gmra.mxu0 %v814
      %v896 = vpop.f32.mrf.mxu0
      %v897 = vadd.f32 0.0, %v896
      %v898 = vpop.f32.mrf.mxu0
      %v899 = vadd.f32 0.0, %v898
      %900 = vmatmul.bf16.gmra.mxu0 %v815
      %v901 = vpop.f32.mrf.mxu0
      %v902 = vadd.f32 0.0, %v901
      %v903 = vpop.f32.mrf.mxu0
      %v904 = vadd.f32 0.0, %v903
      %905 = vmatmul.bf16.gmra.mxu0 %v816
      %v906 = vpop.f32.mrf.mxu0
      %v907 = vadd.f32 0.0, %v906
      %v908 = vpop.f32.mrf.mxu0
      %v909 = vadd.f32 0.0, %v908
      %910 = vmatmul.bf16.gmra.mxu0 %v817
      %v911 = vpop.f32.mrf.mxu0
      %v912 = vadd.f32 0.0, %v911
      %v913 = vpop.f32.mrf.mxu0
      %v914 = vadd.f32 0.0, %v913
      %915 = vmatmul.bf16.gmra.mxu0 %v818
      %v916 = vpop.f32.mrf.mxu0
      %v917 = vadd.f32 0.0, %v916
      %v918 = vpop.f32.mrf.mxu0
      %v919 = vadd.f32 0.0, %v918
      %920 = vmatmul.bf16.gmra.mxu0 %v819
      %v921 = vpop.f32.mrf.mxu0
      %v922 = vadd.f32 0.0, %v921
      %v923 = vpop.f32.mrf.mxu0
      %v924 = vadd.f32 0.0, %v923
      %925 = vmatmul.bf16.gmra.mxu0 %v820
      %v926 = vpop.f32.mrf.mxu0
      %v927 = vadd.f32 0.0, %v926
      %v928 = vpop.f32.mrf.mxu0
      %v929 = vadd.f32 0.0, %v928
      %930 = vmatmul.bf16.gmra.mxu0 %v821
      %v931 = vpop.f32.mrf.mxu0
      %v932 = vadd.f32 0.0, %v931
      %v933 = vpop.f32.mrf.mxu0
      %v934 = vadd.f32 0.0, %v933
      %935 = vdwg.mxu0
      %v936 = vadd.f32 %v782, %v897
      %v937 = vadd.f32 %v783, %v899
      %v938 = vadd.f32 %v784, %v902
      %v939 = vadd.f32 %v785, %v904
      %v940 = vadd.f32 %v786, %v907
      %v941 = vadd.f32 %v787, %v909
      %v942 = vadd.f32 %v788, %v912
      %v943 = vadd.f32 %v789, %v914
      %v944 = vadd.f32 %v790, %v917
      %v945 = vadd.f32 %v791, %v919
      %v946 = vadd.f32 %v792, %v922
      %v947 = vadd.f32 %v793, %v924
      %v948 = vadd.f32 %v794, %v927
      %v949 = vadd.f32 %v795, %v929
      %v950 = vadd.f32 %v796, %v932
      %v951 = vadd.f32 %v797, %v934
      %v952 = vld [vmem:[%s643 + $0x2] sm:$0xff]
      %v953 = vld [vmem:[%s643 + $0xa] sm:$0xff]
      %v954 = vld [vmem:[%s643 + $0x1a] sm:$0xff]
      %v955 = vld [vmem:[%s643 + $0x22] sm:$0xff]
      %v956 = vld [vmem:[%s643 + $0x32] sm:$0xff]
      %v957 = vld [vmem:[%s643 + $0x3a] sm:$0xff]
      %v958 = vld [vmem:[%s643 + $0x4a] sm:$0xff]
      %v959 = vld [vmem:[%s643 + $0x52] sm:$0xff]
      %v960 = vld [vmem:[%s643 + $0x62] sm:$0xff]
      %v961 = vld [vmem:[%s643 + $0x6a] sm:$0xff]
      %v962 = vld [vmem:[%s643 + $0x7a] sm:$0xff]
      %v963 = vld [vmem:[%s643 + $0x82] sm:$0xff]
      %v964 = vld [vmem:[%s643 + $0x92] sm:$0xff]
      %v965 = vld [vmem:[%s643 + $0x9a] sm:$0xff]
      %v966 = vld [vmem:[%s643 + $0xaa] sm:$0xff]
      %v967 = vld [vmem:[%s643 + $0xb2] sm:$0xff]
      %v968 = vpack.c.bf16 %v953, %v952
      %v969 = vpack.c.bf16 %v955, %v954
      %v970 = vpack.c.bf16 %v957, %v956
      %v971 = vpack.c.bf16 %v959, %v958
      %v972 = vpack.c.bf16 %v961, %v960
      %v973 = vpack.c.bf16 %v963, %v962
      %v974 = vpack.c.bf16 %v965, %v964
      %v975 = vpack.c.bf16 %v967, %v966
      %s976 = scalar_lea.vmem %s1, 320
      %v977 = vld [vmem:[%s976] sm:$0xf]
      %v978 = vld [vmem:[%s976 + $0x4] sm:$0xf]
      %v979 = vld [vmem:[%s976 + $0x8] sm:$0xf]
      %v980 = vld [vmem:[%s976 + $0xc] sm:$0xf]
      %v981 = vld [vmem:[%s976 + $0x10] sm:$0xf]
      %v982 = vld [vmem:[%s976 + $0x14] sm:$0xf]
      %v983 = vld [vmem:[%s976 + $0x18] sm:$0xf]
      %v984 = vld [vmem:[%s976 + $0x1c] sm:$0xf]
      %v985 = vld [vmem:[%s976 + $0x20] sm:$0xf]
      %v986 = vld [vmem:[%s976 + $0x24] sm:$0xf]
      %v987 = vld [vmem:[%s976 + $0x28] sm:$0xf]
      %v988 = vld [vmem:[%s976 + $0x2c] sm:$0xf]
      %v989 = vld [vmem:[%s976 + $0x30] sm:$0xf]
      %v990 = vld [vmem:[%s976 + $0x34] sm:$0xf]
      %v991 = vld [vmem:[%s976 + $0x38] sm:$0xf]
      %v992 = vld [vmem:[%s976 + $0x3c] sm:$0xf]
      %v1009 = vunpack.c.l.b16 %v977
      %v1010 = vunpack.c.l.b16 %v978
      %v1011 = vunpack.c.l.b16 %v979
      %v1012 = vunpack.c.l.b16 %v980
      %v1013 = vunpack.c.l.b16 %v981
      %v1014 = vunpack.c.l.b16 %v982
      %v1015 = vunpack.c.l.b16 %v983
      %v1016 = vunpack.c.l.b16 %v984
      %v1017 = vunpack.c.l.b16 %v985
      %v1018 = vunpack.c.l.b16 %v986
      %v1019 = vunpack.c.l.b16 %v987
      %v1020 = vunpack.c.l.b16 %v988
      %v1021 = vunpack.c.l.b16 %v989
      %v1022 = vunpack.c.l.b16 %v990
      %v1023 = vunpack.c.l.b16 %v991
      %v1024 = vunpack.c.l.b16 %v992
      %v1025 = vpack.c.b16 %v1010, %v1009
      %v1026 = vpack.c.b16 %v1012, %v1011
      %v1027 = vpack.c.b16 %v1014, %v1013
      %v1028 = vpack.c.b16 %v1016, %v1015
      %v1029 = vpack.c.b16 %v1018, %v1017
      %v1030 = vpack.c.b16 %v1020, %v1019
      %v1031 = vpack.c.b16 %v1022, %v1021
      %v1032 = vpack.c.b16 %v1024, %v1023
      %1041 = vmatpush.bf16.msra.mxu0 %v1032
      %1042 = vmatpush.bf16.msra.mxu0 %v1031
      %1043 = vmatpush.bf16.msra.mxu0 %v1030
      %1044 = vmatpush.bf16.msra.mxu0 %v1029
      %1045 = vmatpush.bf16.msra.mxu0 %v1028
      %1046 = vmatpush.bf16.msra.mxu0 %v1027
      %1047 = vmatpush.bf16.msra.mxu0 %v1026
      %1048 = vmatpush.bf16.msra.mxu0 %v1025
      %1049 = vmatmul.bf16.gmra.mxu0 %v968
      %v1050 = vpop.f32.mrf.mxu0
      %v1051 = vadd.f32 0.0, %v1050
      %v1052 = vpop.f32.mrf.mxu0
      %v1053 = vadd.f32 0.0, %v1052
      %1054 = vmatmul.bf16.gmra.mxu0 %v969
      %v1055 = vpop.f32.mrf.mxu0
      %v1056 = vadd.f32 0.0, %v1055
      %v1057 = vpop.f32.mrf.mxu0
      %v1058 = vadd.f32 0.0, %v1057
      %1059 = vmatmul.bf16.gmra.mxu0 %v970
      %v1060 = vpop.f32.mrf.mxu0
      %v1061 = vadd.f32 0.0, %v1060
      %v1062 = vpop.f32.mrf.mxu0
      %v1063 = vadd.f32 0.0, %v1062
      %1064 = vmatmul.bf16.gmra.mxu0 %v971
      %v1065 = vpop.f32.mrf.mxu0
      %v1066 = vadd.f32 0.0, %v1065
      %v1067 = vpop.f32.mrf.mxu0
      %v1068 = vadd.f32 0.0, %v1067
      %1069 = vmatmul.bf16.gmra.mxu0 %v972
      %v1070 = vpop.f32.mrf.mxu0
      %v1071 = vadd.f32 0.0, %v1070
      %v1072 = vpop.f32.mrf.mxu0
      %v1073 = vadd.f32 0.0, %v1072
      %1074 = vmatmul.bf16.gmra.mxu0 %v973
      %v1075 = vpop.f32.mrf.mxu0
      %v1076 = vadd.f32 0.0, %v1075
      %v1077 = vpop.f32.mrf.mxu0
      %v1078 = vadd.f32 0.0, %v1077
      %1079 = vmatmul.bf16.gmra.mxu0 %v974
      %v1080 = vpop.f32.mrf.mxu0
      %v1081 = vadd.f32 0.0, %v1080
      %v1082 = vpop.f32.mrf.mxu0
      %v1083 = vadd.f32 0.0, %v1082
      %1084 = vmatmul.bf16.gmra.mxu0 %v975
      %v1085 = vpop.f32.mrf.mxu0
      %v1086 = vadd.f32 0.0, %v1085
      %v1087 = vpop.f32.mrf.mxu0
      %v1088 = vadd.f32 0.0, %v1087
      %1089 = vdwg.mxu0
      %v1090 = vadd.f32 %v936, %v1051
      %v1091 = vadd.f32 %v937, %v1053
      %v1092 = vadd.f32 %v938, %v1056
      %v1093 = vadd.f32 %v939, %v1058
      %v1094 = vadd.f32 %v940, %v1061
      %v1095 = vadd.f32 %v941, %v1063
      %v1096 = vadd.f32 %v942, %v1066
      %v1097 = vadd.f32 %v943, %v1068
      %v1098 = vadd.f32 %v944, %v1071
      %v1099 = vadd.f32 %v945, %v1073
      %v1100 = vadd.f32 %v946, %v1076
      %v1101 = vadd.f32 %v947, %v1078
      %v1102 = vadd.f32 %v948, %v1081
      %v1103 = vadd.f32 %v949, %v1083
      %v1104 = vadd.f32 %v950, %v1086
      %v1105 = vadd.f32 %v951, %v1088
      %s1106 = sadd.s32 %s209, 2
      %s1107 = smul.u32 %s1106, 24
      %s1108 = scalar_lea.vmem [#allocation2], %s1107
      %v1109 = vld [vmem:[%s1108] sm:$0xff]
      %v1110 = vld [vmem:[%s1108 + $0x8] sm:$0xff]
      %v1111 = vld [vmem:[%s1108 + $0x18] sm:$0xff]
      %v1112 = vld [vmem:[%s1108 + $0x20] sm:$0xff]
      %v1113 = vld [vmem:[%s1108 + $0x30] sm:$0xff]
      %v1114 = vld [vmem:[%s1108 + $0x38] sm:$0xff]
      %v1115 = vld [vmem:[%s1108 + $0x48] sm:$0xff]
      %v1116 = vld [vmem:[%s1108 + $0x50] sm:$0xff]
      %v1117 = vld [vmem:[%s1108 + $0x60] sm:$0xff]
      %v1118 = vld [vmem:[%s1108 + $0x68] sm:$0xff]
      %v1119 = vld [vmem:[%s1108 + $0x78] sm:$0xff]
      %v1120 = vld [vmem:[%s1108 + $0x80] sm:$0xff]
      %v1121 = vld [vmem:[%s1108 + $0x90] sm:$0xff]
      %v1122 = vld [vmem:[%s1108 + $0x98] sm:$0xff]
      %v1123 = vld [vmem:[%s1108 + $0xa8] sm:$0xff]
      %v1124 = vld [vmem:[%s1108 + $0xb0] sm:$0xff]
      %v1125 = vpack.c.bf16 %v1110, %v1109
      %v1126 = vpack.c.bf16 %v1112, %v1111
      %v1127 = vpack.c.bf16 %v1114, %v1113
      %v1128 = vpack.c.bf16 %v1116, %v1115
      %v1129 = vpack.c.bf16 %v1118, %v1117
      %v1130 = vpack.c.bf16 %v1120, %v1119
      %v1131 = vpack.c.bf16 %v1122, %v1121
      %v1132 = vpack.c.bf16 %v1124, %v1123
      %s1133 = scalar_lea.vmem %s1, 384
      %v1134 = vld [vmem:[%s1133] sm:$0xf]
      %v1135 = vld [vmem:[%s1133 + $0x4] sm:$0xf]
      %v1136 = vld [vmem:[%s1133 + $0x8] sm:$0xf]
      %v1137 = vld [vmem:[%s1133 + $0xc] sm:$0xf]
      %v1138 = vld [vmem:[%s1133 + $0x10] sm:$0xf]
      %v1139 = vld [vmem:[%s1133 + $0x14] sm:$0xf]
      %v1140 = vld [vmem:[%s1133 + $0x18] sm:$0xf]
      %v1141 = vld [vmem:[%s1133 + $0x1c] sm:$0xf]
      %v1142 = vld [vmem:[%s1133 + $0x20] sm:$0xf]
      %v1143 = vld [vmem:[%s1133 + $0x24] sm:$0xf]
      %v1144 = vld [vmem:[%s1133 + $0x28] sm:$0xf]
      %v1145 = vld [vmem:[%s1133 + $0x2c] sm:$0xf]
      %v1146 = vld [vmem:[%s1133 + $0x30] sm:$0xf]
      %v1147 = vld [vmem:[%s1133 + $0x34] sm:$0xf]
      %v1148 = vld [vmem:[%s1133 + $0x38] sm:$0xf]
      %v1149 = vld [vmem:[%s1133 + $0x3c] sm:$0xf]
      %v1166 = vunpack.c.l.b16 %v1134
      %v1167 = vunpack.c.l.b16 %v1135
      %v1168 = vunpack.c.l.b16 %v1136
      %v1169 = vunpack.c.l.b16 %v1137
      %v1170 = vunpack.c.l.b16 %v1138
      %v1171 = vunpack.c.l.b16 %v1139
      %v1172 = vunpack.c.l.b16 %v1140
      %v1173 = vunpack.c.l.b16 %v1141
      %v1174 = vunpack.c.l.b16 %v1142
      %v1175 = vunpack.c.l.b16 %v1143
      %v1176 = vunpack.c.l.b16 %v1144
      %v1177 = vunpack.c.l.b16 %v1145
      %v1178 = vunpack.c.l.b16 %v1146
      %v1179 = vunpack.c.l.b16 %v1147
      %v1180 = vunpack.c.l.b16 %v1148
      %v1181 = vunpack.c.l.b16 %v1149
      %v1182 = vpack.c.b16 %v1167, %v1166
      %v1183 = vpack.c.b16 %v1169, %v1168
      %v1184 = vpack.c.b16 %v1171, %v1170
      %v1185 = vpack.c.b16 %v1173, %v1172
      %v1186 = vpack.c.b16 %v1175, %v1174
      %v1187 = vpack.c.b16 %v1177, %v1176
      %v1188 = vpack.c.b16 %v1179, %v1178
      %v1189 = vpack.c.b16 %v1181, %v1180
      %1198 = vmatpush.bf16.msra.mxu0 %v1189
      %1199 = vmatpush.bf16.msra.mxu0 %v1188
      %1200 = vmatpush.bf16.msra.mxu0 %v1187
      %1201 = vmatpush.bf16.msra.mxu0 %v1186
      %1202 = vmatpush.bf16.msra.mxu0 %v1185
      %1203 = vmatpush.bf16.msra.mxu0 %v1184
      %1204 = vmatpush.bf16.msra.mxu0 %v1183
      %1205 = vmatpush.bf16.msra.mxu0 %v1182
      %1206 = vmatmul.bf16.gmra.mxu0 %v1125
      %v1207 = vpop.f32.mrf.mxu0
      %v1208 = vadd.f32 0.0, %v1207
      %v1209 = vpop.f32.mrf.mxu0
      %v1210 = vadd.f32 0.0, %v1209
      %1211 = vmatmul.bf16.gmra.mxu0 %v1126
      %v1212 = vpop.f32.mrf.mxu0
      %v1213 = vadd.f32 0.0, %v1212
      %v1214 = vpop.f32.mrf.mxu0
      %v1215 = vadd.f32 0.0, %v1214
      %1216 = vmatmul.bf16.gmra.mxu0 %v1127
      %v1217 = vpop.f32.mrf.mxu0
      %v1218 = vadd.f32 0.0, %v1217
      %v1219 = vpop.f32.mrf.mxu0
      %v1220 = vadd.f32 0.0, %v1219
      %1221 = vmatmul.bf16.gmra.mxu0 %v1128
      %v1222 = vpop.f32.mrf.mxu0
      %v1223 = vadd.f32 0.0, %v1222
      %v1224 = vpop.f32.mrf.mxu0
      %v1225 = vadd.f32 0.0, %v1224
      %1226 = vmatmul.bf16.gmra.mxu0 %v1129
      %v1227 = vpop.f32.mrf.mxu0
      %v1228 = vadd.f32 0.0, %v1227
      %v1229 = vpop.f32.mrf.mxu0
      %v1230 = vadd.f32 0.0, %v1229
      %1231 = vmatmul.bf16.gmra.mxu0 %v1130
      %v1232 = vpop.f32.mrf.mxu0
      %v1233 = vadd.f32 0.0, %v1232
      %v1234 = vpop.f32.mrf.mxu0
      %v1235 = vadd.f32 0.0, %v1234
      %1236 = vmatmul.bf16.gmra.mxu0 %v1131
      %v1237 = vpop.f32.mrf.mxu0
      %v1238 = vadd.f32 0.0, %v1237
      %v1239 = vpop.f32.mrf.mxu0
      %v1240 = vadd.f32 0.0, %v1239
      %1241 = vmatmul.bf16.gmra.mxu0 %v1132
      %v1242 = vpop.f32.mrf.mxu0
      %v1243 = vadd.f32 0.0, %v1242
      %v1244 = vpop.f32.mrf.mxu0
      %v1245 = vadd.f32 0.0, %v1244
      %1246 = vdwg.mxu0
      %v1247 = vadd.f32 %v1090, %v1208
      %v1248 = vadd.f32 %v1091, %v1210
      %v1249 = vadd.f32 %v1092, %v1213
      %v1250 = vadd.f32 %v1093, %v1215
      %v1251 = vadd.f32 %v1094, %v1218
      %v1252 = vadd.f32 %v1095, %v1220
      %v1253 = vadd.f32 %v1096, %v1223
      %v1254 = vadd.f32 %v1097, %v1225
      %v1255 = vadd.f32 %v1098, %v1228
      %v1256 = vadd.f32 %v1099, %v1230
      %v1257 = vadd.f32 %v1100, %v1233
      %v1258 = vadd.f32 %v1101, %v1235
      %v1259 = vadd.f32 %v1102, %v1238
      %v1260 = vadd.f32 %v1103, %v1240
      %v1261 = vadd.f32 %v1104, %v1243
      %v1262 = vadd.f32 %v1105, %v1245
      %v1263 = vld [vmem:[%s1108 + $0x1] sm:$0xff]
      %v1264 = vld [vmem:[%s1108 + $0x9] sm:$0xff]
      %v1265 = vld [vmem:[%s1108 + $0x19] sm:$0xff]
      %v1266 = vld [vmem:[%s1108 + $0x21] sm:$0xff]
      %v1267 = vld [vmem:[%s1108 + $0x31] sm:$0xff]
      %v1268 = vld [vmem:[%s1108 + $0x39] sm:$0xff]
      %v1269 = vld [vmem:[%s1108 + $0x49] sm:$0xff]
      %v1270 = vld [vmem:[%s1108 + $0x51] sm:$0xff]
      %v1271 = vld [vmem:[%s1108 + $0x61] sm:$0xff]
      %v1272 = vld [vmem:[%s1108 + $0x69] sm:$0xff]
      %v1273 = vld [vmem:[%s1108 + $0x79] sm:$0xff]
      %v1274 = vld [vmem:[%s1108 + $0x81] sm:$0xff]
      %v1275 = vld [vmem:[%s1108 + $0x91] sm:$0xff]
      %v1276 = vld [vmem:[%s1108 + $0x99] sm:$0xff]
      %v1277 = vld [vmem:[%s1108 + $0xa9] sm:$0xff]
      %v1278 = vld [vmem:[%s1108 + $0xb1] sm:$0xff]
      %v1279 = vpack.c.bf16 %v1264, %v1263
      %v1280 = vpack.c.bf16 %v1266, %v1265
      %v1281 = vpack.c.bf16 %v1268, %v1267
      %v1282 = vpack.c.bf16 %v1270, %v1269
      %v1283 = vpack.c.bf16 %v1272, %v1271
      %v1284 = vpack.c.bf16 %v1274, %v1273
      %v1285 = vpack.c.bf16 %v1276, %v1275
      %v1286 = vpack.c.bf16 %v1278, %v1277
      %s1287 = scalar_lea.vmem %s1, 448
      %v1288 = vld [vmem:[%s1287] sm:$0xf]
      %v1289 = vld [vmem:[%s1287 + $0x4] sm:$0xf]
      %v1290 = vld [vmem:[%s1287 + $0x8] sm:$0xf]
      %v1291 = vld [vmem:[%s1287 + $0xc] sm:$0xf]
      %v1292 = vld [vmem:[%s1287 + $0x10] sm:$0xf]
      %v1293 = vld [vmem:[%s1287 + $0x14] sm:$0xf]
      %v1294 = vld [vmem:[%s1287 + $0x18] sm:$0xf]
      %v1295 = vld [vmem:[%s1287 + $0x1c] sm:$0xf]
      %v1296 = vld [vmem:[%s1287 + $0x20] sm:$0xf]
      %v1297 = vld [vmem:[%s1287 + $0x24] sm:$0xf]
      %v1298 = vld [vmem:[%s1287 + $0x28] sm:$0xf]
      %v1299 = vld [vmem:[%s1287 + $0x2c] sm:$0xf]
      %v1300 = vld [vmem:[%s1287 + $0x30] sm:$0xf]
      %v1301 = vld [vmem:[%s1287 + $0x34] sm:$0xf]
      %v1302 = vld [vmem:[%s1287 + $0x38] sm:$0xf]
      %v1303 = vld [vmem:[%s1287 + $0x3c] sm:$0xf]
      %v1320 = vunpack.c.l.b16 %v1288
      %v1321 = vunpack.c.l.b16 %v1289
      %v1322 = vunpack.c.l.b16 %v1290
      %v1323 = vunpack.c.l.b16 %v1291
      %v1324 = vunpack.c.l.b16 %v1292
      %v1325 = vunpack.c.l.b16 %v1293
      %v1326 = vunpack.c.l.b16 %v1294
      %v1327 = vunpack.c.l.b16 %v1295
      %v1328 = vunpack.c.l.b16 %v1296
      %v1329 = vunpack.c.l.b16 %v1297
      %v1330 = vunpack.c.l.b16 %v1298
      %v1331 = vunpack.c.l.b16 %v1299
      %v1332 = vunpack.c.l.b16 %v1300
      %v1333 = vunpack.c.l.b16 %v1301
      %v1334 = vunpack.c.l.b16 %v1302
      %v1335 = vunpack.c.l.b16 %v1303
      %v1336 = vpack.c.b16 %v1321, %v1320
      %v1337 = vpack.c.b16 %v1323, %v1322
      %v1338 = vpack.c.b16 %v1325, %v1324
      %v1339 = vpack.c.b16 %v1327, %v1326
      %v1340 = vpack.c.b16 %v1329, %v1328
      %v1341 = vpack.c.b16 %v1331, %v1330
      %v1342 = vpack.c.b16 %v1333, %v1332
      %v1343 = vpack.c.b16 %v1335, %v1334
      %1352 = vmatpush.bf16.msra.mxu0 %v1343
      %1353 = vmatpush.bf16.msra.mxu0 %v1342
      %1354 = vmatpush.bf16.msra.mxu0 %v1341
      %1355 = vmatpush.bf16.msra.mxu0 %v1340
      %1356 = vmatpush.bf16.msra.mxu0 %v1339
      %1357 = vmatpush.bf16.msra.mxu0 %v1338
      %1358 = vmatpush.bf16.msra.mxu0 %v1337
      %1359 = vmatpush.bf16.msra.mxu0 %v1336
      %1360 = vmatmul.bf16.gmra.mxu0 %v1279
      %v1361 = vpop.f32.mrf.mxu0
      %v1362 = vadd.f32 0.0, %v1361
      %v1363 = vpop.f32.mrf.mxu0
      %v1364 = vadd.f32 0.0, %v1363
      %1365 = vmatmul.bf16.gmra.mxu0 %v1280
      %v1366 = vpop.f32.mrf.mxu0
      %v1367 = vadd.f32 0.0, %v1366
      %v1368 = vpop.f32.mrf.mxu0
      %v1369 = vadd.f32 0.0, %v1368
      %1370 = vmatmul.bf16.gmra.mxu0 %v1281
      %v1371 = vpop.f32.mrf.mxu0
      %v1372 = vadd.f32 0.0, %v1371
      %v1373 = vpop.f32.mrf.mxu0
      %v1374 = vadd.f32 0.0, %v1373
      %1375 = vmatmul.bf16.gmra.mxu0 %v1282
      %v1376 = vpop.f32.mrf.mxu0
      %v1377 = vadd.f32 0.0, %v1376
      %v1378 = vpop.f32.mrf.mxu0
      %v1379 = vadd.f32 0.0, %v1378
      %1380 = vmatmul.bf16.gmra.mxu0 %v1283
      %v1381 = vpop.f32.mrf.mxu0
      %v1382 = vadd.f32 0.0, %v1381
      %v1383 = vpop.f32.mrf.mxu0
      %v1384 = vadd.f32 0.0, %v1383
      %1385 = vmatmul.bf16.gmra.mxu0 %v1284
      %v1386 = vpop.f32.mrf.mxu0
      %v1387 = vadd.f32 0.0, %v1386
      %v1388 = vpop.f32.mrf.mxu0
      %v1389 = vadd.f32 0.0, %v1388
      %1390 = vmatmul.bf16.gmra.mxu0 %v1285
      %v1391 = vpop.f32.mrf.mxu0
      %v1392 = vadd.f32 0.0, %v1391
      %v1393 = vpop.f32.mrf.mxu0
      %v1394 = vadd.f32 0.0, %v1393
      %1395 = vmatmul.bf16.gmra.mxu0 %v1286
      %v1396 = vpop.f32.mrf.mxu0
      %v1397 = vadd.f32 0.0, %v1396
      %v1398 = vpop.f32.mrf.mxu0
      %v1399 = vadd.f32 0.0, %v1398
      %1400 = vdwg.mxu0
      %v1401 = vadd.f32 %v1247, %v1362
      %v1402 = vadd.f32 %v1248, %v1364
      %v1403 = vadd.f32 %v1249, %v1367
      %v1404 = vadd.f32 %v1250, %v1369
      %v1405 = vadd.f32 %v1251, %v1372
      %v1406 = vadd.f32 %v1252, %v1374
      %v1407 = vadd.f32 %v1253, %v1377
      %v1408 = vadd.f32 %v1254, %v1379
      %v1409 = vadd.f32 %v1255, %v1382
      %v1410 = vadd.f32 %v1256, %v1384
      %v1411 = vadd.f32 %v1257, %v1387
      %v1412 = vadd.f32 %v1258, %v1389
      %v1413 = vadd.f32 %v1259, %v1392
      %v1414 = vadd.f32 %v1260, %v1394
      %v1415 = vadd.f32 %v1261, %v1397
      %v1416 = vadd.f32 %v1262, %v1399
      %v1417 = vld [vmem:[%s1108 + $0x2] sm:$0xff]
      %v1418 = vld [vmem:[%s1108 + $0xa] sm:$0xff]
      %v1419 = vld [vmem:[%s1108 + $0x1a] sm:$0xff]
      %v1420 = vld [vmem:[%s1108 + $0x22] sm:$0xff]
      %v1421 = vld [vmem:[%s1108 + $0x32] sm:$0xff]
      %v1422 = vld [vmem:[%s1108 + $0x3a] sm:$0xff]
      %v1423 = vld [vmem:[%s1108 + $0x4a] sm:$0xff]
      %v1424 = vld [vmem:[%s1108 + $0x52] sm:$0xff]
      %v1425 = vld [vmem:[%s1108 + $0x62] sm:$0xff]
      %v1426 = vld [vmem:[%s1108 + $0x6a] sm:$0xff]
      %v1427 = vld [vmem:[%s1108 + $0x7a] sm:$0xff]
      %v1428 = vld [vmem:[%s1108 + $0x82] sm:$0xff]
      %v1429 = vld [vmem:[%s1108 + $0x92] sm:$0xff]
      %v1430 = vld [vmem:[%s1108 + $0x9a] sm:$0xff]
      %v1431 = vld [vmem:[%s1108 + $0xaa] sm:$0xff]
      %v1432 = vld [vmem:[%s1108 + $0xb2] sm:$0xff]
      %v1433 = vpack.c.bf16 %v1418, %v1417
      %v1434 = vpack.c.bf16 %v1420, %v1419
      %v1435 = vpack.c.bf16 %v1422, %v1421
      %v1436 = vpack.c.bf16 %v1424, %v1423
      %v1437 = vpack.c.bf16 %v1426, %v1425
      %v1438 = vpack.c.bf16 %v1428, %v1427
      %v1439 = vpack.c.bf16 %v1430, %v1429
      %v1440 = vpack.c.bf16 %v1432, %v1431
      %s1441 = scalar_lea.vmem %s1, 512
      %v1442 = vld [vmem:[%s1441] sm:$0xf]
      %v1443 = vld [vmem:[%s1441 + $0x4] sm:$0xf]
      %v1444 = vld [vmem:[%s1441 + $0x8] sm:$0xf]
      %v1445 = vld [vmem:[%s1441 + $0xc] sm:$0xf]
      %v1446 = vld [vmem:[%s1441 + $0x10] sm:$0xf]
      %v1447 = vld [vmem:[%s1441 + $0x14] sm:$0xf]
      %v1448 = vld [vmem:[%s1441 + $0x18] sm:$0xf]
      %v1449 = vld [vmem:[%s1441 + $0x1c] sm:$0xf]
      %v1450 = vld [vmem:[%s1441 + $0x20] sm:$0xf]
      %v1451 = vld [vmem:[%s1441 + $0x24] sm:$0xf]
      %v1452 = vld [vmem:[%s1441 + $0x28] sm:$0xf]
      %v1453 = vld [vmem:[%s1441 + $0x2c] sm:$0xf]
      %v1454 = vld [vmem:[%s1441 + $0x30] sm:$0xf]
      %v1455 = vld [vmem:[%s1441 + $0x34] sm:$0xf]
      %v1456 = vld [vmem:[%s1441 + $0x38] sm:$0xf]
      %v1457 = vld [vmem:[%s1441 + $0x3c] sm:$0xf]
      %v1474 = vunpack.c.l.b16 %v1442
      %v1475 = vunpack.c.l.b16 %v1443
      %v1476 = vunpack.c.l.b16 %v1444
      %v1477 = vunpack.c.l.b16 %v1445
      %v1478 = vunpack.c.l.b16 %v1446
      %v1479 = vunpack.c.l.b16 %v1447
      %v1480 = vunpack.c.l.b16 %v1448
      %v1481 = vunpack.c.l.b16 %v1449
      %v1482 = vunpack.c.l.b16 %v1450
      %v1483 = vunpack.c.l.b16 %v1451
      %v1484 = vunpack.c.l.b16 %v1452
      %v1485 = vunpack.c.l.b16 %v1453
      %v1486 = vunpack.c.l.b16 %v1454
      %v1487 = vunpack.c.l.b16 %v1455
      %v1488 = vunpack.c.l.b16 %v1456
      %v1489 = vunpack.c.l.b16 %v1457
      %v1490 = vpack.c.b16 %v1475, %v1474
      %v1491 = vpack.c.b16 %v1477, %v1476
      %v1492 = vpack.c.b16 %v1479, %v1478
      %v1493 = vpack.c.b16 %v1481, %v1480
      %v1494 = vpack.c.b16 %v1483, %v1482
      %v1495 = vpack.c.b16 %v1485, %v1484
      %v1496 = vpack.c.b16 %v1487, %v1486
      %v1497 = vpack.c.b16 %v1489, %v1488
      %1506 = vmatpush.bf16.msra.mxu0 %v1497
      %1507 = vmatpush.bf16.msra.mxu0 %v1496
      %1508 = vmatpush.bf16.msra.mxu0 %v1495
      %1509 = vmatpush.bf16.msra.mxu0 %v1494
      %1510 = vmatpush.bf16.msra.mxu0 %v1493
      %1511 = vmatpush.bf16.msra.mxu0 %v1492
      %1512 = vmatpush.bf16.msra.mxu0 %v1491
      %1513 = vmatpush.bf16.msra.mxu0 %v1490
      %1514 = vmatmul.bf16.gmra.mxu0 %v1433
      %v1515 = vpop.f32.mrf.mxu0
      %v1516 = vadd.f32 0.0, %v1515
      %v1517 = vpop.f32.mrf.mxu0
      %v1518 = vadd.f32 0.0, %v1517
      %1519 = vmatmul.bf16.gmra.mxu0 %v1434
      %v1520 = vpop.f32.mrf.mxu0
      %v1521 = vadd.f32 0.0, %v1520
      %v1522 = vpop.f32.mrf.mxu0
      %v1523 = vadd.f32 0.0, %v1522
      %1524 = vmatmul.bf16.gmra.mxu0 %v1435
      %v1525 = vpop.f32.mrf.mxu0
      %v1526 = vadd.f32 0.0, %v1525
      %v1527 = vpop.f32.mrf.mxu0
      %v1528 = vadd.f32 0.0, %v1527
      %1529 = vmatmul.bf16.gmra.mxu0 %v1436
      %v1530 = vpop.f32.mrf.mxu0
      %v1531 = vadd.f32 0.0, %v1530
      %v1532 = vpop.f32.mrf.mxu0
      %v1533 = vadd.f32 0.0, %v1532
      %1534 = vmatmul.bf16.gmra.mxu0 %v1437
      %v1535 = vpop.f32.mrf.mxu0
      %v1536 = vadd.f32 0.0, %v1535
      %v1537 = vpop.f32.mrf.mxu0
      %v1538 = vadd.f32 0.0, %v1537
      %1539 = vmatmul.bf16.gmra.mxu0 %v1438
      %v1540 = vpop.f32.mrf.mxu0
      %v1541 = vadd.f32 0.0, %v1540
      %v1542 = vpop.f32.mrf.mxu0
      %v1543 = vadd.f32 0.0, %v1542
      %1544 = vmatmul.bf16.gmra.mxu0 %v1439
      %v1545 = vpop.f32.mrf.mxu0
      %v1546 = vadd.f32 0.0, %v1545
      %v1547 = vpop.f32.mrf.mxu0
      %v1548 = vadd.f32 0.0, %v1547
      %1549 = vmatmul.bf16.gmra.mxu0 %v1440
      %v1550 = vpop.f32.mrf.mxu0
      %v1551 = vadd.f32 0.0, %v1550
      %v1552 = vpop.f32.mrf.mxu0
      %v1553 = vadd.f32 0.0, %v1552
      %1554 = vdwg.mxu0
      %v1555 = vadd.f32 %v1401, %v1516
      %v1556 = vadd.f32 %v1402, %v1518
      %v1557 = vadd.f32 %v1403, %v1521
      %v1558 = vadd.f32 %v1404, %v1523
      %v1559 = vadd.f32 %v1405, %v1526
      %v1560 = vadd.f32 %v1406, %v1528
      %v1561 = vadd.f32 %v1407, %v1531
      %v1562 = vadd.f32 %v1408, %v1533
      %v1563 = vadd.f32 %v1409, %v1536
      %v1564 = vadd.f32 %v1410, %v1538
      %v1565 = vadd.f32 %v1411, %v1541
      %v1566 = vadd.f32 %v1412, %v1543
      %v1567 = vadd.f32 %v1413, %v1546
      %v1568 = vadd.f32 %v1414, %v1548
      %v1569 = vadd.f32 %v1415, %v1551
      %v1570 = vadd.f32 %v1416, %v1553
      %v1571 = vperm.slane %v125, 0
      %v1572 = vmul.f32 %v1555, %v1571
      %v1573 = vmul.f32 %v1556, %v1571
      %v1574 = vmul.f32 %v1557, %v1571
      %v1575 = vmul.f32 %v1558, %v1571
      %v1576 = vmul.f32 %v1559, %v1571
      %v1577 = vmul.f32 %v1560, %v1571
      %v1578 = vmul.f32 %v1561, %v1571
      %v1579 = vmul.f32 %v1562, %v1571
      %v1580 = vmul.f32 %v1563, %v1571
      %v1581 = vmul.f32 %v1564, %v1571
      %v1582 = vmul.f32 %v1565, %v1571
      %v1583 = vmul.f32 %v1566, %v1571
      %v1584 = vmul.f32 %v1567, %v1571
      %v1585 = vmul.f32 %v1568, %v1571
      %v1586 = vmul.f32 %v1569, %v1571
      %v1587 = vmul.f32 %v1570, %v1571
      %v1588 = vperm.slane %v126, 0
      %v1589 = vadd.f32 %v1572, %v1588
      %v1590 = vadd.f32 %v1573, %v1588
      %v1591 = vadd.f32 %v1574, %v1588
      %v1592 = vadd.f32 %v1575, %v1588
      %v1593 = vadd.f32 %v1576, %v1588
      %v1594 = vadd.f32 %v1577, %v1588
      %v1595 = vadd.f32 %v1578, %v1588
      %v1596 = vadd.f32 %v1579, %v1588
      %v1597 = vadd.f32 %v1580, %v1588
      %v1598 = vadd.f32 %v1581, %v1588
      %v1599 = vadd.f32 %v1582, %v1588
      %v1600 = vadd.f32 %v1583, %v1588
      %v1601 = vadd.f32 %v1584, %v1588
      %v1602 = vadd.f32 %v1585, %v1588
      %v1603 = vadd.f32 %v1586, %v1588
      %v1604 = vadd.f32 %v1587, %v1588
      %v1605 = vmax.f32 %v1589, 0.0
      %v1606 = vmax.f32 %v1590, 0.0
      %v1607 = vmax.f32 %v1591, 0.0
      %v1608 = vmax.f32 %v1592, 0.0
      %v1609 = vmax.f32 %v1593, 0.0
      %v1610 = vmax.f32 %v1594, 0.0
      %v1611 = vmax.f32 %v1595, 0.0
      %v1612 = vmax.f32 %v1596, 0.0
      %v1613 = vmax.f32 %v1597, 0.0
      %v1614 = vmax.f32 %v1598, 0.0
      %v1615 = vmax.f32 %v1599, 0.0
      %v1616 = vmax.f32 %v1600, 0.0
      %v1617 = vmax.f32 %v1601, 0.0
      %v1618 = vmax.f32 %v1602, 0.0
      %v1619 = vmax.f32 %v1603, 0.0
      %v1620 = vmax.f32 %v1604, 0.0
      %s1621 = scalar_lea.vmem [#allocation3], %s642
      %1622 = vst [vmem:[%s1621 + $0x1] sm:$0xff] %v1605
      %1623 = vst [vmem:[%s1621 + $0x9] sm:$0xff] %v1606
      %1624 = vst [vmem:[%s1621 + $0x19] sm:$0xff] %v1607
      %1625 = vst [vmem:[%s1621 + $0x21] sm:$0xff] %v1608
      %1626 = vst [vmem:[%s1621 + $0x31] sm:$0xff] %v1609
      %1627 = vst [vmem:[%s1621 + $0x39] sm:$0xff] %v1610
      %1628 = vst [vmem:[%s1621 + $0x49] sm:$0xff] %v1611
      %1629 = vst [vmem:[%s1621 + $0x51] sm:$0xff] %v1612
      %1630 = vst [vmem:[%s1621 + $0x61] sm:$0xff] %v1613
      %1631 = vst [vmem:[%s1621 + $0x69] sm:$0xff] %v1614
      %1632 = vst [vmem:[%s1621 + $0x79] sm:$0xff] %v1615
      %1633 = vst [vmem:[%s1621 + $0x81] sm:$0xff] %v1616
      %1634 = vst [vmem:[%s1621 + $0x91] sm:$0xff] %v1617
      %1635 = vst [vmem:[%s1621 + $0x99] sm:$0xff] %v1618
      %1636 = vst [vmem:[%s1621 + $0xa9] sm:$0xff] %v1619
      %1637 = vst [vmem:[%s1621 + $0xb1] sm:$0xff] %v1620
    $region29: #{basic_block_forward.1} parent=21 // loop_footer
      %s208 = sadd.s32 1, %s204
    $region30: #{basic_block_forward.1} parent=21 // loop_footer_branch
      %203 = sbr.rel target = $region26
    $region31: #{basic_block_forward.1} parent=21 // loop_exit
      _
    loop: start=0, step=1, limit=2
    $region32: #{basic_block_forward.1} parent=21 // loop_pre_header
      _
    $region33: #{basic_block_forward.1} parent=21 // loop_header
      %s1639 = sphi 0, %s1643
      %p1640 = scmp.ge.s32.totalorder %s1639, 2
    $region34: #{basic_block_forward.1} parent=21 // loop_header_branch
      %1642 = sbr.rel (%p1640) target = $region38
    $region35: #{basic_block_forward.1} parent=21 // loop_body
      %s1644 = smul.u32 %s1639, 8
      %s1645 = smul.u32 %s1644, 24
      %s1646 = scalar_lea.vmem [#allocation3], %s1645
      %v1647 = vld [vmem:[%s1646] sm:$0xff]
      %v1648 = vld [vmem:[%s1646 + $0x8] sm:$0xff]
      %v1649 = vld [vmem:[%s1646 + $0x18] sm:$0xff]
      %v1650 = vld [vmem:[%s1646 + $0x20] sm:$0xff]
      %v1651 = vld [vmem:[%s1646 + $0x30] sm:$0xff]
      %v1652 = vld [vmem:[%s1646 + $0x38] sm:$0xff]
      %v1653 = vld [vmem:[%s1646 + $0x48] sm:$0xff]
      %v1654 = vld [vmem:[%s1646 + $0x50] sm:$0xff]
      %v1655 = vld [vmem:[%s1646 + $0x60] sm:$0xff]
      %v1656 = vld [vmem:[%s1646 + $0x68] sm:$0xff]
      %v1657 = vld [vmem:[%s1646 + $0x78] sm:$0xff]
      %v1658 = vld [vmem:[%s1646 + $0x80] sm:$0xff]
      %v1659 = vld [vmem:[%s1646 + $0x90] sm:$0xff]
      %v1660 = vld [vmem:[%s1646 + $0x98] sm:$0xff]
      %v1661 = vld [vmem:[%s1646 + $0xa8] sm:$0xff]
      %v1662 = vld [vmem:[%s1646 + $0xb0] sm:$0xff]
      %v1663 = vpack.c.bf16 %v1648, %v1647
      %v1664 = vpack.c.bf16 %v1650, %v1649
      %v1665 = vpack.c.bf16 %v1652, %v1651
      %v1666 = vpack.c.bf16 %v1654, %v1653
      %v1667 = vpack.c.bf16 %v1656, %v1655
      %v1668 = vpack.c.bf16 %v1658, %v1657
      %v1669 = vpack.c.bf16 %v1660, %v1659
      %v1670 = vpack.c.bf16 %v1662, %v1661
      %v1671 = vld [vmem:[%s2] sm:$0xf]
      %v1672 = vld [vmem:[%s2 + $0x4] sm:$0xf]
      %v1673 = vld [vmem:[%s2 + $0x8] sm:$0xf]
      %v1674 = vld [vmem:[%s2 + $0xc] sm:$0xf]
      %v1675 = vld [vmem:[%s2 + $0x10] sm:$0xf]
      %v1676 = vld [vmem:[%s2 + $0x14] sm:$0xf]
      %v1677 = vld [vmem:[%s2 + $0x18] sm:$0xf]
      %v1678 = vld [vmem:[%s2 + $0x1c] sm:$0xf]
      %v1679 = vld [vmem:[%s2 + $0x20] sm:$0xf]
      %v1680 = vld [vmem:[%s2 + $0x24] sm:$0xf]
      %v1681 = vld [vmem:[%s2 + $0x28] sm:$0xf]
      %v1682 = vld [vmem:[%s2 + $0x2c] sm:$0xf]
      %v1683 = vld [vmem:[%s2 + $0x30] sm:$0xf]
      %v1684 = vld [vmem:[%s2 + $0x34] sm:$0xf]
      %v1685 = vld [vmem:[%s2 + $0x38] sm:$0xf]
      %v1686 = vld [vmem:[%s2 + $0x3c] sm:$0xf]
      %v1687 = vld [vmem:[%s1646 + $0x1] sm:$0xff]
      %v1688 = vld [vmem:[%s1646 + $0x9] sm:$0xff]
      %v1689 = vld [vmem:[%s1646 + $0x19] sm:$0xff]
      %v1690 = vld [vmem:[%s1646 + $0x21] sm:$0xff]
      %v1691 = vld [vmem:[%s1646 + $0x31] sm:$0xff]
      %v1692 = vld [vmem:[%s1646 + $0x39] sm:$0xff]
      %v1693 = vld [vmem:[%s1646 + $0x49] sm:$0xff]
      %v1694 = vld [vmem:[%s1646 + $0x51] sm:$0xff]
      %v1695 = vld [vmem:[%s1646 + $0x61] sm:$0xff]
      %v1696 = vld [vmem:[%s1646 + $0x69] sm:$0xff]
      %v1697 = vld [vmem:[%s1646 + $0x79] sm:$0xff]
      %v1698 = vld [vmem:[%s1646 + $0x81] sm:$0xff]
      %v1699 = vld [vmem:[%s1646 + $0x91] sm:$0xff]
      %v1700 = vld [vmem:[%s1646 + $0x99] sm:$0xff]
      %v1701 = vld [vmem:[%s1646 + $0xa9] sm:$0xff]
      %v1702 = vld [vmem:[%s1646 + $0xb1] sm:$0xff]
      %v1703 = vpack.c.bf16 %v1688, %v1687
      %v1704 = vpack.c.bf16 %v1690, %v1689
      %v1705 = vpack.c.bf16 %v1692, %v1691
      %v1706 = vpack.c.bf16 %v1694, %v1693
      %v1707 = vpack.c.bf16 %v1696, %v1695
      %v1708 = vpack.c.bf16 %v1698, %v1697
      %v1709 = vpack.c.bf16 %v1700, %v1699
      %v1710 = vpack.c.bf16 %v1702, %v1701
      %s1711 = scalar_lea.vmem %s2, 64
      %v1712 = vld [vmem:[%s1711] sm:$0xf]
      %v1713 = vld [vmem:[%s1711 + $0x4] sm:$0xf]
      %v1714 = vld [vmem:[%s1711 + $0x8] sm:$0xf]
      %v1715 = vld [vmem:[%s1711 + $0xc] sm:$0xf]
      %v1716 = vld [vmem:[%s1711 + $0x10] sm:$0xf]
      %v1717 = vld [vmem:[%s1711 + $0x14] sm:$0xf]
      %v1718 = vld [vmem:[%s1711 + $0x18] sm:$0xf]
      %v1719 = vld [vmem:[%s1711 + $0x1c] sm:$0xf]
      %v1720 = vld [vmem:[%s1711 + $0x20] sm:$0xf]
      %v1721 = vld [vmem:[%s1711 + $0x24] sm:$0xf]
      %v1722 = vld [vmem:[%s1711 + $0x28] sm:$0xf]
      %v1723 = vld [vmem:[%s1711 + $0x2c] sm:$0xf]
      %v1724 = vld [vmem:[%s1711 + $0x30] sm:$0xf]
      %v1725 = vld [vmem:[%s1711 + $0x34] sm:$0xf]
      %v1726 = vld [vmem:[%s1711 + $0x38] sm:$0xf]
      %v1727 = vld [vmem:[%s1711 + $0x3c] sm:$0xf]
      %v1744 = vunpack.c.l.b16 %v1712
      %v1745 = vunpack.c.l.b16 %v1713
      %v1746 = vunpack.c.l.b16 %v1714
      %v1747 = vunpack.c.l.b16 %v1715
      %v1748 = vunpack.c.l.b16 %v1716
      %v1749 = vunpack.c.l.b16 %v1717
      %v1750 = vunpack.c.l.b16 %v1718
      %v1751 = vunpack.c.l.b16 %v1719
      %v1752 = vunpack.c.l.b16 %v1720
      %v1753 = vunpack.c.l.b16 %v1721
      %v1754 = vunpack.c.l.b16 %v1722
      %v1755 = vunpack.c.l.b16 %v1723
      %v1756 = vunpack.c.l.b16 %v1724
      %v1757 = vunpack.c.l.b16 %v1725
      %v1758 = vunpack.c.l.b16 %v1726
      %v1759 = vunpack.c.l.b16 %v1727
      %v1760 = vpack.c.b16 %v1745, %v1744
      %v1761 = vpack.c.b16 %v1747, %v1746
      %v1762 = vpack.c.b16 %v1749, %v1748
      %v1763 = vpack.c.b16 %v1751, %v1750
      %v1764 = vpack.c.b16 %v1753, %v1752
      %v1765 = vpack.c.b16 %v1755, %v1754
      %v1766 = vpack.c.b16 %v1757, %v1756
      %v1767 = vpack.c.b16 %v1759, %v1758
      %1776 = vmatpush.bf16.msra.mxu0 %v1767
      %1777 = vmatpush.bf16.msra.mxu0 %v1766
      %1778 = vmatpush.bf16.msra.mxu0 %v1765
      %1779 = vmatpush.bf16.msra.mxu0 %v1764
      %1780 = vmatpush.bf16.msra.mxu0 %v1763
      %1781 = vmatpush.bf16.msra.mxu0 %v1762
      %1782 = vmatpush.bf16.msra.mxu0 %v1761
      %1783 = vmatpush.bf16.msra.mxu0 %v1760
      %1784 = vmatmul.bf16.gmra.mxu0 %v1703
      %v1785 = vpop.f32.mrf.mxu0
      %v1786 = vadd.f32 0.0, %v1785
      %v1787 = vpop.f32.mrf.mxu0
      %v1788 = vadd.f32 0.0, %v1787
      %1789 = vmatmul.bf16.gmra.mxu0 %v1704
      %v1790 = vpop.f32.mrf.mxu0
      %v1791 = vadd.f32 0.0, %v1790
      %v1792 = vpop.f32.mrf.mxu0
      %v1793 = vadd.f32 0.0, %v1792
      %1794 = vmatmul.bf16.gmra.mxu0 %v1705
      %v1795 = vpop.f32.mrf.mxu0
      %v1796 = vadd.f32 0.0, %v1795
      %v1797 = vpop.f32.mrf.mxu0
      %v1798 = vadd.f32 0.0, %v1797
      %1799 = vmatmul.bf16.gmra.mxu0 %v1706
      %v1800 = vpop.f32.mrf.mxu0
      %v1801 = vadd.f32 0.0, %v1800
      %v1802 = vpop.f32.mrf.mxu0
      %v1803 = vadd.f32 0.0, %v1802
      %1804 = vmatmul.bf16.gmra.mxu0 %v1707
      %v1805 = vpop.f32.mrf.mxu0
      %v1806 = vadd.f32 0.0, %v1805
      %v1807 = vpop.f32.mrf.mxu0
      %v1808 = vadd.f32 0.0, %v1807
      %1809 = vmatmul.bf16.gmra.mxu0 %v1708
      %v1810 = vpop.f32.mrf.mxu0
      %v1811 = vadd.f32 0.0, %v1810
      %v1812 = vpop.f32.mrf.mxu0
      %v1813 = vadd.f32 0.0, %v1812
      %1814 = vmatmul.bf16.gmra.mxu0 %v1709
      %v1815 = vpop.f32.mrf.mxu0
      %v1816 = vadd.f32 0.0, %v1815
      %v1817 = vpop.f32.mrf.mxu0
      %v1818 = vadd.f32 0.0, %v1817
      %1819 = vmatmul.bf16.gmra.mxu0 %v1710
      %v1820 = vpop.f32.mrf.mxu0
      %v1821 = vadd.f32 0.0, %v1820
      %v1822 = vpop.f32.mrf.mxu0
      %v1823 = vadd.f32 0.0, %v1822
      %1824 = vdwg.mxu0
      %v1841 = vunpack.c.l.b16 %v1671
      %v1842 = vunpack.c.l.b16 %v1672
      %v1843 = vunpack.c.l.b16 %v1673
      %v1844 = vunpack.c.l.b16 %v1674
      %v1845 = vunpack.c.l.b16 %v1675
      %v1846 = vunpack.c.l.b16 %v1676
      %v1847 = vunpack.c.l.b16 %v1677
      %v1848 = vunpack.c.l.b16 %v1678
      %v1849 = vunpack.c.l.b16 %v1679
      %v1850 = vunpack.c.l.b16 %v1680
      %v1851 = vunpack.c.l.b16 %v1681
      %v1852 = vunpack.c.l.b16 %v1682
      %v1853 = vunpack.c.l.b16 %v1683
      %v1854 = vunpack.c.l.b16 %v1684
      %v1855 = vunpack.c.l.b16 %v1685
      %v1856 = vunpack.c.l.b16 %v1686
      %v1857 = vpack.c.b16 %v1842, %v1841
      %v1858 = vpack.c.b16 %v1844, %v1843
      %v1859 = vpack.c.b16 %v1846, %v1845
      %v1860 = vpack.c.b16 %v1848, %v1847
      %v1861 = vpack.c.b16 %v1850, %v1849
      %v1862 = vpack.c.b16 %v1852, %v1851
      %v1863 = vpack.c.b16 %v1854, %v1853
      %v1864 = vpack.c.b16 %v1856, %v1855
      %1873 = vmatpush.bf16.msra.mxu0 %v1864
      %1874 = vmatpush.bf16.msra.mxu0 %v1863
      %1875 = vmatpush.bf16.msra.mxu0 %v1862
      %1876 = vmatpush.bf16.msra.mxu0 %v1861
      %1877 = vmatpush.bf16.msra.mxu0 %v1860
      %1878 = vmatpush.bf16.msra.mxu0 %v1859
      %1879 = vmatpush.bf16.msra.mxu0 %v1858
      %1880 = vmatpush.bf16.msra.mxu0 %v1857
      %1881 = vmatmul.bf16.gmra.mxu0 %v1663
      %v1882 = vpop.f32.mrf.mxu0
      %v1883 = vadd.f32 %v1786, %v1882
      %v1884 = vpop.f32.mrf.mxu0
      %v1885 = vadd.f32 %v1788, %v1884
      %1886 = vmatmul.bf16.gmra.mxu0 %v1664
      %v1887 = vpop.f32.mrf.mxu0
      %v1888 = vadd.f32 %v1791, %v1887
      %v1889 = vpop.f32.mrf.mxu0
      %v1890 = vadd.f32 %v1793, %v1889
      %1891 = vmatmul.bf16.gmra.mxu0 %v1665
      %v1892 = vpop.f32.mrf.mxu0
      %v1893 = vadd.f32 %v1796, %v1892
      %v1894 = vpop.f32.mrf.mxu0
      %v1895 = vadd.f32 %v1798, %v1894
      %1896 = vmatmul.bf16.gmra.mxu0 %v1666
      %v1897 = vpop.f32.mrf.mxu0
      %v1898 = vadd.f32 %v1801, %v1897
      %v1899 = vpop.f32.mrf.mxu0
      %v1900 = vadd.f32 %v1803, %v1899
      %1901 = vmatmul.bf16.gmra.mxu0 %v1667
      %v1902 = vpop.f32.mrf.mxu0
      %v1903 = vadd.f32 %v1806, %v1902
      %v1904 = vpop.f32.mrf.mxu0
      %v1905 = vadd.f32 %v1808, %v1904
      %1906 = vmatmul.bf16.gmra.mxu0 %v1668
      %v1907 = vpop.f32.mrf.mxu0
      %v1908 = vadd.f32 %v1811, %v1907
      %v1909 = vpop.f32.mrf.mxu0
      %v1910 = vadd.f32 %v1813, %v1909
      %1911 = vmatmul.bf16.gmra.mxu0 %v1669
      %v1912 = vpop.f32.mrf.mxu0
      %v1913 = vadd.f32 %v1816, %v1912
      %v1914 = vpop.f32.mrf.mxu0
      %v1915 = vadd.f32 %v1818, %v1914
      %1916 = vmatmul.bf16.gmra.mxu0 %v1670
      %v1917 = vpop.f32.mrf.mxu0
      %v1918 = vadd.f32 %v1821, %v1917
      %v1919 = vpop.f32.mrf.mxu0
      %v1920 = vadd.f32 %v1823, %v1919
      %1921 = vdwg.mxu0
      %v1922 = vld [vmem:[%s1646 + $0x2] sm:$0xff]
      %v1923 = vld [vmem:[%s1646 + $0xa] sm:$0xff]
      %v1924 = vld [vmem:[%s1646 + $0x1a] sm:$0xff]
      %v1925 = vld [vmem:[%s1646 + $0x22] sm:$0xff]
      %v1926 = vld [vmem:[%s1646 + $0x32] sm:$0xff]
      %v1927 = vld [vmem:[%s1646 + $0x3a] sm:$0xff]
      %v1928 = vld [vmem:[%s1646 + $0x4a] sm:$0xff]
      %v1929 = vld [vmem:[%s1646 + $0x52] sm:$0xff]
      %v1930 = vld [vmem:[%s1646 + $0x62] sm:$0xff]
      %v1931 = vld [vmem:[%s1646 + $0x6a] sm:$0xff]
      %v1932 = vld [vmem:[%s1646 + $0x7a] sm:$0xff]
      %v1933 = vld [vmem:[%s1646 + $0x82] sm:$0xff]
      %v1934 = vld [vmem:[%s1646 + $0x92] sm:$0xff]
      %v1935 = vld [vmem:[%s1646 + $0x9a] sm:$0xff]
      %v1936 = vld [vmem:[%s1646 + $0xaa] sm:$0xff]
      %v1937 = vld [vmem:[%s1646 + $0xb2] sm:$0xff]
      %v1938 = vpack.c.bf16 %v1923, %v1922
      %v1939 = vpack.c.bf16 %v1925, %v1924
      %v1940 = vpack.c.bf16 %v1927, %v1926
      %v1941 = vpack.c.bf16 %v1929, %v1928
      %v1942 = vpack.c.bf16 %v1931, %v1930
      %v1943 = vpack.c.bf16 %v1933, %v1932
      %v1944 = vpack.c.bf16 %v1935, %v1934
      %v1945 = vpack.c.bf16 %v1937, %v1936
      %s1946 = scalar_lea.vmem %s2, 128
      %v1947 = vld [vmem:[%s1946] sm:$0xf]
      %v1948 = vld [vmem:[%s1946 + $0x4] sm:$0xf]
      %v1949 = vld [vmem:[%s1946 + $0x8] sm:$0xf]
      %v1950 = vld [vmem:[%s1946 + $0xc] sm:$0xf]
      %v1951 = vld [vmem:[%s1946 + $0x10] sm:$0xf]
      %v1952 = vld [vmem:[%s1946 + $0x14] sm:$0xf]
      %v1953 = vld [vmem:[%s1946 + $0x18] sm:$0xf]
      %v1954 = vld [vmem:[%s1946 + $0x1c] sm:$0xf]
      %v1955 = vld [vmem:[%s1946 + $0x20] sm:$0xf]
      %v1956 = vld [vmem:[%s1946 + $0x24] sm:$0xf]
      %v1957 = vld [vmem:[%s1946 + $0x28] sm:$0xf]
      %v1958 = vld [vmem:[%s1946 + $0x2c] sm:$0xf]
      %v1959 = vld [vmem:[%s1946 + $0x30] sm:$0xf]
      %v1960 = vld [vmem:[%s1946 + $0x34] sm:$0xf]
      %v1961 = vld [vmem:[%s1946 + $0x38] sm:$0xf]
      %v1962 = vld [vmem:[%s1946 + $0x3c] sm:$0xf]
      %v1979 = vunpack.c.l.b16 %v1947
      %v1980 = vunpack.c.l.b16 %v1948
      %v1981 = vunpack.c.l.b16 %v1949
      %v1982 = vunpack.c.l.b16 %v1950
      %v1983 = vunpack.c.l.b16 %v1951
      %v1984 = vunpack.c.l.b16 %v1952
      %v1985 = vunpack.c.l.b16 %v1953
      %v1986 = vunpack.c.l.b16 %v1954
      %v1987 = vunpack.c.l.b16 %v1955
      %v1988 = vunpack.c.l.b16 %v1956
      %v1989 = vunpack.c.l.b16 %v1957
      %v1990 = vunpack.c.l.b16 %v1958
      %v1991 = vunpack.c.l.b16 %v1959
      %v1992 = vunpack.c.l.b16 %v1960
      %v1993 = vunpack.c.l.b16 %v1961
      %v1994 = vunpack.c.l.b16 %v1962
      %v1995 = vpack.c.b16 %v1980, %v1979
      %v1996 = vpack.c.b16 %v1982, %v1981
      %v1997 = vpack.c.b16 %v1984, %v1983
      %v1998 = vpack.c.b16 %v1986, %v1985
      %v1999 = vpack.c.b16 %v1988, %v1987
      %v2000 = vpack.c.b16 %v1990, %v1989
      %v2001 = vpack.c.b16 %v1992, %v1991
      %v2002 = vpack.c.b16 %v1994, %v1993
      %2011 = vmatpush.bf16.msra.mxu0 %v2002
      %2012 = vmatpush.bf16.msra.mxu0 %v2001
      %2013 = vmatpush.bf16.msra.mxu0 %v2000
      %2014 = vmatpush.bf16.msra.mxu0 %v1999
      %2015 = vmatpush.bf16.msra.mxu0 %v1998
      %2016 = vmatpush.bf16.msra.mxu0 %v1997
      %2017 = vmatpush.bf16.msra.mxu0 %v1996
      %2018 = vmatpush.bf16.msra.mxu0 %v1995
      %2019 = vmatmul.bf16.gmra.mxu0 %v1938
      %v2020 = vpop.f32.mrf.mxu0
      %v2021 = vadd.f32 0.0, %v2020
      %v2022 = vpop.f32.mrf.mxu0
      %v2023 = vadd.f32 0.0, %v2022
      %2024 = vmatmul.bf16.gmra.mxu0 %v1939
      %v2025 = vpop.f32.mrf.mxu0
      %v2026 = vadd.f32 0.0, %v2025
      %v2027 = vpop.f32.mrf.mxu0
      %v2028 = vadd.f32 0.0, %v2027
      %2029 = vmatmul.bf16.gmra.mxu0 %v1940
      %v2030 = vpop.f32.mrf.mxu0
      %v2031 = vadd.f32 0.0, %v2030
      %v2032 = vpop.f32.mrf.mxu0
      %v2033 = vadd.f32 0.0, %v2032
      %2034 = vmatmul.bf16.gmra.mxu0 %v1941
      %v2035 = vpop.f32.mrf.mxu0
      %v2036 = vadd.f32 0.0, %v2035
      %v2037 = vpop.f32.mrf.mxu0
      %v2038 = vadd.f32 0.0, %v2037
      %2039 = vmatmul.bf16.gmra.mxu0 %v1942
      %v2040 = vpop.f32.mrf.mxu0
      %v2041 = vadd.f32 0.0, %v2040
      %v2042 = vpop.f32.mrf.mxu0
      %v2043 = vadd.f32 0.0, %v2042
      %2044 = vmatmul.bf16.gmra.mxu0 %v1943
      %v2045 = vpop.f32.mrf.mxu0
      %v2046 = vadd.f32 0.0, %v2045
      %v2047 = vpop.f32.mrf.mxu0
      %v2048 = vadd.f32 0.0, %v2047
      %2049 = vmatmul.bf16.gmra.mxu0 %v1944
      %v2050 = vpop.f32.mrf.mxu0
      %v2051 = vadd.f32 0.0, %v2050
      %v2052 = vpop.f32.mrf.mxu0
      %v2053 = vadd.f32 0.0, %v2052
      %2054 = vmatmul.bf16.gmra.mxu0 %v1945
      %v2055 = vpop.f32.mrf.mxu0
      %v2056 = vadd.f32 0.0, %v2055
      %v2057 = vpop.f32.mrf.mxu0
      %v2058 = vadd.f32 0.0, %v2057
      %2059 = vdwg.mxu0
      %v2060 = vadd.f32 %v1883, %v2021
      %v2061 = vadd.f32 %v1885, %v2023
      %v2062 = vadd.f32 %v1888, %v2026
      %v2063 = vadd.f32 %v1890, %v2028
      %v2064 = vadd.f32 %v1893, %v2031
      %v2065 = vadd.f32 %v1895, %v2033
      %v2066 = vadd.f32 %v1898, %v2036
      %v2067 = vadd.f32 %v1900, %v2038
      %v2068 = vadd.f32 %v1903, %v2041
      %v2069 = vadd.f32 %v1905, %v2043
      %v2070 = vadd.f32 %v1908, %v2046
      %v2071 = vadd.f32 %v1910, %v2048
      %v2072 = vadd.f32 %v1913, %v2051
      %v2073 = vadd.f32 %v1915, %v2053
      %v2074 = vadd.f32 %v1918, %v2056
      %v2075 = vadd.f32 %v1920, %v2058
      %s2076 = sadd.s32 %s1644, 1
      %s2077 = smul.u32 %s2076, 24
      %s2078 = scalar_lea.vmem [#allocation3], %s2077
      %v2079 = vld [vmem:[%s2078] sm:$0xff]
      %v2080 = vld [vmem:[%s2078 + $0x8] sm:$0xff]
      %v2081 = vld [vmem:[%s2078 + $0x18] sm:$0xff]
      %v2082 = vld [vmem:[%s2078 + $0x20] sm:$0xff]
      %v2083 = vld [vmem:[%s2078 + $0x30] sm:$0xff]
      %v2084 = vld [vmem:[%s2078 + $0x38] sm:$0xff]
      %v2085 = vld [vmem:[%s2078 + $0x48] sm:$0xff]
      %v2086 = vld [vmem:[%s2078 + $0x50] sm:$0xff]
      %v2087 = vld [vmem:[%s2078 + $0x60] sm:$0xff]
      %v2088 = vld [vmem:[%s2078 + $0x68] sm:$0xff]
      %v2089 = vld [vmem:[%s2078 + $0x78] sm:$0xff]
      %v2090 = vld [vmem:[%s2078 + $0x80] sm:$0xff]
      %v2091 = vld [vmem:[%s2078 + $0x90] sm:$0xff]
      %v2092 = vld [vmem:[%s2078 + $0x98] sm:$0xff]
      %v2093 = vld [vmem:[%s2078 + $0xa8] sm:$0xff]
      %v2094 = vld [vmem:[%s2078 + $0xb0] sm:$0xff]
      %v2095 = vpack.c.bf16 %v2080, %v2079
      %v2096 = vpack.c.bf16 %v2082, %v2081
      %v2097 = vpack.c.bf16 %v2084, %v2083
      %v2098 = vpack.c.bf16 %v2086, %v2085
      %v2099 = vpack.c.bf16 %v2088, %v2087
      %v2100 = vpack.c.bf16 %v2090, %v2089
      %v2101 = vpack.c.bf16 %v2092, %v2091
      %v2102 = vpack.c.bf16 %v2094, %v2093
      %s2103 = scalar_lea.vmem %s2, 192
      %v2104 = vld [vmem:[%s2103] sm:$0xf]
      %v2105 = vld [vmem:[%s2103 + $0x4] sm:$0xf]
      %v2106 = vld [vmem:[%s2103 + $0x8] sm:$0xf]
      %v2107 = vld [vmem:[%s2103 + $0xc] sm:$0xf]
      %v2108 = vld [vmem:[%s2103 + $0x10] sm:$0xf]
      %v2109 = vld [vmem:[%s2103 + $0x14] sm:$0xf]
      %v2110 = vld [vmem:[%s2103 + $0x18] sm:$0xf]
      %v2111 = vld [vmem:[%s2103 + $0x1c] sm:$0xf]
      %v2112 = vld [vmem:[%s2103 + $0x20] sm:$0xf]
      %v2113 = vld [vmem:[%s2103 + $0x24] sm:$0xf]
      %v2114 = vld [vmem:[%s2103 + $0x28] sm:$0xf]
      %v2115 = vld [vmem:[%s2103 + $0x2c] sm:$0xf]
      %v2116 = vld [vmem:[%s2103 + $0x30] sm:$0xf]
      %v2117 = vld [vmem:[%s2103 + $0x34] sm:$0xf]
      %v2118 = vld [vmem:[%s2103 + $0x38] sm:$0xf]
      %v2119 = vld [vmem:[%s2103 + $0x3c] sm:$0xf]
      %v2136 = vunpack.c.l.b16 %v2104
      %v2137 = vunpack.c.l.b16 %v2105
      %v2138 = vunpack.c.l.b16 %v2106
      %v2139 = vunpack.c.l.b16 %v2107
      %v2140 = vunpack.c.l.b16 %v2108
      %v2141 = vunpack.c.l.b16 %v2109
      %v2142 = vunpack.c.l.b16 %v2110
      %v2143 = vunpack.c.l.b16 %v2111
      %v2144 = vunpack.c.l.b16 %v2112
      %v2145 = vunpack.c.l.b16 %v2113
      %v2146 = vunpack.c.l.b16 %v2114
      %v2147 = vunpack.c.l.b16 %v2115
      %v2148 = vunpack.c.l.b16 %v2116
      %v2149 = vunpack.c.l.b16 %v2117
      %v2150 = vunpack.c.l.b16 %v2118
      %v2151 = vunpack.c.l.b16 %v2119
      %v2152 = vpack.c.b16 %v2137, %v2136
      %v2153 = vpack.c.b16 %v2139, %v2138
      %v2154 = vpack.c.b16 %v2141, %v2140
      %v2155 = vpack.c.b16 %v2143, %v2142
      %v2156 = vpack.c.b16 %v2145, %v2144
      %v2157 = vpack.c.b16 %v2147, %v2146
      %v2158 = vpack.c.b16 %v2149, %v2148
      %v2159 = vpack.c.b16 %v2151, %v2150
      %2168 = vmatpush.bf16.msra.mxu0 %v2159
      %2169 = vmatpush.bf16.msra.mxu0 %v2158
      %2170 = vmatpush.bf16.msra.mxu0 %v2157
      %2171 = vmatpush.bf16.msra.mxu0 %v2156
      %2172 = vmatpush.bf16.msra.mxu0 %v2155
      %2173 = vmatpush.bf16.msra.mxu0 %v2154
      %2174 = vmatpush.bf16.msra.mxu0 %v2153
      %2175 = vmatpush.bf16.msra.mxu0 %v2152
      %2176 = vmatmul.bf16.gmra.mxu0 %v2095
      %v2177 = vpop.f32.mrf.mxu0
      %v2178 = vadd.f32 0.0, %v2177
      %v2179 = vpop.f32.mrf.mxu0
      %v2180 = vadd.f32 0.0, %v2179
      %2181 = vmatmul.bf16.gmra.mxu0 %v2096
      %v2182 = vpop.f32.mrf.mxu0
      %v2183 = vadd.f32 0.0, %v2182
      %v2184 = vpop.f32.mrf.mxu0
      %v2185 = vadd.f32 0.0, %v2184
      %2186 = vmatmul.bf16.gmra.mxu0 %v2097
      %v2187 = vpop.f32.mrf.mxu0
      %v2188 = vadd.f32 0.0, %v2187
      %v2189 = vpop.f32.mrf.mxu0
      %v2190 = vadd.f32 0.0, %v2189
      %2191 = vmatmul.bf16.gmra.mxu0 %v2098
      %v2192 = vpop.f32.mrf.mxu0
      %v2193 = vadd.f32 0.0, %v2192
      %v2194 = vpop.f32.mrf.mxu0
      %v2195 = vadd.f32 0.0, %v2194
      %2196 = vmatmul.bf16.gmra.mxu0 %v2099
      %v2197 = vpop.f32.mrf.mxu0
      %v2198 = vadd.f32 0.0, %v2197
      %v2199 = vpop.f32.mrf.mxu0
      %v2200 = vadd.f32 0.0, %v2199
      %2201 = vmatmul.bf16.gmra.mxu0 %v2100
      %v2202 = vpop.f32.mrf.mxu0
      %v2203 = vadd.f32 0.0, %v2202
      %v2204 = vpop.f32.mrf.mxu0
      %v2205 = vadd.f32 0.0, %v2204
      %2206 = vmatmul.bf16.gmra.mxu0 %v2101
      %v2207 = vpop.f32.mrf.mxu0
      %v2208 = vadd.f32 0.0, %v2207
      %v2209 = vpop.f32.mrf.mxu0
      %v2210 = vadd.f32 0.0, %v2209
      %2211 = vmatmul.bf16.gmra.mxu0 %v2102
      %v2212 = vpop.f32.mrf.mxu0
      %v2213 = vadd.f32 0.0, %v2212
      %v2214 = vpop.f32.mrf.mxu0
      %v2215 = vadd.f32 0.0, %v2214
      %2216 = vdwg.mxu0
      %v2217 = vadd.f32 %v2060, %v2178
      %v2218 = vadd.f32 %v2061, %v2180
      %v2219 = vadd.f32 %v2062, %v2183
      %v2220 = vadd.f32 %v2063, %v2185
      %v2221 = vadd.f32 %v2064, %v2188
      %v2222 = vadd.f32 %v2065, %v2190
      %v2223 = vadd.f32 %v2066, %v2193
      %v2224 = vadd.f32 %v2067, %v2195
      %v2225 = vadd.f32 %v2068, %v2198
      %v2226 = vadd.f32 %v2069, %v2200
      %v2227 = vadd.f32 %v2070, %v2203
      %v2228 = vadd.f32 %v2071, %v2205
      %v2229 = vadd.f32 %v2072, %v2208
      %v2230 = vadd.f32 %v2073, %v2210
      %v2231 = vadd.f32 %v2074, %v2213
      %v2232 = vadd.f32 %v2075, %v2215
      %v2233 = vld [vmem:[%s2078 + $0x1] sm:$0xff]
      %v2234 = vld [vmem:[%s2078 + $0x9] sm:$0xff]
      %v2235 = vld [vmem:[%s2078 + $0x19] sm:$0xff]
      %v2236 = vld [vmem:[%s2078 + $0x21] sm:$0xff]
      %v2237 = vld [vmem:[%s2078 + $0x31] sm:$0xff]
      %v2238 = vld [vmem:[%s2078 + $0x39] sm:$0xff]
      %v2239 = vld [vmem:[%s2078 + $0x49] sm:$0xff]
      %v2240 = vld [vmem:[%s2078 + $0x51] sm:$0xff]
      %v2241 = vld [vmem:[%s2078 + $0x61] sm:$0xff]
      %v2242 = vld [vmem:[%s2078 + $0x69] sm:$0xff]
      %v2243 = vld [vmem:[%s2078 + $0x79] sm:$0xff]
      %v2244 = vld [vmem:[%s2078 + $0x81] sm:$0xff]
      %v2245 = vld [vmem:[%s2078 + $0x91] sm:$0xff]
      %v2246 = vld [vmem:[%s2078 + $0x99] sm:$0xff]
      %v2247 = vld [vmem:[%s2078 + $0xa9] sm:$0xff]
      %v2248 = vld [vmem:[%s2078 + $0xb1] sm:$0xff]
      %v2249 = vpack.c.bf16 %v2234, %v2233
      %v2250 = vpack.c.bf16 %v2236, %v2235
      %v2251 = vpack.c.bf16 %v2238, %v2237
      %v2252 = vpack.c.bf16 %v2240, %v2239
      %v2253 = vpack.c.bf16 %v2242, %v2241
      %v2254 = vpack.c.bf16 %v2244, %v2243
      %v2255 = vpack.c.bf16 %v2246, %v2245
      %v2256 = vpack.c.bf16 %v2248, %v2247
      %s2257 = scalar_lea.vmem %s2, 256
      %v2258 = vld [vmem:[%s2257] sm:$0xf]
      %v2259 = vld [vmem:[%s2257 + $0x4] sm:$0xf]
      %v2260 = vld [vmem:[%s2257 + $0x8] sm:$0xf]
      %v2261 = vld [vmem:[%s2257 + $0xc] sm:$0xf]
      %v2262 = vld [vmem:[%s2257 + $0x10] sm:$0xf]
      %v2263 = vld [vmem:[%s2257 + $0x14] sm:$0xf]
      %v2264 = vld [vmem:[%s2257 + $0x18] sm:$0xf]
      %v2265 = vld [vmem:[%s2257 + $0x1c] sm:$0xf]
      %v2266 = vld [vmem:[%s2257 + $0x20] sm:$0xf]
      %v2267 = vld [vmem:[%s2257 + $0x24] sm:$0xf]
      %v2268 = vld [vmem:[%s2257 + $0x28] sm:$0xf]
      %v2269 = vld [vmem:[%s2257 + $0x2c] sm:$0xf]
      %v2270 = vld [vmem:[%s2257 + $0x30] sm:$0xf]
      %v2271 = vld [vmem:[%s2257 + $0x34] sm:$0xf]
      %v2272 = vld [vmem:[%s2257 + $0x38] sm:$0xf]
      %v2273 = vld [vmem:[%s2257 + $0x3c] sm:$0xf]
      %v2290 = vunpack.c.l.b16 %v2258
      %v2291 = vunpack.c.l.b16 %v2259
      %v2292 = vunpack.c.l.b16 %v2260
      %v2293 = vunpack.c.l.b16 %v2261
      %v2294 = vunpack.c.l.b16 %v2262
      %v2295 = vunpack.c.l.b16 %v2263
      %v2296 = vunpack.c.l.b16 %v2264
      %v2297 = vunpack.c.l.b16 %v2265
      %v2298 = vunpack.c.l.b16 %v2266
      %v2299 = vunpack.c.l.b16 %v2267
      %v2300 = vunpack.c.l.b16 %v2268
      %v2301 = vunpack.c.l.b16 %v2269
      %v2302 = vunpack.c.l.b16 %v2270
      %v2303 = vunpack.c.l.b16 %v2271
      %v2304 = vunpack.c.l.b16 %v2272
      %v2305 = vunpack.c.l.b16 %v2273
      %v2306 = vpack.c.b16 %v2291, %v2290
      %v2307 = vpack.c.b16 %v2293, %v2292
      %v2308 = vpack.c.b16 %v2295, %v2294
      %v2309 = vpack.c.b16 %v2297, %v2296
      %v2310 = vpack.c.b16 %v2299, %v2298
      %v2311 = vpack.c.b16 %v2301, %v2300
      %v2312 = vpack.c.b16 %v2303, %v2302
      %v2313 = vpack.c.b16 %v2305, %v2304
      %2322 = vmatpush.bf16.msra.mxu0 %v2313
      %2323 = vmatpush.bf16.msra.mxu0 %v2312
      %2324 = vmatpush.bf16.msra.mxu0 %v2311
      %2325 = vmatpush.bf16.msra.mxu0 %v2310
      %2326 = vmatpush.bf16.msra.mxu0 %v2309
      %2327 = vmatpush.bf16.msra.mxu0 %v2308
      %2328 = vmatpush.bf16.msra.mxu0 %v2307
      %2329 = vmatpush.bf16.msra.mxu0 %v2306
      %2330 = vmatmul.bf16.gmra.mxu0 %v2249
      %v2331 = vpop.f32.mrf.mxu0
      %v2332 = vadd.f32 0.0, %v2331
      %v2333 = vpop.f32.mrf.mxu0
      %v2334 = vadd.f32 0.0, %v2333
      %2335 = vmatmul.bf16.gmra.mxu0 %v2250
      %v2336 = vpop.f32.mrf.mxu0
      %v2337 = vadd.f32 0.0, %v2336
      %v2338 = vpop.f32.mrf.mxu0
      %v2339 = vadd.f32 0.0, %v2338
      %2340 = vmatmul.bf16.gmra.mxu0 %v2251
      %v2341 = vpop.f32.mrf.mxu0
      %v2342 = vadd.f32 0.0, %v2341
      %v2343 = vpop.f32.mrf.mxu0
      %v2344 = vadd.f32 0.0, %v2343
      %2345 = vmatmul.bf16.gmra.mxu0 %v2252
      %v2346 = vpop.f32.mrf.mxu0
      %v2347 = vadd.f32 0.0, %v2346
      %v2348 = vpop.f32.mrf.mxu0
      %v2349 = vadd.f32 0.0, %v2348
      %2350 = vmatmul.bf16.gmra.mxu0 %v2253
      %v2351 = vpop.f32.mrf.mxu0
      %v2352 = vadd.f32 0.0, %v2351
      %v2353 = vpop.f32.mrf.mxu0
      %v2354 = vadd.f32 0.0, %v2353
      %2355 = vmatmul.bf16.gmra.mxu0 %v2254
      %v2356 = vpop.f32.mrf.mxu0
      %v2357 = vadd.f32 0.0, %v2356
      %v2358 = vpop.f32.mrf.mxu0
      %v2359 = vadd.f32 0.0, %v2358
      %2360 = vmatmul.bf16.gmra.mxu0 %v2255
      %v2361 = vpop.f32.mrf.mxu0
      %v2362 = vadd.f32 0.0, %v2361
      %v2363 = vpop.f32.mrf.mxu0
      %v2364 = vadd.f32 0.0, %v2363
      %2365 = vmatmul.bf16.gmra.mxu0 %v2256
      %v2366 = vpop.f32.mrf.mxu0
      %v2367 = vadd.f32 0.0, %v2366
      %v2368 = vpop.f32.mrf.mxu0
      %v2369 = vadd.f32 0.0, %v2368
      %2370 = vdwg.mxu0
      %v2371 = vadd.f32 %v2217, %v2332
      %v2372 = vadd.f32 %v2218, %v2334
      %v2373 = vadd.f32 %v2219, %v2337
      %v2374 = vadd.f32 %v2220, %v2339
      %v2375 = vadd.f32 %v2221, %v2342
      %v2376 = vadd.f32 %v2222, %v2344
      %v2377 = vadd.f32 %v2223, %v2347
      %v2378 = vadd.f32 %v2224, %v2349
      %v2379 = vadd.f32 %v2225, %v2352
      %v2380 = vadd.f32 %v2226, %v2354
      %v2381 = vadd.f32 %v2227, %v2357
      %v2382 = vadd.f32 %v2228, %v2359
      %v2383 = vadd.f32 %v2229, %v2362
      %v2384 = vadd.f32 %v2230, %v2364
      %v2385 = vadd.f32 %v2231, %v2367
      %v2386 = vadd.f32 %v2232, %v2369
      %v2387 = vld [vmem:[%s2078 + $0x2] sm:$0xff]
      %v2388 = vld [vmem:[%s2078 + $0xa] sm:$0xff]
      %v2389 = vld [vmem:[%s2078 + $0x1a] sm:$0xff]
      %v2390 = vld [vmem:[%s2078 + $0x22] sm:$0xff]
      %v2391 = vld [vmem:[%s2078 + $0x32] sm:$0xff]
      %v2392 = vld [vmem:[%s2078 + $0x3a] sm:$0xff]
      %v2393 = vld [vmem:[%s2078 + $0x4a] sm:$0xff]
      %v2394 = vld [vmem:[%s2078 + $0x52] sm:$0xff]
      %v2395 = vld [vmem:[%s2078 + $0x62] sm:$0xff]
      %v2396 = vld [vmem:[%s2078 + $0x6a] sm:$0xff]
      %v2397 = vld [vmem:[%s2078 + $0x7a] sm:$0xff]
      %v2398 = vld [vmem:[%s2078 + $0x82] sm:$0xff]
      %v2399 = vld [vmem:[%s2078 + $0x92] sm:$0xff]
      %v2400 = vld [vmem:[%s2078 + $0x9a] sm:$0xff]
      %v2401 = vld [vmem:[%s2078 + $0xaa] sm:$0xff]
      %v2402 = vld [vmem:[%s2078 + $0xb2] sm:$0xff]
      %v2403 = vpack.c.bf16 %v2388, %v2387
      %v2404 = vpack.c.bf16 %v2390, %v2389
      %v2405 = vpack.c.bf16 %v2392, %v2391
      %v2406 = vpack.c.bf16 %v2394, %v2393
      %v2407 = vpack.c.bf16 %v2396, %v2395
      %v2408 = vpack.c.bf16 %v2398, %v2397
      %v2409 = vpack.c.bf16 %v2400, %v2399
      %v2410 = vpack.c.bf16 %v2402, %v2401
      %s2411 = scalar_lea.vmem %s2, 320
      %v2412 = vld [vmem:[%s2411] sm:$0xf]
      %v2413 = vld [vmem:[%s2411 + $0x4] sm:$0xf]
      %v2414 = vld [vmem:[%s2411 + $0x8] sm:$0xf]
      %v2415 = vld [vmem:[%s2411 + $0xc] sm:$0xf]
      %v2416 = vld [vmem:[%s2411 + $0x10] sm:$0xf]
      %v2417 = vld [vmem:[%s2411 + $0x14] sm:$0xf]
      %v2418 = vld [vmem:[%s2411 + $0x18] sm:$0xf]
      %v2419 = vld [vmem:[%s2411 + $0x1c] sm:$0xf]
      %v2420 = vld [vmem:[%s2411 + $0x20] sm:$0xf]
      %v2421 = vld [vmem:[%s2411 + $0x24] sm:$0xf]
      %v2422 = vld [vmem:[%s2411 + $0x28] sm:$0xf]
      %v2423 = vld [vmem:[%s2411 + $0x2c] sm:$0xf]
      %v2424 = vld [vmem:[%s2411 + $0x30] sm:$0xf]
      %v2425 = vld [vmem:[%s2411 + $0x34] sm:$0xf]
      %v2426 = vld [vmem:[%s2411 + $0x38] sm:$0xf]
      %v2427 = vld [vmem:[%s2411 + $0x3c] sm:$0xf]
      %v2444 = vunpack.c.l.b16 %v2412
      %v2445 = vunpack.c.l.b16 %v2413
      %v2446 = vunpack.c.l.b16 %v2414
      %v2447 = vunpack.c.l.b16 %v2415
      %v2448 = vunpack.c.l.b16 %v2416
      %v2449 = vunpack.c.l.b16 %v2417
      %v2450 = vunpack.c.l.b16 %v2418
      %v2451 = vunpack.c.l.b16 %v2419
      %v2452 = vunpack.c.l.b16 %v2420
      %v2453 = vunpack.c.l.b16 %v2421
      %v2454 = vunpack.c.l.b16 %v2422
      %v2455 = vunpack.c.l.b16 %v2423
      %v2456 = vunpack.c.l.b16 %v2424
      %v2457 = vunpack.c.l.b16 %v2425
      %v2458 = vunpack.c.l.b16 %v2426
      %v2459 = vunpack.c.l.b16 %v2427
      %v2460 = vpack.c.b16 %v2445, %v2444
      %v2461 = vpack.c.b16 %v2447, %v2446
      %v2462 = vpack.c.b16 %v2449, %v2448
      %v2463 = vpack.c.b16 %v2451, %v2450
      %v2464 = vpack.c.b16 %v2453, %v2452
      %v2465 = vpack.c.b16 %v2455, %v2454
      %v2466 = vpack.c.b16 %v2457, %v2456
      %v2467 = vpack.c.b16 %v2459, %v2458
      %2476 = vmatpush.bf16.msra.mxu0 %v2467
      %2477 = vmatpush.bf16.msra.mxu0 %v2466
      %2478 = vmatpush.bf16.msra.mxu0 %v2465
      %2479 = vmatpush.bf16.msra.mxu0 %v2464
      %2480 = vmatpush.bf16.msra.mxu0 %v2463
      %2481 = vmatpush.bf16.msra.mxu0 %v2462
      %2482 = vmatpush.bf16.msra.mxu0 %v2461
      %2483 = vmatpush.bf16.msra.mxu0 %v2460
      %2484 = vmatmul.bf16.gmra.mxu0 %v2403
      %v2485 = vpop.f32.mrf.mxu0
      %v2486 = vadd.f32 0.0, %v2485
      %v2487 = vpop.f32.mrf.mxu0
      %v2488 = vadd.f32 0.0, %v2487
      %2489 = vmatmul.bf16.gmra.mxu0 %v2404
      %v2490 = vpop.f32.mrf.mxu0
      %v2491 = vadd.f32 0.0, %v2490
      %v2492 = vpop.f32.mrf.mxu0
      %v2493 = vadd.f32 0.0, %v2492
      %2494 = vmatmul.bf16.gmra.mxu0 %v2405
      %v2495 = vpop.f32.mrf.mxu0
      %v2496 = vadd.f32 0.0, %v2495
      %v2497 = vpop.f32.mrf.mxu0
      %v2498 = vadd.f32 0.0, %v2497
      %2499 = vmatmul.bf16.gmra.mxu0 %v2406
      %v2500 = vpop.f32.mrf.mxu0
      %v2501 = vadd.f32 0.0, %v2500
      %v2502 = vpop.f32.mrf.mxu0
      %v2503 = vadd.f32 0.0, %v2502
      %2504 = vmatmul.bf16.gmra.mxu0 %v2407
      %v2505 = vpop.f32.mrf.mxu0
      %v2506 = vadd.f32 0.0, %v2505
      %v2507 = vpop.f32.mrf.mxu0
      %v2508 = vadd.f32 0.0, %v2507
      %2509 = vmatmul.bf16.gmra.mxu0 %v2408
      %v2510 = vpop.f32.mrf.mxu0
      %v2511 = vadd.f32 0.0, %v2510
      %v2512 = vpop.f32.mrf.mxu0
      %v2513 = vadd.f32 0.0, %v2512
      %2514 = vmatmul.bf16.gmra.mxu0 %v2409
      %v2515 = vpop.f32.mrf.mxu0
      %v2516 = vadd.f32 0.0, %v2515
      %v2517 = vpop.f32.mrf.mxu0
      %v2518 = vadd.f32 0.0, %v2517
      %2519 = vmatmul.bf16.gmra.mxu0 %v2410
      %v2520 = vpop.f32.mrf.mxu0
      %v2521 = vadd.f32 0.0, %v2520
      %v2522 = vpop.f32.mrf.mxu0
      %v2523 = vadd.f32 0.0, %v2522
      %2524 = vdwg.mxu0
      %v2525 = vadd.f32 %v2371, %v2486
      %v2526 = vadd.f32 %v2372, %v2488
      %v2527 = vadd.f32 %v2373, %v2491
      %v2528 = vadd.f32 %v2374, %v2493
      %v2529 = vadd.f32 %v2375, %v2496
      %v2530 = vadd.f32 %v2376, %v2498
      %v2531 = vadd.f32 %v2377, %v2501
      %v2532 = vadd.f32 %v2378, %v2503
      %v2533 = vadd.f32 %v2379, %v2506
      %v2534 = vadd.f32 %v2380, %v2508
      %v2535 = vadd.f32 %v2381, %v2511
      %v2536 = vadd.f32 %v2382, %v2513
      %v2537 = vadd.f32 %v2383, %v2516
      %v2538 = vadd.f32 %v2384, %v2518
      %v2539 = vadd.f32 %v2385, %v2521
      %v2540 = vadd.f32 %v2386, %v2523
      %s2541 = sadd.s32 %s1644, 2
      %s2542 = smul.u32 %s2541, 24
      %s2543 = scalar_lea.vmem [#allocation3], %s2542
      %v2544 = vld [vmem:[%s2543] sm:$0xff]
      %v2545 = vld [vmem:[%s2543 + $0x8] sm:$0xff]
      %v2546 = vld [vmem:[%s2543 + $0x18] sm:$0xff]
      %v2547 = vld [vmem:[%s2543 + $0x20] sm:$0xff]
      %v2548 = vld [vmem:[%s2543 + $0x30] sm:$0xff]
      %v2549 = vld [vmem:[%s2543 + $0x38] sm:$0xff]
      %v2550 = vld [vmem:[%s2543 + $0x48] sm:$0xff]
      %v2551 = vld [vmem:[%s2543 + $0x50] sm:$0xff]
      %v2552 = vld [vmem:[%s2543 + $0x60] sm:$0xff]
      %v2553 = vld [vmem:[%s2543 + $0x68] sm:$0xff]
      %v2554 = vld [vmem:[%s2543 + $0x78] sm:$0xff]
      %v2555 = vld [vmem:[%s2543 + $0x80] sm:$0xff]
      %v2556 = vld [vmem:[%s2543 + $0x90] sm:$0xff]
      %v2557 = vld [vmem:[%s2543 + $0x98] sm:$0xff]
      %v2558 = vld [vmem:[%s2543 + $0xa8] sm:$0xff]
      %v2559 = vld [vmem:[%s2543 + $0xb0] sm:$0xff]
      %v2560 = vpack.c.bf16 %v2545, %v2544
      %v2561 = vpack.c.bf16 %v2547, %v2546
      %v2562 = vpack.c.bf16 %v2549, %v2548
      %v2563 = vpack.c.bf16 %v2551, %v2550
      %v2564 = vpack.c.bf16 %v2553, %v2552
      %v2565 = vpack.c.bf16 %v2555, %v2554
      %v2566 = vpack.c.bf16 %v2557, %v2556
      %v2567 = vpack.c.bf16 %v2559, %v2558
      %s2568 = scalar_lea.vmem %s2, 384
      %v2569 = vld [vmem:[%s2568] sm:$0xf]
      %v2570 = vld [vmem:[%s2568 + $0x4] sm:$0xf]
      %v2571 = vld [vmem:[%s2568 + $0x8] sm:$0xf]
      %v2572 = vld [vmem:[%s2568 + $0xc] sm:$0xf]
      %v2573 = vld [vmem:[%s2568 + $0x10] sm:$0xf]
      %v2574 = vld [vmem:[%s2568 + $0x14] sm:$0xf]
      %v2575 = vld [vmem:[%s2568 + $0x18] sm:$0xf]
      %v2576 = vld [vmem:[%s2568 + $0x1c] sm:$0xf]
      %v2577 = vld [vmem:[%s2568 + $0x20] sm:$0xf]
      %v2578 = vld [vmem:[%s2568 + $0x24] sm:$0xf]
      %v2579 = vld [vmem:[%s2568 + $0x28] sm:$0xf]
      %v2580 = vld [vmem:[%s2568 + $0x2c] sm:$0xf]
      %v2581 = vld [vmem:[%s2568 + $0x30] sm:$0xf]
      %v2582 = vld [vmem:[%s2568 + $0x34] sm:$0xf]
      %v2583 = vld [vmem:[%s2568 + $0x38] sm:$0xf]
      %v2584 = vld [vmem:[%s2568 + $0x3c] sm:$0xf]
      %v2601 = vunpack.c.l.b16 %v2569
      %v2602 = vunpack.c.l.b16 %v2570
      %v2603 = vunpack.c.l.b16 %v2571
      %v2604 = vunpack.c.l.b16 %v2572
      %v2605 = vunpack.c.l.b16 %v2573
      %v2606 = vunpack.c.l.b16 %v2574
      %v2607 = vunpack.c.l.b16 %v2575
      %v2608 = vunpack.c.l.b16 %v2576
      %v2609 = vunpack.c.l.b16 %v2577
      %v2610 = vunpack.c.l.b16 %v2578
      %v2611 = vunpack.c.l.b16 %v2579
      %v2612 = vunpack.c.l.b16 %v2580
      %v2613 = vunpack.c.l.b16 %v2581
      %v2614 = vunpack.c.l.b16 %v2582
      %v2615 = vunpack.c.l.b16 %v2583
      %v2616 = vunpack.c.l.b16 %v2584
      %v2617 = vpack.c.b16 %v2602, %v2601
      %v2618 = vpack.c.b16 %v2604, %v2603
      %v2619 = vpack.c.b16 %v2606, %v2605
      %v2620 = vpack.c.b16 %v2608, %v2607
      %v2621 = vpack.c.b16 %v2610, %v2609
      %v2622 = vpack.c.b16 %v2612, %v2611
      %v2623 = vpack.c.b16 %v2614, %v2613
      %v2624 = vpack.c.b16 %v2616, %v2615
      %2633 = vmatpush.bf16.msra.mxu0 %v2624
      %2634 = vmatpush.bf16.msra.mxu0 %v2623
      %2635 = vmatpush.bf16.msra.mxu0 %v2622
      %2636 = vmatpush.bf16.msra.mxu0 %v2621
      %2637 = vmatpush.bf16.msra.mxu0 %v2620
      %2638 = vmatpush.bf16.msra.mxu0 %v2619
      %2639 = vmatpush.bf16.msra.mxu0 %v2618
      %2640 = vmatpush.bf16.msra.mxu0 %v2617
      %2641 = vmatmul.bf16.gmra.mxu0 %v2560
      %v2642 = vpop.f32.mrf.mxu0
      %v2643 = vadd.f32 0.0, %v2642
      %v2644 = vpop.f32.mrf.mxu0
      %v2645 = vadd.f32 0.0, %v2644
      %2646 = vmatmul.bf16.gmra.mxu0 %v2561
      %v2647 = vpop.f32.mrf.mxu0
      %v2648 = vadd.f32 0.0, %v2647
      %v2649 = vpop.f32.mrf.mxu0
      %v2650 = vadd.f32 0.0, %v2649
      %2651 = vmatmul.bf16.gmra.mxu0 %v2562
      %v2652 = vpop.f32.mrf.mxu0
      %v2653 = vadd.f32 0.0, %v2652
      %v2654 = vpop.f32.mrf.mxu0
      %v2655 = vadd.f32 0.0, %v2654
      %2656 = vmatmul.bf16.gmra.mxu0 %v2563
      %v2657 = vpop.f32.mrf.mxu0
      %v2658 = vadd.f32 0.0, %v2657
      %v2659 = vpop.f32.mrf.mxu0
      %v2660 = vadd.f32 0.0, %v2659
      %2661 = vmatmul.bf16.gmra.mxu0 %v2564
      %v2662 = vpop.f32.mrf.mxu0
      %v2663 = vadd.f32 0.0, %v2662
      %v2664 = vpop.f32.mrf.mxu0
      %v2665 = vadd.f32 0.0, %v2664
      %2666 = vmatmul.bf16.gmra.mxu0 %v2565
      %v2667 = vpop.f32.mrf.mxu0
      %v2668 = vadd.f32 0.0, %v2667
      %v2669 = vpop.f32.mrf.mxu0
      %v2670 = vadd.f32 0.0, %v2669
      %2671 = vmatmul.bf16.gmra.mxu0 %v2566
      %v2672 = vpop.f32.mrf.mxu0
      %v2673 = vadd.f32 0.0, %v2672
      %v2674 = vpop.f32.mrf.mxu0
      %v2675 = vadd.f32 0.0, %v2674
      %2676 = vmatmul.bf16.gmra.mxu0 %v2567
      %v2677 = vpop.f32.mrf.mxu0
      %v2678 = vadd.f32 0.0, %v2677
      %v2679 = vpop.f32.mrf.mxu0
      %v2680 = vadd.f32 0.0, %v2679
      %2681 = vdwg.mxu0
      %v2682 = vadd.f32 %v2525, %v2643
      %v2683 = vadd.f32 %v2526, %v2645
      %v2684 = vadd.f32 %v2527, %v2648
      %v2685 = vadd.f32 %v2528, %v2650
      %v2686 = vadd.f32 %v2529, %v2653
      %v2687 = vadd.f32 %v2530, %v2655
      %v2688 = vadd.f32 %v2531, %v2658
      %v2689 = vadd.f32 %v2532, %v2660
      %v2690 = vadd.f32 %v2533, %v2663
      %v2691 = vadd.f32 %v2534, %v2665
      %v2692 = vadd.f32 %v2535, %v2668
      %v2693 = vadd.f32 %v2536, %v2670
      %v2694 = vadd.f32 %v2537, %v2673
      %v2695 = vadd.f32 %v2538, %v2675
      %v2696 = vadd.f32 %v2539, %v2678
      %v2697 = vadd.f32 %v2540, %v2680
      %v2698 = vld [vmem:[%s2543 + $0x1] sm:$0xff]
      %v2699 = vld [vmem:[%s2543 + $0x9] sm:$0xff]
      %v2700 = vld [vmem:[%s2543 + $0x19] sm:$0xff]
      %v2701 = vld [vmem:[%s2543 + $0x21] sm:$0xff]
      %v2702 = vld [vmem:[%s2543 + $0x31] sm:$0xff]
      %v2703 = vld [vmem:[%s2543 + $0x39] sm:$0xff]
      %v2704 = vld [vmem:[%s2543 + $0x49] sm:$0xff]
      %v2705 = vld [vmem:[%s2543 + $0x51] sm:$0xff]
      %v2706 = vld [vmem:[%s2543 + $0x61] sm:$0xff]
      %v2707 = vld [vmem:[%s2543 + $0x69] sm:$0xff]
      %v2708 = vld [vmem:[%s2543 + $0x79] sm:$0xff]
      %v2709 = vld [vmem:[%s2543 + $0x81] sm:$0xff]
      %v2710 = vld [vmem:[%s2543 + $0x91] sm:$0xff]
      %v2711 = vld [vmem:[%s2543 + $0x99] sm:$0xff]
      %v2712 = vld [vmem:[%s2543 + $0xa9] sm:$0xff]
      %v2713 = vld [vmem:[%s2543 + $0xb1] sm:$0xff]
      %v2714 = vpack.c.bf16 %v2699, %v2698
      %v2715 = vpack.c.bf16 %v2701, %v2700
      %v2716 = vpack.c.bf16 %v2703, %v2702
      %v2717 = vpack.c.bf16 %v2705, %v2704
      %v2718 = vpack.c.bf16 %v2707, %v2706
      %v2719 = vpack.c.bf16 %v2709, %v2708
      %v2720 = vpack.c.bf16 %v2711, %v2710
      %v2721 = vpack.c.bf16 %v2713, %v2712
      %s2722 = scalar_lea.vmem %s2, 448
      %v2723 = vld [vmem:[%s2722] sm:$0xf]
      %v2724 = vld [vmem:[%s2722 + $0x4] sm:$0xf]
      %v2725 = vld [vmem:[%s2722 + $0x8] sm:$0xf]
      %v2726 = vld [vmem:[%s2722 + $0xc] sm:$0xf]
      %v2727 = vld [vmem:[%s2722 + $0x10] sm:$0xf]
      %v2728 = vld [vmem:[%s2722 + $0x14] sm:$0xf]
      %v2729 = vld [vmem:[%s2722 + $0x18] sm:$0xf]
      %v2730 = vld [vmem:[%s2722 + $0x1c] sm:$0xf]
      %v2731 = vld [vmem:[%s2722 + $0x20] sm:$0xf]
      %v2732 = vld [vmem:[%s2722 + $0x24] sm:$0xf]
      %v2733 = vld [vmem:[%s2722 + $0x28] sm:$0xf]
      %v2734 = vld [vmem:[%s2722 + $0x2c] sm:$0xf]
      %v2735 = vld [vmem:[%s2722 + $0x30] sm:$0xf]
      %v2736 = vld [vmem:[%s2722 + $0x34] sm:$0xf]
      %v2737 = vld [vmem:[%s2722 + $0x38] sm:$0xf]
      %v2738 = vld [vmem:[%s2722 + $0x3c] sm:$0xf]
      %v2755 = vunpack.c.l.b16 %v2723
      %v2756 = vunpack.c.l.b16 %v2724
      %v2757 = vunpack.c.l.b16 %v2725
      %v2758 = vunpack.c.l.b16 %v2726
      %v2759 = vunpack.c.l.b16 %v2727
      %v2760 = vunpack.c.l.b16 %v2728
      %v2761 = vunpack.c.l.b16 %v2729
      %v2762 = vunpack.c.l.b16 %v2730
      %v2763 = vunpack.c.l.b16 %v2731
      %v2764 = vunpack.c.l.b16 %v2732
      %v2765 = vunpack.c.l.b16 %v2733
      %v2766 = vunpack.c.l.b16 %v2734
      %v2767 = vunpack.c.l.b16 %v2735
      %v2768 = vunpack.c.l.b16 %v2736
      %v2769 = vunpack.c.l.b16 %v2737
      %v2770 = vunpack.c.l.b16 %v2738
      %v2771 = vpack.c.b16 %v2756, %v2755
      %v2772 = vpack.c.b16 %v2758, %v2757
      %v2773 = vpack.c.b16 %v2760, %v2759
      %v2774 = vpack.c.b16 %v2762, %v2761
      %v2775 = vpack.c.b16 %v2764, %v2763
      %v2776 = vpack.c.b16 %v2766, %v2765
      %v2777 = vpack.c.b16 %v2768, %v2767
      %v2778 = vpack.c.b16 %v2770, %v2769
      %2787 = vmatpush.bf16.msra.mxu0 %v2778
      %2788 = vmatpush.bf16.msra.mxu0 %v2777
      %2789 = vmatpush.bf16.msra.mxu0 %v2776
      %2790 = vmatpush.bf16.msra.mxu0 %v2775
      %2791 = vmatpush.bf16.msra.mxu0 %v2774
      %2792 = vmatpush.bf16.msra.mxu0 %v2773
      %2793 = vmatpush.bf16.msra.mxu0 %v2772
      %2794 = vmatpush.bf16.msra.mxu0 %v2771
      %2795 = vmatmul.bf16.gmra.mxu0 %v2714
      %v2796 = vpop.f32.mrf.mxu0
      %v2797 = vadd.f32 0.0, %v2796
      %v2798 = vpop.f32.mrf.mxu0
      %v2799 = vadd.f32 0.0, %v2798
      %2800 = vmatmul.bf16.gmra.mxu0 %v2715
      %v2801 = vpop.f32.mrf.mxu0
      %v2802 = vadd.f32 0.0, %v2801
      %v2803 = vpop.f32.mrf.mxu0
      %v2804 = vadd.f32 0.0, %v2803
      %2805 = vmatmul.bf16.gmra.mxu0 %v2716
      %v2806 = vpop.f32.mrf.mxu0
      %v2807 = vadd.f32 0.0, %v2806
      %v2808 = vpop.f32.mrf.mxu0
      %v2809 = vadd.f32 0.0, %v2808
      %2810 = vmatmul.bf16.gmra.mxu0 %v2717
      %v2811 = vpop.f32.mrf.mxu0
      %v2812 = vadd.f32 0.0, %v2811
      %v2813 = vpop.f32.mrf.mxu0
      %v2814 = vadd.f32 0.0, %v2813
      %2815 = vmatmul.bf16.gmra.mxu0 %v2718
      %v2816 = vpop.f32.mrf.mxu0
      %v2817 = vadd.f32 0.0, %v2816
      %v2818 = vpop.f32.mrf.mxu0
      %v2819 = vadd.f32 0.0, %v2818
      %2820 = vmatmul.bf16.gmra.mxu0 %v2719
      %v2821 = vpop.f32.mrf.mxu0
      %v2822 = vadd.f32 0.0, %v2821
      %v2823 = vpop.f32.mrf.mxu0
      %v2824 = vadd.f32 0.0, %v2823
      %2825 = vmatmul.bf16.gmra.mxu0 %v2720
      %v2826 = vpop.f32.mrf.mxu0
      %v2827 = vadd.f32 0.0, %v2826
      %v2828 = vpop.f32.mrf.mxu0
      %v2829 = vadd.f32 0.0, %v2828
      %2830 = vmatmul.bf16.gmra.mxu0 %v2721
      %v2831 = vpop.f32.mrf.mxu0
      %v2832 = vadd.f32 0.0, %v2831
      %v2833 = vpop.f32.mrf.mxu0
      %v2834 = vadd.f32 0.0, %v2833
      %2835 = vdwg.mxu0
      %v2836 = vadd.f32 %v2682, %v2797
      %v2837 = vadd.f32 %v2683, %v2799
      %v2838 = vadd.f32 %v2684, %v2802
      %v2839 = vadd.f32 %v2685, %v2804
      %v2840 = vadd.f32 %v2686, %v2807
      %v2841 = vadd.f32 %v2687, %v2809
      %v2842 = vadd.f32 %v2688, %v2812
      %v2843 = vadd.f32 %v2689, %v2814
      %v2844 = vadd.f32 %v2690, %v2817
      %v2845 = vadd.f32 %v2691, %v2819
      %v2846 = vadd.f32 %v2692, %v2822
      %v2847 = vadd.f32 %v2693, %v2824
      %v2848 = vadd.f32 %v2694, %v2827
      %v2849 = vadd.f32 %v2695, %v2829
      %v2850 = vadd.f32 %v2696, %v2832
      %v2851 = vadd.f32 %v2697, %v2834
      %v2852 = vld [vmem:[%s2543 + $0x2] sm:$0xff]
      %v2853 = vld [vmem:[%s2543 + $0xa] sm:$0xff]
      %v2854 = vld [vmem:[%s2543 + $0x1a] sm:$0xff]
      %v2855 = vld [vmem:[%s2543 + $0x22] sm:$0xff]
      %v2856 = vld [vmem:[%s2543 + $0x32] sm:$0xff]
      %v2857 = vld [vmem:[%s2543 + $0x3a] sm:$0xff]
      %v2858 = vld [vmem:[%s2543 + $0x4a] sm:$0xff]
      %v2859 = vld [vmem:[%s2543 + $0x52] sm:$0xff]
      %v2860 = vld [vmem:[%s2543 + $0x62] sm:$0xff]
      %v2861 = vld [vmem:[%s2543 + $0x6a] sm:$0xff]
      %v2862 = vld [vmem:[%s2543 + $0x7a] sm:$0xff]
      %v2863 = vld [vmem:[%s2543 + $0x82] sm:$0xff]
      %v2864 = vld [vmem:[%s2543 + $0x92] sm:$0xff]
      %v2865 = vld [vmem:[%s2543 + $0x9a] sm:$0xff]
      %v2866 = vld [vmem:[%s2543 + $0xaa] sm:$0xff]
      %v2867 = vld [vmem:[%s2543 + $0xb2] sm:$0xff]
      %v2868 = vpack.c.bf16 %v2853, %v2852
      %v2869 = vpack.c.bf16 %v2855, %v2854
      %v2870 = vpack.c.bf16 %v2857, %v2856
      %v2871 = vpack.c.bf16 %v2859, %v2858
      %v2872 = vpack.c.bf16 %v2861, %v2860
      %v2873 = vpack.c.bf16 %v2863, %v2862
      %v2874 = vpack.c.bf16 %v2865, %v2864
      %v2875 = vpack.c.bf16 %v2867, %v2866
      %s2876 = scalar_lea.vmem %s2, 512
      %v2877 = vld [vmem:[%s2876] sm:$0xf]
      %v2878 = vld [vmem:[%s2876 + $0x4] sm:$0xf]
      %v2879 = vld [vmem:[%s2876 + $0x8] sm:$0xf]
      %v2880 = vld [vmem:[%s2876 + $0xc] sm:$0xf]
      %v2881 = vld [vmem:[%s2876 + $0x10] sm:$0xf]
      %v2882 = vld [vmem:[%s2876 + $0x14] sm:$0xf]
      %v2883 = vld [vmem:[%s2876 + $0x18] sm:$0xf]
      %v2884 = vld [vmem:[%s2876 + $0x1c] sm:$0xf]
      %v2885 = vld [vmem:[%s2876 + $0x20] sm:$0xf]
      %v2886 = vld [vmem:[%s2876 + $0x24] sm:$0xf]
      %v2887 = vld [vmem:[%s2876 + $0x28] sm:$0xf]
      %v2888 = vld [vmem:[%s2876 + $0x2c] sm:$0xf]
      %v2889 = vld [vmem:[%s2876 + $0x30] sm:$0xf]
      %v2890 = vld [vmem:[%s2876 + $0x34] sm:$0xf]
      %v2891 = vld [vmem:[%s2876 + $0x38] sm:$0xf]
      %v2892 = vld [vmem:[%s2876 + $0x3c] sm:$0xf]
      %v2909 = vunpack.c.l.b16 %v2877
      %v2910 = vunpack.c.l.b16 %v2878
      %v2911 = vunpack.c.l.b16 %v2879
      %v2912 = vunpack.c.l.b16 %v2880
      %v2913 = vunpack.c.l.b16 %v2881
      %v2914 = vunpack.c.l.b16 %v2882
      %v2915 = vunpack.c.l.b16 %v2883
      %v2916 = vunpack.c.l.b16 %v2884
      %v2917 = vunpack.c.l.b16 %v2885
      %v2918 = vunpack.c.l.b16 %v2886
      %v2919 = vunpack.c.l.b16 %v2887
      %v2920 = vunpack.c.l.b16 %v2888
      %v2921 = vunpack.c.l.b16 %v2889
      %v2922 = vunpack.c.l.b16 %v2890
      %v2923 = vunpack.c.l.b16 %v2891
      %v2924 = vunpack.c.l.b16 %v2892
      %v2925 = vpack.c.b16 %v2910, %v2909
      %v2926 = vpack.c.b16 %v2912, %v2911
      %v2927 = vpack.c.b16 %v2914, %v2913
      %v2928 = vpack.c.b16 %v2916, %v2915
      %v2929 = vpack.c.b16 %v2918, %v2917
      %v2930 = vpack.c.b16 %v2920, %v2919
      %v2931 = vpack.c.b16 %v2922, %v2921
      %v2932 = vpack.c.b16 %v2924, %v2923
      %2941 = vmatpush.bf16.msra.mxu0 %v2932
      %2942 = vmatpush.bf16.msra.mxu0 %v2931
      %2943 = vmatpush.bf16.msra.mxu0 %v2930
      %2944 = vmatpush.bf16.msra.mxu0 %v2929
      %2945 = vmatpush.bf16.msra.mxu0 %v2928
      %2946 = vmatpush.bf16.msra.mxu0 %v2927
      %2947 = vmatpush.bf16.msra.mxu0 %v2926
      %2948 = vmatpush.bf16.msra.mxu0 %v2925
      %2949 = vmatmul.bf16.gmra.mxu0 %v2868
      %v2950 = vpop.f32.mrf.mxu0
      %v2951 = vadd.f32 0.0, %v2950
      %v2952 = vpop.f32.mrf.mxu0
      %v2953 = vadd.f32 0.0, %v2952
      %2954 = vmatmul.bf16.gmra.mxu0 %v2869
      %v2955 = vpop.f32.mrf.mxu0
      %v2956 = vadd.f32 0.0, %v2955
      %v2957 = vpop.f32.mrf.mxu0
      %v2958 = vadd.f32 0.0, %v2957
      %2959 = vmatmul.bf16.gmra.mxu0 %v2870
      %v2960 = vpop.f32.mrf.mxu0
      %v2961 = vadd.f32 0.0, %v2960
      %v2962 = vpop.f32.mrf.mxu0
      %v2963 = vadd.f32 0.0, %v2962
      %2964 = vmatmul.bf16.gmra.mxu0 %v2871
      %v2965 = vpop.f32.mrf.mxu0
      %v2966 = vadd.f32 0.0, %v2965
      %v2967 = vpop.f32.mrf.mxu0
      %v2968 = vadd.f32 0.0, %v2967
      %2969 = vmatmul.bf16.gmra.mxu0 %v2872
      %v2970 = vpop.f32.mrf.mxu0
      %v2971 = vadd.f32 0.0, %v2970
      %v2972 = vpop.f32.mrf.mxu0
      %v2973 = vadd.f32 0.0, %v2972
      %2974 = vmatmul.bf16.gmra.mxu0 %v2873
      %v2975 = vpop.f32.mrf.mxu0
      %v2976 = vadd.f32 0.0, %v2975
      %v2977 = vpop.f32.mrf.mxu0
      %v2978 = vadd.f32 0.0, %v2977
      %2979 = vmatmul.bf16.gmra.mxu0 %v2874
      %v2980 = vpop.f32.mrf.mxu0
      %v2981 = vadd.f32 0.0, %v2980
      %v2982 = vpop.f32.mrf.mxu0
      %v2983 = vadd.f32 0.0, %v2982
      %2984 = vmatmul.bf16.gmra.mxu0 %v2875
      %v2985 = vpop.f32.mrf.mxu0
      %v2986 = vadd.f32 0.0, %v2985
      %v2987 = vpop.f32.mrf.mxu0
      %v2988 = vadd.f32 0.0, %v2987
      %2989 = vdwg.mxu0
      %v2990 = vadd.f32 %v2836, %v2951
      %v2991 = vadd.f32 %v2837, %v2953
      %v2992 = vadd.f32 %v2838, %v2956
      %v2993 = vadd.f32 %v2839, %v2958
      %v2994 = vadd.f32 %v2840, %v2961
      %v2995 = vadd.f32 %v2841, %v2963
      %v2996 = vadd.f32 %v2842, %v2966
      %v2997 = vadd.f32 %v2843, %v2968
      %v2998 = vadd.f32 %v2844, %v2971
      %v2999 = vadd.f32 %v2845, %v2973
      %v3000 = vadd.f32 %v2846, %v2976
      %v3001 = vadd.f32 %v2847, %v2978
      %v3002 = vadd.f32 %v2848, %v2981
      %v3003 = vadd.f32 %v2849, %v2983
      %v3004 = vadd.f32 %v2850, %v2986
      %v3005 = vadd.f32 %v2851, %v2988
      %v3006 = vperm.slane %v127, 0
      %v3007 = vmul.f32 %v2990, %v3006
      %v3008 = vmul.f32 %v2991, %v3006
      %v3009 = vmul.f32 %v2992, %v3006
      %v3010 = vmul.f32 %v2993, %v3006
      %v3011 = vmul.f32 %v2994, %v3006
      %v3012 = vmul.f32 %v2995, %v3006
      %v3013 = vmul.f32 %v2996, %v3006
      %v3014 = vmul.f32 %v2997, %v3006
      %v3015 = vmul.f32 %v2998, %v3006
      %v3016 = vmul.f32 %v2999, %v3006
      %v3017 = vmul.f32 %v3000, %v3006
      %v3018 = vmul.f32 %v3001, %v3006
      %v3019 = vmul.f32 %v3002, %v3006
      %v3020 = vmul.f32 %v3003, %v3006
      %v3021 = vmul.f32 %v3004, %v3006
      %v3022 = vmul.f32 %v3005, %v3006
      %v3023 = vperm.slane %v128, 0
      %v3024 = vadd.f32 %v3007, %v3023
      %v3025 = vadd.f32 %v3008, %v3023
      %v3026 = vadd.f32 %v3009, %v3023
      %v3027 = vadd.f32 %v3010, %v3023
      %v3028 = vadd.f32 %v3011, %v3023
      %v3029 = vadd.f32 %v3012, %v3023
      %v3030 = vadd.f32 %v3013, %v3023
      %v3031 = vadd.f32 %v3014, %v3023
      %v3032 = vadd.f32 %v3015, %v3023
      %v3033 = vadd.f32 %v3016, %v3023
      %v3034 = vadd.f32 %v3017, %v3023
      %v3035 = vadd.f32 %v3018, %v3023
      %v3036 = vadd.f32 %v3019, %v3023
      %v3037 = vadd.f32 %v3020, %v3023
      %v3038 = vadd.f32 %v3021, %v3023
      %v3039 = vadd.f32 %v3022, %v3023
      %s3040 = scalar_lea.vmem [#allocation2], %s2077
      %v3041 = vld [vmem:[%s3040 + $0x1] sm:$0xff]
      %v3042 = vld [vmem:[%s3040 + $0x9] sm:$0xff]
      %v3043 = vld [vmem:[%s3040 + $0x19] sm:$0xff]
      %v3044 = vld [vmem:[%s3040 + $0x21] sm:$0xff]
      %v3045 = vld [vmem:[%s3040 + $0x31] sm:$0xff]
      %v3046 = vld [vmem:[%s3040 + $0x39] sm:$0xff]
      %v3047 = vld [vmem:[%s3040 + $0x49] sm:$0xff]
      %v3048 = vld [vmem:[%s3040 + $0x51] sm:$0xff]
      %v3049 = vld [vmem:[%s3040 + $0x61] sm:$0xff]
      %v3050 = vld [vmem:[%s3040 + $0x69] sm:$0xff]
      %v3051 = vld [vmem:[%s3040 + $0x79] sm:$0xff]
      %v3052 = vld [vmem:[%s3040 + $0x81] sm:$0xff]
      %v3053 = vld [vmem:[%s3040 + $0x91] sm:$0xff]
      %v3054 = vld [vmem:[%s3040 + $0x99] sm:$0xff]
      %v3055 = vld [vmem:[%s3040 + $0xa9] sm:$0xff]
      %v3056 = vld [vmem:[%s3040 + $0xb1] sm:$0xff]
      %v3057 = vadd.f32 %v3024, %v3041
      %v3058 = vadd.f32 %v3025, %v3042
      %v3059 = vadd.f32 %v3026, %v3043
      %v3060 = vadd.f32 %v3027, %v3044
      %v3061 = vadd.f32 %v3028, %v3045
      %v3062 = vadd.f32 %v3029, %v3046
      %v3063 = vadd.f32 %v3030, %v3047
      %v3064 = vadd.f32 %v3031, %v3048
      %v3065 = vadd.f32 %v3032, %v3049
      %v3066 = vadd.f32 %v3033, %v3050
      %v3067 = vadd.f32 %v3034, %v3051
      %v3068 = vadd.f32 %v3035, %v3052
      %v3069 = vadd.f32 %v3036, %v3053
      %v3070 = vadd.f32 %v3037, %v3054
      %v3071 = vadd.f32 %v3038, %v3055
      %v3072 = vadd.f32 %v3039, %v3056
      %v3073 = vmax.f32 %v3057, 0.0
      %v3074 = vmax.f32 %v3058, 0.0
      %v3075 = vmax.f32 %v3059, 0.0
      %v3076 = vmax.f32 %v3060, 0.0
      %v3077 = vmax.f32 %v3061, 0.0
      %v3078 = vmax.f32 %v3062, 0.0
      %v3079 = vmax.f32 %v3063, 0.0
      %v3080 = vmax.f32 %v3064, 0.0
      %v3081 = vmax.f32 %v3065, 0.0
      %v3082 = vmax.f32 %v3066, 0.0
      %v3083 = vmax.f32 %v3067, 0.0
      %v3084 = vmax.f32 %v3068, 0.0
      %v3085 = vmax.f32 %v3069, 0.0
      %v3086 = vmax.f32 %v3070, 0.0
      %v3087 = vmax.f32 %v3071, 0.0
      %v3088 = vmax.f32 %v3072, 0.0
      %s3089 = sadd.s32 %s135, %s1644
      %s3090 = smul.u32 %s3089, 16
      %s3091 = scalar_lea.vmem %s4, %s3090
      %3092 = vst [vmem:[%s3091] sm:$0xff] %v3073
      %3093 = vst [vmem:[%s3091 + $0x8] sm:$0xff] %v3074
      %3094 = vst [vmem:[%s3091 + $0x10] sm:$0xff] %v3075
      %3095 = vst [vmem:[%s3091 + $0x18] sm:$0xff] %v3076
      %3096 = vst [vmem:[%s3091 + $0x20] sm:$0xff] %v3077
      %3097 = vst [vmem:[%s3091 + $0x28] sm:$0xff] %v3078
      %3098 = vst [vmem:[%s3091 + $0x30] sm:$0xff] %v3079
      %3099 = vst [vmem:[%s3091 + $0x38] sm:$0xff] %v3080
      %3100 = vst [vmem:[%s3091 + $0x40] sm:$0xff] %v3081
      %3101 = vst [vmem:[%s3091 + $0x48] sm:$0xff] %v3082
      %3102 = vst [vmem:[%s3091 + $0x50] sm:$0xff] %v3083
      %3103 = vst [vmem:[%s3091 + $0x58] sm:$0xff] %v3084
      %3104 = vst [vmem:[%s3091 + $0x60] sm:$0xff] %v3085
      %3105 = vst [vmem:[%s3091 + $0x68] sm:$0xff] %v3086
      %3106 = vst [vmem:[%s3091 + $0x70] sm:$0xff] %v3087
      %3107 = vst [vmem:[%s3091 + $0x78] sm:$0xff] %v3088
    $region36: #{basic_block_forward.1} parent=21 // loop_footer
      %s1643 = sadd.s32 1, %s1639
    $region37: #{basic_block_forward.1} parent=21 // loop_footer_branch
      %1638 = sbr.rel target = $region33
    $region38: #{basic_block_forward.1} parent=21 // loop_exit
      _
  $region22: #{basic_block_forward.1} parent=0 // loop_footer
    %s134 = sadd.s32 1, %s130
  $region23: #{basic_block_forward.1} parent=0 // loop_footer_branch
    %129 = sbr.rel target = $region19
  $region24: #{basic_block_forward.1} parent=0 // loop_exit
    _
  // Predicated region
  $region39: #{basic_block_forward.1} parent=0 // pred_check
    _
  $region40: #{basic_block_forward.1} parent=0 // pred_check_branch
    %3109 = sbr.rel (0) target = $region42
  $region41: #{basic_block_forward.1} parent=0 // pred_region
    _
  $region42: #{basic_block_forward.1} parent=0 // pred_fallthru
    _
  // Predicated region
  $region43: #{basic_block_forward.1} parent=0 // pred_check
    _
  $region44: #{basic_block_forward.1} parent=0 // pred_check_branch
    %3111 = sbr.rel (0) target = $region46
  $region45: #{basic_block_forward.1} parent=0 // pred_region
    _
  $region46: #{basic_block_forward.1} parent=0 // pred_fallthru
    _

</llo_original>
